<compile_context>
chip_gen: v7x
topology: tpu7x:2x2x1
jax: 0.10.0
libtpu: 0.0.40
codegen_flags: <defaults>
</compile_context>

<pallas_src>
import functools
import math

import jax
import jax.numpy as jnp
import numpy as np
from jax.experimental import pallas as pl
from jax.experimental.pallas import tpu as pltpu


# ---------------- fused Conv2d + BatchNorm + IFNode + MaxPool stage ----------------

def _stage_kernel(x_ref, w_ref, s0_ref, s2_ref, g_ref, b_ref, red_ref, til_ref,
                  prow_ref, pcol_ref, out_ref, y_scr, *, T, NH, inv_m, eps):
    # ---- phase 1: 3x3 conv = (0/1 row-shift matmul) + (kw-folded weight matmul), f32 acc ----
    x = x_ref[...].astype(jnp.bfloat16)                                  # [R, W*Cin]
    x_up = jnp.dot(s0_ref[...], x, preferred_element_type=jnp.float32).astype(jnp.bfloat16)
    x_dn = jnp.dot(s2_ref[...], x, preferred_element_type=jnp.float32).astype(jnp.bfloat16)
    y = (jnp.dot(x, w_ref[1], preferred_element_type=jnp.float32)
         + jnp.dot(x_up, w_ref[0], preferred_element_type=jnp.float32)
         + jnp.dot(x_dn, w_ref[2], preferred_element_type=jnp.float32))  # [R, W*Cout] f32
    y_scr[...] = y

    # ---- BatchNorm batch statistics (per channel, biased variance) ----
    sum_c = jnp.sum(jnp.dot(y, red_ref[...], preferred_element_type=jnp.float32),
                    axis=0, keepdims=True)                               # [1, Cout]
    sq_c = jnp.sum(jnp.dot(y * y, red_ref[...], preferred_element_type=jnp.float32),
                   axis=0, keepdims=True)                                # [1, Cout]
    mean_c = sum_c * inv_m
    var_c = jnp.maximum(sq_c * inv_m - mean_c * mean_c, 0.0)
    scale_c = g_ref[...] * jax.lax.rsqrt(var_c + eps)
    shift_c = b_ref[...] - mean_c * scale_c
    scale_l = jnp.dot(scale_c, til_ref[...], preferred_element_type=jnp.float32)  # [1, W*Cout]
    shift_l = jnp.dot(shift_c, til_ref[...], preferred_element_type=jnp.float32)

    # ---- phase 2: BN + IFNode (sequential over T, hard reset); spikes overwrite y_scr ----
    wc = y_scr.shape[1]
    v = jnp.zeros((NH, wc), jnp.float32)
    for t in range(T):                                                   # T small & static
        vt = v + y_scr[pl.ds(t * NH, NH), :] * scale_l + shift_l
        fired = vt >= 1.0                                                # v_threshold = 1.0
        v = jnp.where(fired, 0.0, vt)                                    # hard reset, v_reset=0
        y_scr[pl.ds(t * NH, NH), :] = fired.astype(jnp.float32)

    # ---- 2x2 max-pool of binary spikes: summed 0/1 matmuls + threshold (OR == sum >= 1) ----
    sp = y_scr[...].astype(jnp.bfloat16)                                 # exact 0/1
    rowp = jnp.dot(prow_ref[...], sp, preferred_element_type=jnp.float32)        # H-pair sums
    pooled = jnp.dot(rowp.astype(jnp.bfloat16), pcol_ref[...],
                     preferred_element_type=jnp.float32)                          # + W-pair sums
    out_ref[...] = (pooled >= 0.5).astype(out_ref.dtype)


def _fused_stage(x2, w, gamma, beta, *, T, N, H, W):
    """One encoder stage on input x2: [T*N*H, W*Cin] f32 -> [T*N*(H//2), (W//2)*Cout] f32."""
    cout, cin = w.shape[0], w.shape[1]
    R, NH = T * N * H, N * H
    wcin, wcout = W * cin, W * cout
    wc2 = (W // 2) * cout
    assert x2.shape == (R, wcin)
    assert H % 2 == 0 and W % 2 == 0

    # effective per-kh weights with the kw shift / zero padding folded in:
    #   weff[kh, src*cin+ci, j*cout+co] = w[co, ci, kh, kw]   with src = j + kw - 1 in range
    shift = np.stack([np.eye(W, W, k=1 - kw, dtype=np.float32) for kw in range(3)])
    wk = jnp.transpose(w, (2, 3, 1, 0)).astype(jnp.float32)              # [kh, kw, cin, cout]
    weff = jnp.einsum('wsj,hwio->hsijo', shift, wk).reshape(3, wcin, wcout)
    weff = weff.astype(jnp.bfloat16)

    # 0/1 row-shift matrices for the kh = 0 / 2 taps (zero rows at image boundaries = padding)
    rr = np.arange(R)
    s0 = np.zeros((R, R), np.float32)
    sel = rr[rr % H != 0]
    s0[sel, sel - 1] = 1.0
    s2 = np.zeros((R, R), np.float32)
    sel = rr[rr % H != H - 1]
    s2[sel, sel + 1] = 1.0

    # lane-group (w, c) <-> channel c reduce / tile matrices for BN statistics
    red = np.zeros((wcout, cout), np.float32)
    red[np.arange(wcout), np.arange(wcout) % cout] = 1.0
    til = np.ascontiguousarray(red.T)

    # 2x2 binary max-pool: summed row-pair and lane-pair selection matrices
    p = np.arange(R // 2)
    base = (p // (H // 2)) * H + (p % (H // 2)) * 2
    prow = np.zeros((R // 2, R), np.float32)
    prow[p, base] = 1.0
    prow[p, base + 1] = 1.0
    q = np.arange(wc2)
    j2, cc = q // cout, q % cout
    pcol = np.zeros((wcout, wc2), np.float32)
    pcol[(2 * j2) * cout + cc, q] = 1.0
    pcol[(2 * j2 + 1) * cout + cc, q] = 1.0

    kernel = functools.partial(_stage_kernel, T=T, NH=NH, inv_m=1.0 / (R * W), eps=1e-5)
    return pl.pallas_call(
        kernel,
        out_shape=jax.ShapeDtypeStruct((R // 2, wc2), jnp.float32),
        grid=(1,),
        in_specs=[
            pl.BlockSpec((R, wcin), lambda i: (0, 0)),
            pl.BlockSpec((3, wcin, wcout), lambda i: (0, 0, 0)),
            pl.BlockSpec((R, R), lambda i: (0, 0)),
            pl.BlockSpec((R, R), lambda i: (0, 0)),
            pl.BlockSpec((1, cout), lambda i: (0, 0)),
            pl.BlockSpec((1, cout), lambda i: (0, 0)),
            pl.BlockSpec((wcout, cout), lambda i: (0, 0)),
            pl.BlockSpec((cout, wcout), lambda i: (0, 0)),
            pl.BlockSpec((R // 2, R), lambda i: (0, 0)),
            pl.BlockSpec((wcout, wc2), lambda i: (0, 0)),
        ],
        out_specs=pl.BlockSpec((R // 2, wc2), lambda i: (0, 0)),
        scratch_shapes=[pltpu.VMEM((R, wcout), jnp.float32)],
        compiler_params=pltpu.CompilerParams(dimension_semantics=("arbitrary",)),
    )(x2, weff,
      jnp.asarray(s0, dtype=jnp.bfloat16), jnp.asarray(s2, dtype=jnp.bfloat16),
      gamma.reshape(1, cout).astype(jnp.float32), beta.reshape(1, cout).astype(jnp.float32),
      jnp.asarray(red), jnp.asarray(til),
      jnp.asarray(prow, dtype=jnp.bfloat16), jnp.asarray(pcol, dtype=jnp.bfloat16))


# ---------------- AdaptiveAvgPool + Flatten + Linear + IFNode + mean over T ----------------

def _tail_kernel(s_ref, arow_ref, wl_ref, bias_ref, out_ref, *, T, N, inv_hw, inv_t):
    s = s_ref[...].astype(jnp.bfloat16)                                      # [T*N*Hp, Wp*C]
    pooled = jnp.dot(arow_ref[...], s, preferred_element_type=jnp.float32)   # per-(t,n) row sums
    feat = jnp.dot(pooled.astype(jnp.bfloat16), wl_ref[...],
                   preferred_element_type=jnp.float32) * inv_hw + bias_ref[...]  # [T*N, out_c]
    acc = jnp.zeros(out_ref.shape, jnp.float32)
    v = jnp.zeros(out_ref.shape, jnp.float32)
    for t in range(T):                                                        # IF over T
        v = v + feat[t * N:(t + 1) * N, :]
        fired = v >= 1.0
        acc = acc + fired.astype(jnp.float32)
        v = jnp.where(fired, 0.0, v)
    out_ref[...] = acc * inv_t                                                # mean over T


def _tail(s3, wl, bl, *, T, N, Hp, Wp):
    out_c, c = wl.shape
    nhp, wpc = N * Hp, Wp * c
    assert s3.shape == (T * nhp, wpc)

    arow = np.zeros((T * N, T * nhp), np.float32)                 # 0/1 per-image row-sum matrix
    g = np.repeat(np.arange(T * N), Hp)
    arow[g, np.arange(T * nhp)] = 1.0
    wl_eff = jnp.tile(wl.T.astype(jnp.float32), (Wp, 1)).astype(jnp.bfloat16)   # [Wp*C, out_c]

    kernel = functools.partial(_tail_kernel, T=T, N=N, inv_hw=1.0 / (Hp * Wp), inv_t=1.0 / T)
    return pl.pallas_call(
        kernel,
        out_shape=jax.ShapeDtypeStruct((N, out_c), jnp.float32),
        grid=(1,),
        in_specs=[
            pl.BlockSpec((T * nhp, wpc), lambda i: (0, 0)),
            pl.BlockSpec((T * N, T * nhp), lambda i: (0, 0)),
            pl.BlockSpec((wpc, out_c), lambda i: (0, 0)),
            pl.BlockSpec((1, out_c), lambda i: (0, 0)),
        ],
        out_specs=pl.BlockSpec((N, out_c), lambda i: (0, 0)),
        compiler_params=pltpu.CompilerParams(dimension_semantics=("arbitrary",)),
    )(s3, jnp.asarray(arow, dtype=jnp.bfloat16), wl_eff,
      bl.reshape(1, out_c).astype(jnp.float32))


# ---------------- top level ----------------

def spiking_conv_encoder(x_tnchw, params):
    """x_tnchw: [T, N, C, H, W] (spikingjelly multi-step input) -> [N, out_channels]."""
    T, N, C, H, W = x_tnchw.shape
    x = jnp.transpose(x_tnchw, (0, 1, 3, 4, 2)).astype(jnp.float32)      # channel-last
    x2 = x.reshape(T * N * H, W * C)                                     # lane layout (w, c)
    s1 = _fused_stage(x2, params['w1'], params['g1'], params['b1'], T=T, N=N, H=H, W=W)
    s2 = _fused_stage(s1, params['w2'], params['g2'], params['b2'], T=T, N=N, H=H // 2, W=W // 2)
    s3 = _fused_stage(s2, params['w3'], params['g3'], params['b3'], T=T, N=N, H=H // 4, W=W // 4)
    return _tail(s3, params['wl'], params['bl'], T=T, N=N, Hp=H // 8, Wp=W // 8)


def init_params(key, in_channels, out_channels):
    ks = jax.random.split(key, 5)
    c1, c2, c3 = in_channels * 2, in_channels * 4, in_channels * 8

    def conv_w(k, cout, cin):
        bound = 1.0 / math.sqrt(cin * 9)
        return jax.random.uniform(k, (cout, cin, 3, 3), jnp.float32, -bound, bound)

    lb = 1.0 / math.sqrt(c3)
    return dict(
        w1=conv_w(ks[0], c1, in_channels), g1=jnp.ones((c1,), jnp.float32), b1=jnp.zeros((c1,), jnp.float32),
        w2=conv_w(ks[1], c2, c1),          g2=jnp.ones((c2,), jnp.float32), b2=jnp.zeros((c2,), jnp.float32),
        w3=conv_w(ks[2], c3, c2),          g3=jnp.ones((c3,), jnp.float32), b3=jnp.zeros((c3,), jnp.float32),
        wl=jax.random.uniform(ks[3], (out_channels, c3), jnp.float32, -lb, lb),
        bl=jax.random.uniform(ks[4], (out_channels,), jnp.float32, -lb, lb),
    )


if __name__ == "__main__":
    T, N, C, H, W = 4, 2, 4, 16, 16
    out_channels = 8
    key = jax.random.PRNGKey(0)
    kx, kp = jax.random.split(key)
    x = jax.random.normal(kx, (T, N, C, H, W), jnp.float32)
    params = init_params(kp, C, out_channels)

    out = jax.jit(spiking_conv_encoder)(x, params)
    jax.block_until_ready(out)
    assert out.shape == (N, out_channels), out.shape
    assert bool(jnp.all(jnp.isfinite(out)))
    assert bool(jnp.all((out >= 0.0) & (out <= 1.0)))   # mean of 0/1 spikes over T
    print("KERNEL_OK")
</pallas_src>

<mosaic_0001>
module attributes {stable_mosaic.version = 11 : i64} {
  func.func @_stage_kernel(%arg0: i32, %arg1: memref<128x64xf32, #tpu.memory_space<vmem>>, %arg2: memref<3x64x128xbf16, #tpu.memory_space<vmem>>, %arg3: memref<128x128xbf16, #tpu.memory_space<vmem>>, %arg4: memref<128x128xbf16, #tpu.memory_space<vmem>>, %arg5: memref<1x8xf32, #tpu.memory_space<vmem>>, %arg6: memref<1x8xf32, #tpu.memory_space<vmem>>, %arg7: memref<128x8xf32, #tpu.memory_space<vmem>>, %arg8: memref<8x128xf32, #tpu.memory_space<vmem>>, %arg9: memref<64x128xbf16, #tpu.memory_space<vmem>>, %arg10: memref<128x64xbf16, #tpu.memory_space<vmem>>, %arg11: memref<64x64xf32, #tpu.memory_space<vmem>>, %arg12: memref<128x128xf32, #tpu.memory_space<vmem>>) attributes {dimension_semantics = [#tpu.dimension_semantics<arbitrary>], iteration_bounds = array<i64: 1>, scalar_prefetch = 0 : i64, scratch_operands = 1 : i64, tpu.core_type = #tpu.core_type<tc>, window_params = [{pipeline_mode = #tpu.pipeline_mode<synchronous>, transform_indices = @transform_0, window_bounds = array<i64: 128, 64>}, {pipeline_mode = #tpu.pipeline_mode<synchronous>, transform_indices = @transform_1, window_bounds = array<i64: 3, 64, 128>}, {pipeline_mode = #tpu.pipeline_mode<synchronous>, transform_indices = @transform_2, window_bounds = array<i64: 128, 128>}, {pipeline_mode = #tpu.pipeline_mode<synchronous>, transform_indices = @transform_3, window_bounds = array<i64: 128, 128>}, {pipeline_mode = #tpu.pipeline_mode<synchronous>, transform_indices = @transform_4, window_bounds = array<i64: 1, 8>}, {pipeline_mode = #tpu.pipeline_mode<synchronous>, transform_indices = @transform_5, window_bounds = array<i64: 1, 8>}, {pipeline_mode = #tpu.pipeline_mode<synchronous>, transform_indices = @transform_6, window_bounds = array<i64: 128, 8>}, {pipeline_mode = #tpu.pipeline_mode<synchronous>, transform_indices = @transform_7, window_bounds = array<i64: 8, 128>}, {pipeline_mode = #tpu.pipeline_mode<synchronous>, transform_indices = @transform_8, window_bounds = array<i64: 64, 128>}, {pipeline_mode = #tpu.pipeline_mode<synchronous>, transform_indices = @transform_9, window_bounds = array<i64: 128, 64>}, {pipeline_mode = #tpu.pipeline_mode<synchronous>, transform_indices = @transform_10, window_bounds = array<i64: 64, 64>}]} {
    %c0 = arith.constant 0 : index
    %c0_0 = arith.constant 0 : index
    %0 = vector.load %arg1[%c0, %c0_0] : memref<128x64xf32, #tpu.memory_space<vmem>>, vector<128x64xf32>
    %1 = arith.truncf %0 : vector<128x64xf32> to vector<128x64xbf16>
    %c0_1 = arith.constant 0 : index
    %c0_2 = arith.constant 0 : index
    %2 = vector.load %arg3[%c0_1, %c0_2] : memref<128x128xbf16, #tpu.memory_space<vmem>>, vector<128x128xbf16>
    %cst = arith.constant dense<0.000000e+00> : vector<128x64xf32>
    %3 = tpu.matmul %2, %1, %cst {dimension_numbers = #tpu.dot_dimension_numbers<[1], [0], [0], [1], [0, 0, 1, 1], [], []>} : vector<128x128xbf16>, vector<128x64xbf16>, vector<128x64xf32> -> vector<128x64xf32>
    %4 = arith.truncf %3 : vector<128x64xf32> to vector<128x64xbf16>
    %c0_3 = arith.constant 0 : index
    %c0_4 = arith.constant 0 : index
    %5 = vector.load %arg4[%c0_3, %c0_4] : memref<128x128xbf16, #tpu.memory_space<vmem>>, vector<128x128xbf16>
    %cst_5 = arith.constant dense<0.000000e+00> : vector<128x64xf32>
    %6 = tpu.matmul %5, %1, %cst_5 {dimension_numbers = #tpu.dot_dimension_numbers<[1], [0], [0], [1], [0, 0, 1, 1], [], []>} : vector<128x128xbf16>, vector<128x64xbf16>, vector<128x64xf32> -> vector<128x64xf32>
    %7 = arith.truncf %6 : vector<128x64xf32> to vector<128x64xbf16>
    %c1 = arith.constant 1 : index
    %c0_6 = arith.constant 0 : index
    %c0_7 = arith.constant 0 : index
    %8 = vector.load %arg2[%c1, %c0_6, %c0_7] : memref<3x64x128xbf16, #tpu.memory_space<vmem>>, vector<1x64x128xbf16>
    %9 = vector.shape_cast %8 : vector<1x64x128xbf16> to vector<64x128xbf16>
    %cst_8 = arith.constant dense<0.000000e+00> : vector<128x128xf32>
    %10 = tpu.matmul %1, %9, %cst_8 {dimension_numbers = #tpu.dot_dimension_numbers<[1], [0], [0], [1], [0, 0, 1, 1], [], []>} : vector<128x64xbf16>, vector<64x128xbf16>, vector<128x128xf32> -> vector<128x128xf32>
    %c0_9 = arith.constant 0 : index
    %c0_10 = arith.constant 0 : index
    %c0_11 = arith.constant 0 : index
    %11 = vector.load %arg2[%c0_9, %c0_10, %c0_11] : memref<3x64x128xbf16, #tpu.memory_space<vmem>>, vector<1x64x128xbf16>
    %12 = vector.shape_cast %11 : vector<1x64x128xbf16> to vector<64x128xbf16>
    %cst_12 = arith.constant dense<0.000000e+00> : vector<128x128xf32>
    %13 = tpu.matmul %4, %12, %cst_12 {dimension_numbers = #tpu.dot_dimension_numbers<[1], [0], [0], [1], [0, 0, 1, 1], [], []>} : vector<128x64xbf16>, vector<64x128xbf16>, vector<128x128xf32> -> vector<128x128xf32>
    %14 = arith.addf %10, %13 : vector<128x128xf32>
    %c2 = arith.constant 2 : index
    %c0_13 = arith.constant 0 : index
    %c0_14 = arith.constant 0 : index
    %15 = vector.load %arg2[%c2, %c0_13, %c0_14] : memref<3x64x128xbf16, #tpu.memory_space<vmem>>, vector<1x64x128xbf16>
    %16 = vector.shape_cast %15 : vector<1x64x128xbf16> to vector<64x128xbf16>
    %cst_15 = arith.constant dense<0.000000e+00> : vector<128x128xf32>
    %17 = tpu.matmul %7, %16, %cst_15 {dimension_numbers = #tpu.dot_dimension_numbers<[1], [0], [0], [1], [0, 0, 1, 1], [], []>} : vector<128x64xbf16>, vector<64x128xbf16>, vector<128x128xf32> -> vector<128x128xf32>
    %18 = arith.addf %14, %17 : vector<128x128xf32>
    %c0_16 = arith.constant 0 : index
    %c0_17 = arith.constant 0 : index
    %19 = vector.load %arg12[%c0_16, %c0_17] : memref<128x128xf32, #tpu.memory_space<vmem>>, vector<128x128xf32>
    tpu.vector_store %arg12[%c0_16, %c0_17], %18 {strides = array<i32>} : memref<128x128xf32, #tpu.memory_space<vmem>>, vector<128x128xf32>,
    %c0_18 = arith.constant 0 : index
    %c0_19 = arith.constant 0 : index
    %20 = vector.load %arg7[%c0_18, %c0_19] : memref<128x8xf32, #tpu.memory_space<vmem>>, vector<128x8xf32>
    %cst_20 = arith.constant dense<0.000000e+00> : vector<128x8xf32>
    %21 = tpu.matmul %18, %20, %cst_20 {dimension_numbers = #tpu.dot_dimension_numbers<[1], [0], [0], [1], [0, 0, 1, 1], [], []>} : vector<128x128xf32>, vector<128x8xf32>, vector<128x8xf32> -> vector<128x8xf32>
    %cst_21 = arith.constant dense<0.000000e+00> : vector<8xf32>
    %22 = vector.multi_reduction <add>, %21, %cst_21 [0] : vector<128x8xf32> to vector<8xf32>
    %23 = vector.shape_cast %22 : vector<8xf32> to vector<1x8xf32>
    %24 = arith.mulf %18, %18 : vector<128x128xf32>
    %c0_22 = arith.constant 0 : index
    %c0_23 = arith.constant 0 : index
    %25 = vector.load %arg7[%c0_22, %c0_23] : memref<128x8xf32, #tpu.memory_space<vmem>>, vector<128x8xf32>
    %cst_24 = arith.constant dense<0.000000e+00> : vector<128x8xf32>
    %26 = tpu.matmul %24, %25, %cst_24 {dimension_numbers = #tpu.dot_dimension_numbers<[1], [0], [0], [1], [0, 0, 1, 1], [], []>} : vector<128x128xf32>, vector<128x8xf32>, vector<128x8xf32> -> vector<128x8xf32>
    %cst_25 = arith.constant dense<0.000000e+00> : vector<8xf32>
    %27 = vector.multi_reduction <add>, %26, %cst_25 [0] : vector<128x8xf32> to vector<8xf32>
    %28 = vector.shape_cast %27 : vector<8xf32> to vector<1x8xf32>
    %cst_26 = arith.constant 4.8828125E-4 : f32
    %29 = vector.broadcast %cst_26 : f32 to vector<1x8xf32>
    %30 = arith.mulf %23, %29 : vector<1x8xf32>
    %cst_27 = arith.constant 4.8828125E-4 : f32
    %31 = vector.broadcast %cst_27 : f32 to vector<1x8xf32>
    %32 = arith.mulf %28, %31 : vector<1x8xf32>
    %33 = arith.mulf %30, %30 : vector<1x8xf32>
    %34 = arith.subf %32, %33 : vector<1x8xf32>
    %cst_28 = arith.constant 0.000000e+00 : f32
    %35 = vector.broadcast %cst_28 : f32 to vector<1x8xf32>
    %36 = arith.maximumf %34, %35 : vector<1x8xf32>
    %c0_29 = arith.constant 0 : index
    %c0_30 = arith.constant 0 : index
    %37 = vector.load %arg5[%c0_29, %c0_30] : memref<1x8xf32, #tpu.memory_space<vmem>>, vector<1x8xf32>
    %cst_31 = arith.constant 9.99999974E-6 : f32
    %38 = vector.broadcast %cst_31 : f32 to vector<1x8xf32>
    %39 = arith.addf %36, %38 : vector<1x8xf32>
    %40 = math.rsqrt %39 : vector<1x8xf32>
    %41 = arith.mulf %37, %40 : vector<1x8xf32>
    %c0_32 = arith.constant 0 : index
    %c0_33 = arith.constant 0 : index
    %42 = vector.load %arg6[%c0_32, %c0_33] : memref<1x8xf32, #tpu.memory_space<vmem>>, vector<1x8xf32>
    %43 = arith.mulf %30, %41 : vector<1x8xf32>
    %44 = arith.subf %42, %43 : vector<1x8xf32>
    %c0_34 = arith.constant 0 : index
    %c0_35 = arith.constant 0 : index
    %45 = vector.load %arg8[%c0_34, %c0_35] : memref<8x128xf32, #tpu.memory_space<vmem>>, vector<8x128xf32>
    %cst_36 = arith.constant dense<0.000000e+00> : vector<1x128xf32>
    %46 = tpu.matmul %41, %45, %cst_36 {dimension_numbers = #tpu.dot_dimension_numbers<[1], [0], [0], [1], [0, 0, 1, 1], [], []>} : vector<1x8xf32>, vector<8x128xf32>, vector<1x128xf32> -> vector<1x128xf32>
    %c0_37 = arith.constant 0 : index
    %c0_38 = arith.constant 0 : index
    %47 = vector.load %arg8[%c0_37, %c0_38] : memref<8x128xf32, #tpu.memory_space<vmem>>, vector<8x128xf32>
    %cst_39 = arith.constant dense<0.000000e+00> : vector<1x128xf32>
    %48 = tpu.matmul %44, %47, %cst_39 {dimension_numbers = #tpu.dot_dimension_numbers<[1], [0], [0], [1], [0, 0, 1, 1], [], []>} : vector<1x8xf32>, vector<8x128xf32>, vector<1x128xf32> -> vector<1x128xf32>
    %cst_40 = arith.constant 0.000000e+00 : f32
    %49 = vector.broadcast %cst_40 : f32 to vector<32x128xf32>
    %c0_41 = arith.constant 0 : index
    %c0_42 = arith.constant 0 : index
    %50 = vector.load %arg12[%c0_41, %c0_42] : memref<128x128xf32, #tpu.memory_space<vmem>>, vector<32x128xf32>
    %51 = vector.broadcast %46 : vector<1x128xf32> to vector<32x128xf32>
    %52 = arith.mulf %50, %51 : vector<32x128xf32>
    %53 = arith.addf %49, %52 : vector<32x128xf32>
    %54 = vector.broadcast %48 : vector<1x128xf32> to vector<32x128xf32>
    %55 = arith.addf %53, %54 : vector<32x128xf32>
    %cst_43 = arith.constant 1.000000e+00 : f32
    %56 = vector.broadcast %cst_43 : f32 to vector<32x128xf32>
    %57 = arith.cmpf oge, %55, %56 : vector<32x128xf32>
    %cst_44 = arith.constant 0.000000e+00 : f32
    %58 = vector.broadcast %cst_44 : f32 to vector<32x128xf32>
    %59 = arith.select %57, %58, %55 : vector<32x128xi1>, vector<32x128xf32>
    %60 = arith.extui %57 : vector<32x128xi1> to vector<32x128xi32>
    %61 = arith.sitofp %60 : vector<32x128xi32> to vector<32x128xf32>
    %c0_45 = arith.constant 0 : index
    %c0_46 = arith.constant 0 : index
    %62 = vector.load %arg12[%c0_45, %c0_46] : memref<128x128xf32, #tpu.memory_space<vmem>>, vector<32x128xf32>
    tpu.vector_store %arg12[%c0_45, %c0_46], %61 {strides = array<i32>} : memref<128x128xf32, #tpu.memory_space<vmem>>, vector<32x128xf32>,
    %c32 = arith.constant 32 : index
    %c0_47 = arith.constant 0 : index
    %63 = vector.load %arg12[%c32, %c0_47] : memref<128x128xf32, #tpu.memory_space<vmem>>, vector<32x128xf32>
    %64 = vector.broadcast %46 : vector<1x128xf32> to vector<32x128xf32>
    %65 = arith.mulf %63, %64 : vector<32x128xf32>
    %66 = arith.addf %59, %65 : vector<32x128xf32>
    %67 = vector.broadcast %48 : vector<1x128xf32> to vector<32x128xf32>
    %68 = arith.addf %66, %67 : vector<32x128xf32>
    %cst_48 = arith.constant 1.000000e+00 : f32
    %69 = vector.broadcast %cst_48 : f32 to vector<32x128xf32>
    %70 = arith.cmpf oge, %68, %69 : vector<32x128xf32>
    %cst_49 = arith.constant 0.000000e+00 : f32
    %71 = vector.broadcast %cst_49 : f32 to vector<32x128xf32>
    %72 = arith.select %70, %71, %68 : vector<32x128xi1>, vector<32x128xf32>
    %73 = arith.extui %70 : vector<32x128xi1> to vector<32x128xi32>
    %74 = arith.sitofp %73 : vector<32x128xi32> to vector<32x128xf32>
    %c32_50 = arith.constant 32 : index
    %c0_51 = arith.constant 0 : index
    %75 = vector.load %arg12[%c32_50, %c0_51] : memref<128x128xf32, #tpu.memory_space<vmem>>, vector<32x128xf32>
    tpu.vector_store %arg12[%c32_50, %c0_51], %74 {strides = array<i32>} : memref<128x128xf32, #tpu.memory_space<vmem>>, vector<32x128xf32>,
    %c64 = arith.constant 64 : index
    %c0_52 = arith.constant 0 : index
    %76 = vector.load %arg12[%c64, %c0_52] : memref<128x128xf32, #tpu.memory_space<vmem>>, vector<32x128xf32>
    %77 = vector.broadcast %46 : vector<1x128xf32> to vector<32x128xf32>
    %78 = arith.mulf %76, %77 : vector<32x128xf32>
    %79 = arith.addf %72, %78 : vector<32x128xf32>
    %80 = vector.broadcast %48 : vector<1x128xf32> to vector<32x128xf32>
    %81 = arith.addf %79, %80 : vector<32x128xf32>
    %cst_53 = arith.constant 1.000000e+00 : f32
    %82 = vector.broadcast %cst_53 : f32 to vector<32x128xf32>
    %83 = arith.cmpf oge, %81, %82 : vector<32x128xf32>
    %cst_54 = arith.constant 0.000000e+00 : f32
    %84 = vector.broadcast %cst_54 : f32 to vector<32x128xf32>
    %85 = arith.select %83, %84, %81 : vector<32x128xi1>, vector<32x128xf32>
    %86 = arith.extui %83 : vector<32x128xi1> to vector<32x128xi32>
    %87 = arith.sitofp %86 : vector<32x128xi32> to vector<32x128xf32>
    %c64_55 = arith.constant 64 : index
    %c0_56 = arith.constant 0 : index
    %88 = vector.load %arg12[%c64_55, %c0_56] : memref<128x128xf32, #tpu.memory_space<vmem>>, vector<32x128xf32>
    tpu.vector_store %arg12[%c64_55, %c0_56], %87 {strides = array<i32>} : memref<128x128xf32, #tpu.memory_space<vmem>>, vector<32x128xf32>,
    %c96 = arith.constant 96 : index
    %c0_57 = arith.constant 0 : index
    %89 = vector.load %arg12[%c96, %c0_57] : memref<128x128xf32, #tpu.memory_space<vmem>>, vector<32x128xf32>
    %90 = vector.broadcast %46 : vector<1x128xf32> to vector<32x128xf32>
    %91 = arith.mulf %89, %90 : vector<32x128xf32>
    %92 = arith.addf %85, %91 : vector<32x128xf32>
    %93 = vector.broadcast %48 : vector<1x128xf32> to vector<32x128xf32>
    %94 = arith.addf %92, %93 : vector<32x128xf32>
    %cst_58 = arith.constant 1.000000e+00 : f32
    %95 = vector.broadcast %cst_58 : f32 to vector<32x128xf32>
    %96 = arith.cmpf oge, %94, %95 : vector<32x128xf32>
    %97 = arith.extui %96 : vector<32x128xi1> to vector<32x128xi32>
    %98 = arith.sitofp %97 : vector<32x128xi32> to vector<32x128xf32>
    %c96_59 = arith.constant 96 : index
    %c0_60 = arith.constant 0 : index
    %99 = vector.load %arg12[%c96_59, %c0_60] : memref<128x128xf32, #tpu.memory_space<vmem>>, vector<32x128xf32>
    tpu.vector_store %arg12[%c96_59, %c0_60], %98 {strides = array<i32>} : memref<128x128xf32, #tpu.memory_space<vmem>>, vector<32x128xf32>,
    %c0_61 = arith.constant 0 : index
    %c0_62 = arith.constant 0 : index
    %100 = vector.load %arg12[%c0_61, %c0_62] : memref<128x128xf32, #tpu.memory_space<vmem>>, vector<128x128xf32>
    %101 = arith.truncf %100 : vector<128x128xf32> to vector<128x128xbf16>
    %c0_63 = arith.constant 0 : index
    %c0_64 = arith.constant 0 : index
    %102 = vector.load %arg9[%c0_63, %c0_64] : memref<64x128xbf16, #tpu.memory_space<vmem>>, vector<64x128xbf16>
    %cst_65 = arith.constant dense<0.000000e+00> : vector<64x128xf32>
    %103 = tpu.matmul %102, %101, %cst_65 {dimension_numbers = #tpu.dot_dimension_numbers<[1], [0], [0], [1], [0, 0, 1, 1], [], []>} : vector<64x128xbf16>, vector<128x128xbf16>, vector<64x128xf32> -> vector<64x128xf32>
    %104 = arith.truncf %103 : vector<64x128xf32> to vector<64x128xbf16>
    %c0_66 = arith.constant 0 : index
    %c0_67 = arith.constant 0 : index
    %105 = vector.load %arg10[%c0_66, %c0_67] : memref<128x64xbf16, #tpu.memory_space<vmem>>, vector<128x64xbf16>
    %cst_68 = arith.constant dense<0.000000e+00> : vector<64x64xf32>
    %106 = tpu.matmul %104, %105, %cst_68 {dimension_numbers = #tpu.dot_dimension_numbers<[1], [0], [0], [1], [0, 0, 1, 1], [], []>} : vector<64x128xbf16>, vector<128x64xbf16>, vector<64x64xf32> -> vector<64x64xf32>
    %cst_69 = arith.constant 5.000000e-01 : f32
    %107 = vector.broadcast %cst_69 : f32 to vector<64x64xf32>
    %108 = arith.cmpf oge, %106, %107 : vector<64x64xf32>
    %109 = arith.extui %108 : vector<64x64xi1> to vector<64x64xi32>
    %110 = arith.sitofp %109 : vector<64x64xi32> to vector<64x64xf32>
    %c0_70 = arith.constant 0 : index
    %c0_71 = arith.constant 0 : index
    %111 = vector.load %arg11[%c0_70, %c0_71] : memref<64x64xf32, #tpu.memory_space<vmem>>, vector<64x64xf32>
    tpu.vector_store %arg11[%c0_70, %c0_71], %110 {strides = array<i32>} : memref<64x64xf32, #tpu.memory_space<vmem>>, vector<64x64xf32>,
    return
  }
  func.func @transform_0(%arg0: i32) -> (i32, i32) {
    %c0_i32 = arith.constant 0 : i32
    %c0_i32_0 = arith.constant 0 : i32
    %c0_i32_1 = arith.constant 0 : i32
    return %c0_i32, %c0_i32_0 : i32, i32
  }
  func.func @transform_1(%arg0: i32) -> (i32, i32, i32) {
    %c0_i32 = arith.constant 0 : i32
    %c0_i32_0 = arith.constant 0 : i32
    %c0_i32_1 = arith.constant 0 : i32
    %c0_i32_2 = arith.constant 0 : i32
    return %c0_i32, %c0_i32_0, %c0_i32_1 : i32, i32, i32
  }
  func.func @transform_2(%arg0: i32) -> (i32, i32) {
    %c0_i32 = arith.constant 0 : i32
    %c0_i32_0 = arith.constant 0 : i32
    %c0_i32_1 = arith.constant 0 : i32
    return %c0_i32, %c0_i32_0 : i32, i32
  }
  func.func @transform_3(%arg0: i32) -> (i32, i32) {
    %c0_i32 = arith.constant 0 : i32
    %c0_i32_0 = arith.constant 0 : i32
    %c0_i32_1 = arith.constant 0 : i32
    return %c0_i32, %c0_i32_0 : i32, i32
  }
  func.func @transform_4(%arg0: i32) -> (i32, i32) {
    %c0_i32 = arith.constant 0 : i32
    %c0_i32_0 = arith.constant 0 : i32
    %c0_i32_1 = arith.constant 0 : i32
    return %c0_i32, %c0_i32_0 : i32, i32
  }
  func.func @transform_5(%arg0: i32) -> (i32, i32) {
    %c0_i32 = arith.constant 0 : i32
    %c0_i32_0 = arith.constant 0 : i32
    %c0_i32_1 = arith.constant 0 : i32
    return %c0_i32, %c0_i32_0 : i32, i32
  }
  func.func @transform_6(%arg0: i32) -> (i32, i32) {
    %c0_i32 = arith.constant 0 : i32
    %c0_i32_0 = arith.constant 0 : i32
    %c0_i32_1 = arith.constant 0 : i32
    return %c0_i32, %c0_i32_0 : i32, i32
  }
  func.func @transform_7(%arg0: i32) -> (i32, i32) {
    %c0_i32 = arith.constant 0 : i32
    %c0_i32_0 = arith.constant 0 : i32
    %c0_i32_1 = arith.constant 0 : i32
    return %c0_i32, %c0_i32_0 : i32, i32
  }
  func.func @transform_8(%arg0: i32) -> (i32, i32) {
    %c0_i32 = arith.constant 0 : i32
    %c0_i32_0 = arith.constant 0 : i32
    %c0_i32_1 = arith.constant 0 : i32
    return %c0_i32, %c0_i32_0 : i32, i32
  }
  func.func @transform_9(%arg0: i32) -> (i32, i32) {
    %c0_i32 = arith.constant 0 : i32
    %c0_i32_0 = arith.constant 0 : i32
    %c0_i32_1 = arith.constant 0 : i32
    return %c0_i32, %c0_i32_0 : i32, i32
  }
  func.func @transform_10(%arg0: i32) -> (i32, i32) {
    %c0_i32 = arith.constant 0 : i32
    %c0_i32_0 = arith.constant 0 : i32
    %c0_i32_1 = arith.constant 0 : i32
    return %c0_i32, %c0_i32_0 : i32, i32
  }
}

module attributes {stable_mosaic.version = 11 : i64} {
  func.func @_stage_kernel(%arg0: i32, %arg1: memref<64x64xf32, #tpu.memory_space<vmem>>, %arg2: memref<3x64x128xbf16, #tpu.memory_space<vmem>>, %arg3: memref<64x64xbf16, #tpu.memory_space<vmem>>, %arg4: memref<64x64xbf16, #tpu.memory_space<vmem>>, %arg5: memref<1x16xf32, #tpu.memory_space<vmem>>, %arg6: memref<1x16xf32, #tpu.memory_space<vmem>>, %arg7: memref<128x16xf32, #tpu.memory_space<vmem>>, %arg8: memref<16x128xf32, #tpu.memory_space<vmem>>, %arg9: memref<32x64xbf16, #tpu.memory_space<vmem>>, %arg10: memref<128x64xbf16, #tpu.memory_space<vmem>>, %arg11: memref<32x64xf32, #tpu.memory_space<vmem>>, %arg12: memref<64x128xf32, #tpu.memory_space<vmem>>) attributes {dimension_semantics = [#tpu.dimension_semantics<arbitrary>], iteration_bounds = array<i64: 1>, scalar_prefetch = 0 : i64, scratch_operands = 1 : i64, tpu.core_type = #tpu.core_type<tc>, window_params = [{pipeline_mode = #tpu.pipeline_mode<synchronous>, transform_indices = @transform_0, window_bounds = array<i64: 64, 64>}, {pipeline_mode = #tpu.pipeline_mode<synchronous>, transform_indices = @transform_1, window_bounds = array<i64: 3, 64, 128>}, {pipeline_mode = #tpu.pipeline_mode<synchronous>, transform_indices = @transform_2, window_bounds = array<i64: 64, 64>}, {pipeline_mode = #tpu.pipeline_mode<synchronous>, transform_indices = @transform_3, window_bounds = array<i64: 64, 64>}, {pipeline_mode = #tpu.pipeline_mode<synchronous>, transform_indices = @transform_4, window_bounds = array<i64: 1, 16>}, {pipeline_mode = #tpu.pipeline_mode<synchronous>, transform_indices = @transform_5, window_bounds = array<i64: 1, 16>}, {pipeline_mode = #tpu.pipeline_mode<synchronous>, transform_indices = @transform_6, window_bounds = array<i64: 128, 16>}, {pipeline_mode = #tpu.pipeline_mode<synchronous>, transform_indices = @transform_7, window_bounds = array<i64: 16, 128>}, {pipeline_mode = #tpu.pipeline_mode<synchronous>, transform_indices = @transform_8, window_bounds = array<i64: 32, 64>}, {pipeline_mode = #tpu.pipeline_mode<synchronous>, transform_indices = @transform_9, window_bounds = array<i64: 128, 64>}, {pipeline_mode = #tpu.pipeline_mode<synchronous>, transform_indices = @transform_10, window_bounds = array<i64: 32, 64>}]} {
    %c0 = arith.constant 0 : index
    %c0_0 = arith.constant 0 : index
    %0 = vector.load %arg1[%c0, %c0_0] : memref<64x64xf32, #tpu.memory_space<vmem>>, vector<64x64xf32>
    %1 = arith.truncf %0 : vector<64x64xf32> to vector<64x64xbf16>
    %c0_1 = arith.constant 0 : index
    %c0_2 = arith.constant 0 : index
    %2 = vector.load %arg3[%c0_1, %c0_2] : memref<64x64xbf16, #tpu.memory_space<vmem>>, vector<64x64xbf16>
    %cst = arith.constant dense<0.000000e+00> : vector<64x64xf32>
    %3 = tpu.matmul %2, %1, %cst {dimension_numbers = #tpu.dot_dimension_numbers<[1], [0], [0], [1], [0, 0, 1, 1], [], []>} : vector<64x64xbf16>, vector<64x64xbf16>, vector<64x64xf32> -> vector<64x64xf32>
    %4 = arith.truncf %3 : vector<64x64xf32> to vector<64x64xbf16>
    %c0_3 = arith.constant 0 : index
    %c0_4 = arith.constant 0 : index
    %5 = vector.load %arg4[%c0_3, %c0_4] : memref<64x64xbf16, #tpu.memory_space<vmem>>, vector<64x64xbf16>
    %cst_5 = arith.constant dense<0.000000e+00> : vector<64x64xf32>
    %6 = tpu.matmul %5, %1, %cst_5 {dimension_numbers = #tpu.dot_dimension_numbers<[1], [0], [0], [1], [0, 0, 1, 1], [], []>} : vector<64x64xbf16>, vector<64x64xbf16>, vector<64x64xf32> -> vector<64x64xf32>
    %7 = arith.truncf %6 : vector<64x64xf32> to vector<64x64xbf16>
    %c1 = arith.constant 1 : index
    %c0_6 = arith.constant 0 : index
    %c0_7 = arith.constant 0 : index
    %8 = vector.load %arg2[%c1, %c0_6, %c0_7] : memref<3x64x128xbf16, #tpu.memory_space<vmem>>, vector<1x64x128xbf16>
    %9 = vector.shape_cast %8 : vector<1x64x128xbf16> to vector<64x128xbf16>
    %cst_8 = arith.constant dense<0.000000e+00> : vector<64x128xf32>
    %10 = tpu.matmul %1, %9, %cst_8 {dimension_numbers = #tpu.dot_dimension_numbers<[1], [0], [0], [1], [0, 0, 1, 1], [], []>} : vector<64x64xbf16>, vector<64x128xbf16>, vector<64x128xf32> -> vector<64x128xf32>
    %c0_9 = arith.constant 0 : index
    %c0_10 = arith.constant 0 : index
    %c0_11 = arith.constant 0 : index
    %11 = vector.load %arg2[%c0_9, %c0_10, %c0_11] : memref<3x64x128xbf16, #tpu.memory_space<vmem>>, vector<1x64x128xbf16>
    %12 = vector.shape_cast %11 : vector<1x64x128xbf16> to vector<64x128xbf16>
    %cst_12 = arith.constant dense<0.000000e+00> : vector<64x128xf32>
    %13 = tpu.matmul %4, %12, %cst_12 {dimension_numbers = #tpu.dot_dimension_numbers<[1], [0], [0], [1], [0, 0, 1, 1], [], []>} : vector<64x64xbf16>, vector<64x128xbf16>, vector<64x128xf32> -> vector<64x128xf32>
    %14 = arith.addf %10, %13 : vector<64x128xf32>
    %c2 = arith.constant 2 : index
    %c0_13 = arith.constant 0 : index
    %c0_14 = arith.constant 0 : index
    %15 = vector.load %arg2[%c2, %c0_13, %c0_14] : memref<3x64x128xbf16, #tpu.memory_space<vmem>>, vector<1x64x128xbf16>
    %16 = vector.shape_cast %15 : vector<1x64x128xbf16> to vector<64x128xbf16>
    %cst_15 = arith.constant dense<0.000000e+00> : vector<64x128xf32>
    %17 = tpu.matmul %7, %16, %cst_15 {dimension_numbers = #tpu.dot_dimension_numbers<[1], [0], [0], [1], [0, 0, 1, 1], [], []>} : vector<64x64xbf16>, vector<64x128xbf16>, vector<64x128xf32> -> vector<64x128xf32>
    %18 = arith.addf %14, %17 : vector<64x128xf32>
    %c0_16 = arith.constant 0 : index
    %c0_17 = arith.constant 0 : index
    %19 = vector.load %arg12[%c0_16, %c0_17] : memref<64x128xf32, #tpu.memory_space<vmem>>, vector<64x128xf32>
    tpu.vector_store %arg12[%c0_16, %c0_17], %18 {strides = array<i32>} : memref<64x128xf32, #tpu.memory_space<vmem>>, vector<64x128xf32>,
    %c0_18 = arith.constant 0 : index
    %c0_19 = arith.constant 0 : index
    %20 = vector.load %arg7[%c0_18, %c0_19] : memref<128x16xf32, #tpu.memory_space<vmem>>, vector<128x16xf32>
    %cst_20 = arith.constant dense<0.000000e+00> : vector<64x16xf32>
    %21 = tpu.matmul %18, %20, %cst_20 {dimension_numbers = #tpu.dot_dimension_numbers<[1], [0], [0], [1], [0, 0, 1, 1], [], []>} : vector<64x128xf32>, vector<128x16xf32>, vector<64x16xf32> -> vector<64x16xf32>
    %cst_21 = arith.constant dense<0.000000e+00> : vector<16xf32>
    %22 = vector.multi_reduction <add>, %21, %cst_21 [0] : vector<64x16xf32> to vector<16xf32>
    %23 = vector.shape_cast %22 : vector<16xf32> to vector<1x16xf32>
    %24 = arith.mulf %18, %18 : vector<64x128xf32>
    %c0_22 = arith.constant 0 : index
    %c0_23 = arith.constant 0 : index
    %25 = vector.load %arg7[%c0_22, %c0_23] : memref<128x16xf32, #tpu.memory_space<vmem>>, vector<128x16xf32>
    %cst_24 = arith.constant dense<0.000000e+00> : vector<64x16xf32>
    %26 = tpu.matmul %24, %25, %cst_24 {dimension_numbers = #tpu.dot_dimension_numbers<[1], [0], [0], [1], [0, 0, 1, 1], [], []>} : vector<64x128xf32>, vector<128x16xf32>, vector<64x16xf32> -> vector<64x16xf32>
    %cst_25 = arith.constant dense<0.000000e+00> : vector<16xf32>
    %27 = vector.multi_reduction <add>, %26, %cst_25 [0] : vector<64x16xf32> to vector<16xf32>
    %28 = vector.shape_cast %27 : vector<16xf32> to vector<1x16xf32>
    %cst_26 = arith.constant 0.001953125 : f32
    %29 = vector.broadcast %cst_26 : f32 to vector<1x16xf32>
    %30 = arith.mulf %23, %29 : vector<1x16xf32>
    %cst_27 = arith.constant 0.001953125 : f32
    %31 = vector.broadcast %cst_27 : f32 to vector<1x16xf32>
    %32 = arith.mulf %28, %31 : vector<1x16xf32>
    %33 = arith.mulf %30, %30 : vector<1x16xf32>
    %34 = arith.subf %32, %33 : vector<1x16xf32>
    %cst_28 = arith.constant 0.000000e+00 : f32
    %35 = vector.broadcast %cst_28 : f32 to vector<1x16xf32>
    %36 = arith.maximumf %34, %35 : vector<1x16xf32>
    %c0_29 = arith.constant 0 : index
    %c0_30 = arith.constant 0 : index
    %37 = vector.load %arg5[%c0_29, %c0_30] : memref<1x16xf32, #tpu.memory_space<vmem>>, vector<1x16xf32>
    %cst_31 = arith.constant 9.99999974E-6 : f32
    %38 = vector.broadcast %cst_31 : f32 to vector<1x16xf32>
    %39 = arith.addf %36, %38 : vector<1x16xf32>
    %40 = math.rsqrt %39 : vector<1x16xf32>
    %41 = arith.mulf %37, %40 : vector<1x16xf32>
    %c0_32 = arith.constant 0 : index
    %c0_33 = arith.constant 0 : index
    %42 = vector.load %arg6[%c0_32, %c0_33] : memref<1x16xf32, #tpu.memory_space<vmem>>, vector<1x16xf32>
    %43 = arith.mulf %30, %41 : vector<1x16xf32>
    %44 = arith.subf %42, %43 : vector<1x16xf32>
    %c0_34 = arith.constant 0 : index
    %c0_35 = arith.constant 0 : index
    %45 = vector.load %arg8[%c0_34, %c0_35] : memref<16x128xf32, #tpu.memory_space<vmem>>, vector<16x128xf32>
    %cst_36 = arith.constant dense<0.000000e+00> : vector<1x128xf32>
    %46 = tpu.matmul %41, %45, %cst_36 {dimension_numbers = #tpu.dot_dimension_numbers<[1], [0], [0], [1], [0, 0, 1, 1], [], []>} : vector<1x16xf32>, vector<16x128xf32>, vector<1x128xf32> -> vector<1x128xf32>
    %c0_37 = arith.constant 0 : index
    %c0_38 = arith.constant 0 : index
    %47 = vector.load %arg8[%c0_37, %c0_38] : memref<16x128xf32, #tpu.memory_space<vmem>>, vector<16x128xf32>
    %cst_39 = arith.constant dense<0.000000e+00> : vector<1x128xf32>
    %48 = tpu.matmul %44, %47, %cst_39 {dimension_numbers = #tpu.dot_dimension_numbers<[1], [0], [0], [1], [0, 0, 1, 1], [], []>} : vector<1x16xf32>, vector<16x128xf32>, vector<1x128xf32> -> vector<1x128xf32>
    %cst_40 = arith.constant 0.000000e+00 : f32
    %49 = vector.broadcast %cst_40 : f32 to vector<16x128xf32>
    %c0_41 = arith.constant 0 : index
    %c0_42 = arith.constant 0 : index
    %50 = vector.load %arg12[%c0_41, %c0_42] : memref<64x128xf32, #tpu.memory_space<vmem>>, vector<16x128xf32>
    %51 = vector.broadcast %46 : vector<1x128xf32> to vector<16x128xf32>
    %52 = arith.mulf %50, %51 : vector<16x128xf32>
    %53 = arith.addf %49, %52 : vector<16x128xf32>
    %54 = vector.broadcast %48 : vector<1x128xf32> to vector<16x128xf32>
    %55 = arith.addf %53, %54 : vector<16x128xf32>
    %cst_43 = arith.constant 1.000000e+00 : f32
    %56 = vector.broadcast %cst_43 : f32 to vector<16x128xf32>
    %57 = arith.cmpf oge, %55, %56 : vector<16x128xf32>
    %cst_44 = arith.constant 0.000000e+00 : f32
    %58 = vector.broadcast %cst_44 : f32 to vector<16x128xf32>
    %59 = arith.select %57, %58, %55 : vector<16x128xi1>, vector<16x128xf32>
    %60 = arith.extui %57 : vector<16x128xi1> to vector<16x128xi32>
    %61 = arith.sitofp %60 : vector<16x128xi32> to vector<16x128xf32>
    %c0_45 = arith.constant 0 : index
    %c0_46 = arith.constant 0 : index
    %62 = vector.load %arg12[%c0_45, %c0_46] : memref<64x128xf32, #tpu.memory_space<vmem>>, vector<16x128xf32>
    tpu.vector_store %arg12[%c0_45, %c0_46], %61 {strides = array<i32>} : memref<64x128xf32, #tpu.memory_space<vmem>>, vector<16x128xf32>,
    %c16 = arith.constant 16 : index
    %c0_47 = arith.constant 0 : index
    %63 = vector.load %arg12[%c16, %c0_47] : memref<64x128xf32, #tpu.memory_space<vmem>>, vector<16x128xf32>
    %64 = vector.broadcast %46 : vector<1x128xf32> to vector<16x128xf32>
    %65 = arith.mulf %63, %64 : vector<16x128xf32>
    %66 = arith.addf %59, %65 : vector<16x128xf32>
    %67 = vector.broadcast %48 : vector<1x128xf32> to vector<16x128xf32>
    %68 = arith.addf %66, %67 : vector<16x128xf32>
    %cst_48 = arith.constant 1.000000e+00 : f32
    %69 = vector.broadcast %cst_48 : f32 to vector<16x128xf32>
    %70 = arith.cmpf oge, %68, %69 : vector<16x128xf32>
    %cst_49 = arith.constant 0.000000e+00 : f32
    %71 = vector.broadcast %cst_49 : f32 to vector<16x128xf32>
    %72 = arith.select %70, %71, %68 : vector<16x128xi1>, vector<16x128xf32>
    %73 = arith.extui %70 : vector<16x128xi1> to vector<16x128xi32>
    %74 = arith.sitofp %73 : vector<16x128xi32> to vector<16x128xf32>
    %c16_50 = arith.constant 16 : index
    %c0_51 = arith.constant 0 : index
    %75 = vector.load %arg12[%c16_50, %c0_51] : memref<64x128xf32, #tpu.memory_space<vmem>>, vector<16x128xf32>
    tpu.vector_store %arg12[%c16_50, %c0_51], %74 {strides = array<i32>} : memref<64x128xf32, #tpu.memory_space<vmem>>, vector<16x128xf32>,
    %c32 = arith.constant 32 : index
    %c0_52 = arith.constant 0 : index
    %76 = vector.load %arg12[%c32, %c0_52] : memref<64x128xf32, #tpu.memory_space<vmem>>, vector<16x128xf32>
    %77 = vector.broadcast %46 : vector<1x128xf32> to vector<16x128xf32>
    %78 = arith.mulf %76, %77 : vector<16x128xf32>
    %79 = arith.addf %72, %78 : vector<16x128xf32>
    %80 = vector.broadcast %48 : vector<1x128xf32> to vector<16x128xf32>
    %81 = arith.addf %79, %80 : vector<16x128xf32>
    %cst_53 = arith.constant 1.000000e+00 : f32
    %82 = vector.broadcast %cst_53 : f32 to vector<16x128xf32>
    %83 = arith.cmpf oge, %81, %82 : vector<16x128xf32>
    %cst_54 = arith.constant 0.000000e+00 : f32
    %84 = vector.broadcast %cst_54 : f32 to vector<16x128xf32>
    %85 = arith.select %83, %84, %81 : vector<16x128xi1>, vector<16x128xf32>
    %86 = arith.extui %83 : vector<16x128xi1> to vector<16x128xi32>
    %87 = arith.sitofp %86 : vector<16x128xi32> to vector<16x128xf32>
    %c32_55 = arith.constant 32 : index
    %c0_56 = arith.constant 0 : index
    %88 = vector.load %arg12[%c32_55, %c0_56] : memref<64x128xf32, #tpu.memory_space<vmem>>, vector<16x128xf32>
    tpu.vector_store %arg12[%c32_55, %c0_56], %87 {strides = array<i32>} : memref<64x128xf32, #tpu.memory_space<vmem>>, vector<16x128xf32>,
    %c48 = arith.constant 48 : index
    %c0_57 = arith.constant 0 : index
    %89 = vector.load %arg12[%c48, %c0_57] : memref<64x128xf32, #tpu.memory_space<vmem>>, vector<16x128xf32>
    %90 = vector.broadcast %46 : vector<1x128xf32> to vector<16x128xf32>
    %91 = arith.mulf %89, %90 : vector<16x128xf32>
    %92 = arith.addf %85, %91 : vector<16x128xf32>
    %93 = vector.broadcast %48 : vector<1x128xf32> to vector<16x128xf32>
    %94 = arith.addf %92, %93 : vector<16x128xf32>
    %cst_58 = arith.constant 1.000000e+00 : f32
    %95 = vector.broadcast %cst_58 : f32 to vector<16x128xf32>
    %96 = arith.cmpf oge, %94, %95 : vector<16x128xf32>
    %97 = arith.extui %96 : vector<16x128xi1> to vector<16x128xi32>
    %98 = arith.sitofp %97 : vector<16x128xi32> to vector<16x128xf32>
    %c48_59 = arith.constant 48 : index
    %c0_60 = arith.constant 0 : index
    %99 = vector.load %arg12[%c48_59, %c0_60] : memref<64x128xf32, #tpu.memory_space<vmem>>, vector<16x128xf32>
    tpu.vector_store %arg12[%c48_59, %c0_60], %98 {strides = array<i32>} : memref<64x128xf32, #tpu.memory_space<vmem>>, vector<16x128xf32>,
    %c0_61 = arith.constant 0 : index
    %c0_62 = arith.constant 0 : index
    %100 = vector.load %arg12[%c0_61, %c0_62] : memref<64x128xf32, #tpu.memory_space<vmem>>, vector<64x128xf32>
    %101 = arith.truncf %100 : vector<64x128xf32> to vector<64x128xbf16>
    %c0_63 = arith.constant 0 : index
    %c0_64 = arith.constant 0 : index
    %102 = vector.load %arg9[%c0_63, %c0_64] : memref<32x64xbf16, #tpu.memory_space<vmem>>, vector<32x64xbf16>
    %cst_65 = arith.constant dense<0.000000e+00> : vector<32x128xf32>
    %103 = tpu.matmul %102, %101, %cst_65 {dimension_numbers = #tpu.dot_dimension_numbers<[1], [0], [0], [1], [0, 0, 1, 1], [], []>} : vector<32x64xbf16>, vector<64x128xbf16>, vector<32x128xf32> -> vector<32x128xf32>
    %104 = arith.truncf %103 : vector<32x128xf32> to vector<32x128xbf16>
    %c0_66 = arith.constant 0 : index
    %c0_67 = arith.constant 0 : index
    %105 = vector.load %arg10[%c0_66, %c0_67] : memref<128x64xbf16, #tpu.memory_space<vmem>>, vector<128x64xbf16>
    %cst_68 = arith.constant dense<0.000000e+00> : vector<32x64xf32>
    %106 = tpu.matmul %104, %105, %cst_68 {dimension_numbers = #tpu.dot_dimension_numbers<[1], [0], [0], [1], [0, 0, 1, 1], [], []>} : vector<32x128xbf16>, vector<128x64xbf16>, vector<32x64xf32> -> vector<32x64xf32>
    %cst_69 = arith.constant 5.000000e-01 : f32
    %107 = vector.broadcast %cst_69 : f32 to vector<32x64xf32>
    %108 = arith.cmpf oge, %106, %107 : vector<32x64xf32>
    %109 = arith.extui %108 : vector<32x64xi1> to vector<32x64xi32>
    %110 = arith.sitofp %109 : vector<32x64xi32> to vector<32x64xf32>
    %c0_70 = arith.constant 0 : index
    %c0_71 = arith.constant 0 : index
    %111 = vector.load %arg11[%c0_70, %c0_71] : memref<32x64xf32, #tpu.memory_space<vmem>>, vector<32x64xf32>
    tpu.vector_store %arg11[%c0_70, %c0_71], %110 {strides = array<i32>} : memref<32x64xf32, #tpu.memory_space<vmem>>, vector<32x64xf32>,
    return
  }
  func.func @transform_0(%arg0: i32) -> (i32, i32) {
    %c0_i32 = arith.constant 0 : i32
    %c0_i32_0 = arith.constant 0 : i32
    %c0_i32_1 = arith.constant 0 : i32
    return %c0_i32, %c0_i32_0 : i32, i32
  }
  func.func @transform_1(%arg0: i32) -> (i32, i32, i32) {
    %c0_i32 = arith.constant 0 : i32
    %c0_i32_0 = arith.constant 0 : i32
    %c0_i32_1 = arith.constant 0 : i32
    %c0_i32_2 = arith.constant 0 : i32
    return %c0_i32, %c0_i32_0, %c0_i32_1 : i32, i32, i32
  }
  func.func @transform_2(%arg0: i32) -> (i32, i32) {
    %c0_i32 = arith.constant 0 : i32
    %c0_i32_0 = arith.constant 0 : i32
    %c0_i32_1 = arith.constant 0 : i32
    return %c0_i32, %c0_i32_0 : i32, i32
  }
  func.func @transform_3(%arg0: i32) -> (i32, i32) {
    %c0_i32 = arith.constant 0 : i32
    %c0_i32_0 = arith.constant 0 : i32
    %c0_i32_1 = arith.constant 0 : i32
    return %c0_i32, %c0_i32_0 : i32, i32
  }
  func.func @transform_4(%arg0: i32) -> (i32, i32) {
    %c0_i32 = arith.constant 0 : i32
    %c0_i32_0 = arith.constant 0 : i32
    %c0_i32_1 = arith.constant 0 : i32
    return %c0_i32, %c0_i32_0 : i32, i32
  }
  func.func @transform_5(%arg0: i32) -> (i32, i32) {
    %c0_i32 = arith.constant 0 : i32
    %c0_i32_0 = arith.constant 0 : i32
    %c0_i32_1 = arith.constant 0 : i32
    return %c0_i32, %c0_i32_0 : i32, i32
  }
  func.func @transform_6(%arg0: i32) -> (i32, i32) {
    %c0_i32 = arith.constant 0 : i32
    %c0_i32_0 = arith.constant 0 : i32
    %c0_i32_1 = arith.constant 0 : i32
    return %c0_i32, %c0_i32_0 : i32, i32
  }
  func.func @transform_7(%arg0: i32) -> (i32, i32) {
    %c0_i32 = arith.constant 0 : i32
    %c0_i32_0 = arith.constant 0 : i32
    %c0_i32_1 = arith.constant 0 : i32
    return %c0_i32, %c0_i32_0 : i32, i32
  }
  func.func @transform_8(%arg0: i32) -> (i32, i32) {
    %c0_i32 = arith.constant 0 : i32
    %c0_i32_0 = arith.constant 0 : i32
    %c0_i32_1 = arith.constant 0 : i32
    return %c0_i32, %c0_i32_0 : i32, i32
  }
  func.func @transform_9(%arg0: i32) -> (i32, i32) {
    %c0_i32 = arith.constant 0 : i32
    %c0_i32_0 = arith.constant 0 : i32
    %c0_i32_1 = arith.constant 0 : i32
    return %c0_i32, %c0_i32_0 : i32, i32
  }
  func.func @transform_10(%arg0: i32) -> (i32, i32) {
    %c0_i32 = arith.constant 0 : i32
    %c0_i32_0 = arith.constant 0 : i32
    %c0_i32_1 = arith.constant 0 : i32
    return %c0_i32, %c0_i32_0 : i32, i32
  }
}

module attributes {stable_mosaic.version = 11 : i64} {
  func.func @_stage_kernel(%arg0: i32, %arg1: memref<32x64xf32, #tpu.memory_space<vmem>>, %arg2: memref<3x64x128xbf16, #tpu.memory_space<vmem>>, %arg3: memref<32x32xbf16, #tpu.memory_space<vmem>>, %arg4: memref<32x32xbf16, #tpu.memory_space<vmem>>, %arg5: memref<1x32xf32, #tpu.memory_space<vmem>>, %arg6: memref<1x32xf32, #tpu.memory_space<vmem>>, %arg7: memref<128x32xf32, #tpu.memory_space<vmem>>, %arg8: memref<32x128xf32, #tpu.memory_space<vmem>>, %arg9: memref<16x32xbf16, #tpu.memory_space<vmem>>, %arg10: memref<128x64xbf16, #tpu.memory_space<vmem>>, %arg11: memref<16x64xf32, #tpu.memory_space<vmem>>, %arg12: memref<32x128xf32, #tpu.memory_space<vmem>>) attributes {dimension_semantics = [#tpu.dimension_semantics<arbitrary>], iteration_bounds = array<i64: 1>, scalar_prefetch = 0 : i64, scratch_operands = 1 : i64, tpu.core_type = #tpu.core_type<tc>, window_params = [{pipeline_mode = #tpu.pipeline_mode<synchronous>, transform_indices = @transform_0, window_bounds = array<i64: 32, 64>}, {pipeline_mode = #tpu.pipeline_mode<synchronous>, transform_indices = @transform_1, window_bounds = array<i64: 3, 64, 128>}, {pipeline_mode = #tpu.pipeline_mode<synchronous>, transform_indices = @transform_2, window_bounds = array<i64: 32, 32>}, {pipeline_mode = #tpu.pipeline_mode<synchronous>, transform_indices = @transform_3, window_bounds = array<i64: 32, 32>}, {pipeline_mode = #tpu.pipeline_mode<synchronous>, transform_indices = @transform_4, window_bounds = array<i64: 1, 32>}, {pipeline_mode = #tpu.pipeline_mode<synchronous>, transform_indices = @transform_5, window_bounds = array<i64: 1, 32>}, {pipeline_mode = #tpu.pipeline_mode<synchronous>, transform_indices = @transform_6, window_bounds = array<i64: 128, 32>}, {pipeline_mode = #tpu.pipeline_mode<synchronous>, transform_indices = @transform_7, window_bounds = array<i64: 32, 128>}, {pipeline_mode = #tpu.pipeline_mode<synchronous>, transform_indices = @transform_8, window_bounds = array<i64: 16, 32>}, {pipeline_mode = #tpu.pipeline_mode<synchronous>, transform_indices = @transform_9, window_bounds = array<i64: 128, 64>}, {pipeline_mode = #tpu.pipeline_mode<synchronous>, transform_indices = @transform_10, window_bounds = array<i64: 16, 64>}]} {
    %c0 = arith.constant 0 : index
    %c0_0 = arith.constant 0 : index
    %0 = vector.load %arg1[%c0, %c0_0] : memref<32x64xf32, #tpu.memory_space<vmem>>, vector<32x64xf32>
    %1 = arith.truncf %0 : vector<32x64xf32> to vector<32x64xbf16>
    %c0_1 = arith.constant 0 : index
    %c0_2 = arith.constant 0 : index
    %2 = vector.load %arg3[%c0_1, %c0_2] : memref<32x32xbf16, #tpu.memory_space<vmem>>, vector<32x32xbf16>
    %cst = arith.constant dense<0.000000e+00> : vector<32x64xf32>
    %3 = tpu.matmul %2, %1, %cst {dimension_numbers = #tpu.dot_dimension_numbers<[1], [0], [0], [1], [0, 0, 1, 1], [], []>} : vector<32x32xbf16>, vector<32x64xbf16>, vector<32x64xf32> -> vector<32x64xf32>
    %4 = arith.truncf %3 : vector<32x64xf32> to vector<32x64xbf16>
    %c0_3 = arith.constant 0 : index
    %c0_4 = arith.constant 0 : index
    %5 = vector.load %arg4[%c0_3, %c0_4] : memref<32x32xbf16, #tpu.memory_space<vmem>>, vector<32x32xbf16>
    %cst_5 = arith.constant dense<0.000000e+00> : vector<32x64xf32>
    %6 = tpu.matmul %5, %1, %cst_5 {dimension_numbers = #tpu.dot_dimension_numbers<[1], [0], [0], [1], [0, 0, 1, 1], [], []>} : vector<32x32xbf16>, vector<32x64xbf16>, vector<32x64xf32> -> vector<32x64xf32>
    %7 = arith.truncf %6 : vector<32x64xf32> to vector<32x64xbf16>
    %c1 = arith.constant 1 : index
    %c0_6 = arith.constant 0 : index
    %c0_7 = arith.constant 0 : index
    %8 = vector.load %arg2[%c1, %c0_6, %c0_7] : memref<3x64x128xbf16, #tpu.memory_space<vmem>>, vector<1x64x128xbf16>
    %9 = vector.shape_cast %8 : vector<1x64x128xbf16> to vector<64x128xbf16>
    %cst_8 = arith.constant dense<0.000000e+00> : vector<32x128xf32>
    %10 = tpu.matmul %1, %9, %cst_8 {dimension_numbers = #tpu.dot_dimension_numbers<[1], [0], [0], [1], [0, 0, 1, 1], [], []>} : vector<32x64xbf16>, vector<64x128xbf16>, vector<32x128xf32> -> vector<32x128xf32>
    %c0_9 = arith.constant 0 : index
    %c0_10 = arith.constant 0 : index
    %c0_11 = arith.constant 0 : index
    %11 = vector.load %arg2[%c0_9, %c0_10, %c0_11] : memref<3x64x128xbf16, #tpu.memory_space<vmem>>, vector<1x64x128xbf16>
    %12 = vector.shape_cast %11 : vector<1x64x128xbf16> to vector<64x128xbf16>
    %cst_12 = arith.constant dense<0.000000e+00> : vector<32x128xf32>
    %13 = tpu.matmul %4, %12, %cst_12 {dimension_numbers = #tpu.dot_dimension_numbers<[1], [0], [0], [1], [0, 0, 1, 1], [], []>} : vector<32x64xbf16>, vector<64x128xbf16>, vector<32x128xf32> -> vector<32x128xf32>
    %14 = arith.addf %10, %13 : vector<32x128xf32>
    %c2 = arith.constant 2 : index
    %c0_13 = arith.constant 0 : index
    %c0_14 = arith.constant 0 : index
    %15 = vector.load %arg2[%c2, %c0_13, %c0_14] : memref<3x64x128xbf16, #tpu.memory_space<vmem>>, vector<1x64x128xbf16>
    %16 = vector.shape_cast %15 : vector<1x64x128xbf16> to vector<64x128xbf16>
    %cst_15 = arith.constant dense<0.000000e+00> : vector<32x128xf32>
    %17 = tpu.matmul %7, %16, %cst_15 {dimension_numbers = #tpu.dot_dimension_numbers<[1], [0], [0], [1], [0, 0, 1, 1], [], []>} : vector<32x64xbf16>, vector<64x128xbf16>, vector<32x128xf32> -> vector<32x128xf32>
    %18 = arith.addf %14, %17 : vector<32x128xf32>
    %c0_16 = arith.constant 0 : index
    %c0_17 = arith.constant 0 : index
    %19 = vector.load %arg12[%c0_16, %c0_17] : memref<32x128xf32, #tpu.memory_space<vmem>>, vector<32x128xf32>
    tpu.vector_store %arg12[%c0_16, %c0_17], %18 {strides = array<i32>} : memref<32x128xf32, #tpu.memory_space<vmem>>, vector<32x128xf32>,
    %c0_18 = arith.constant 0 : index
    %c0_19 = arith.constant 0 : index
    %20 = vector.load %arg7[%c0_18, %c0_19] : memref<128x32xf32, #tpu.memory_space<vmem>>, vector<128x32xf32>
    %cst_20 = arith.constant dense<0.000000e+00> : vector<32x32xf32>
    %21 = tpu.matmul %18, %20, %cst_20 {dimension_numbers = #tpu.dot_dimension_numbers<[1], [0], [0], [1], [0, 0, 1, 1], [], []>} : vector<32x128xf32>, vector<128x32xf32>, vector<32x32xf32> -> vector<32x32xf32>
    %cst_21 = arith.constant dense<0.000000e+00> : vector<32xf32>
    %22 = vector.multi_reduction <add>, %21, %cst_21 [0] : vector<32x32xf32> to vector<32xf32>
    %23 = vector.shape_cast %22 : vector<32xf32> to vector<1x32xf32>
    %24 = arith.mulf %18, %18 : vector<32x128xf32>
    %c0_22 = arith.constant 0 : index
    %c0_23 = arith.constant 0 : index
    %25 = vector.load %arg7[%c0_22, %c0_23] : memref<128x32xf32, #tpu.memory_space<vmem>>, vector<128x32xf32>
    %cst_24 = arith.constant dense<0.000000e+00> : vector<32x32xf32>
    %26 = tpu.matmul %24, %25, %cst_24 {dimension_numbers = #tpu.dot_dimension_numbers<[1], [0], [0], [1], [0, 0, 1, 1], [], []>} : vector<32x128xf32>, vector<128x32xf32>, vector<32x32xf32> -> vector<32x32xf32>
    %cst_25 = arith.constant dense<0.000000e+00> : vector<32xf32>
    %27 = vector.multi_reduction <add>, %26, %cst_25 [0] : vector<32x32xf32> to vector<32xf32>
    %28 = vector.shape_cast %27 : vector<32xf32> to vector<1x32xf32>
    %cst_26 = arith.constant 7.812500e-03 : f32
    %29 = vector.broadcast %cst_26 : f32 to vector<1x32xf32>
    %30 = arith.mulf %23, %29 : vector<1x32xf32>
    %cst_27 = arith.constant 7.812500e-03 : f32
    %31 = vector.broadcast %cst_27 : f32 to vector<1x32xf32>
    %32 = arith.mulf %28, %31 : vector<1x32xf32>
    %33 = arith.mulf %30, %30 : vector<1x32xf32>
    %34 = arith.subf %32, %33 : vector<1x32xf32>
    %cst_28 = arith.constant 0.000000e+00 : f32
    %35 = vector.broadcast %cst_28 : f32 to vector<1x32xf32>
    %36 = arith.maximumf %34, %35 : vector<1x32xf32>
    %c0_29 = arith.constant 0 : index
    %c0_30 = arith.constant 0 : index
    %37 = vector.load %arg5[%c0_29, %c0_30] : memref<1x32xf32, #tpu.memory_space<vmem>>, vector<1x32xf32>
    %cst_31 = arith.constant 9.99999974E-6 : f32
    %38 = vector.broadcast %cst_31 : f32 to vector<1x32xf32>
    %39 = arith.addf %36, %38 : vector<1x32xf32>
    %40 = math.rsqrt %39 : vector<1x32xf32>
    %41 = arith.mulf %37, %40 : vector<1x32xf32>
    %c0_32 = arith.constant 0 : index
    %c0_33 = arith.constant 0 : index
    %42 = vector.load %arg6[%c0_32, %c0_33] : memref<1x32xf32, #tpu.memory_space<vmem>>, vector<1x32xf32>
    %43 = arith.mulf %30, %41 : vector<1x32xf32>
    %44 = arith.subf %42, %43 : vector<1x32xf32>
    %c0_34 = arith.constant 0 : index
    %c0_35 = arith.constant 0 : index
    %45 = vector.load %arg8[%c0_34, %c0_35] : memref<32x128xf32, #tpu.memory_space<vmem>>, vector<32x128xf32>
    %cst_36 = arith.constant dense<0.000000e+00> : vector<1x128xf32>
    %46 = tpu.matmul %41, %45, %cst_36 {dimension_numbers = #tpu.dot_dimension_numbers<[1], [0], [0], [1], [0, 0, 1, 1], [], []>} : vector<1x32xf32>, vector<32x128xf32>, vector<1x128xf32> -> vector<1x128xf32>
    %c0_37 = arith.constant 0 : index
    %c0_38 = arith.constant 0 : index
    %47 = vector.load %arg8[%c0_37, %c0_38] : memref<32x128xf32, #tpu.memory_space<vmem>>, vector<32x128xf32>
    %cst_39 = arith.constant dense<0.000000e+00> : vector<1x128xf32>
    %48 = tpu.matmul %44, %47, %cst_39 {dimension_numbers = #tpu.dot_dimension_numbers<[1], [0], [0], [1], [0, 0, 1, 1], [], []>} : vector<1x32xf32>, vector<32x128xf32>, vector<1x128xf32> -> vector<1x128xf32>
    %cst_40 = arith.constant 0.000000e+00 : f32
    %49 = vector.broadcast %cst_40 : f32 to vector<8x128xf32>
    %c0_41 = arith.constant 0 : index
    %c0_42 = arith.constant 0 : index
    %50 = vector.load %arg12[%c0_41, %c0_42] : memref<32x128xf32, #tpu.memory_space<vmem>>, vector<8x128xf32>
    %51 = vector.broadcast %46 : vector<1x128xf32> to vector<8x128xf32>
    %52 = arith.mulf %50, %51 : vector<8x128xf32>
    %53 = arith.addf %49, %52 : vector<8x128xf32>
    %54 = vector.broadcast %48 : vector<1x128xf32> to vector<8x128xf32>
    %55 = arith.addf %53, %54 : vector<8x128xf32>
    %cst_43 = arith.constant 1.000000e+00 : f32
    %56 = vector.broadcast %cst_43 : f32 to vector<8x128xf32>
    %57 = arith.cmpf oge, %55, %56 : vector<8x128xf32>
    %cst_44 = arith.constant 0.000000e+00 : f32
    %58 = vector.broadcast %cst_44 : f32 to vector<8x128xf32>
    %59 = arith.select %57, %58, %55 : vector<8x128xi1>, vector<8x128xf32>
    %60 = arith.extui %57 : vector<8x128xi1> to vector<8x128xi32>
    %61 = arith.sitofp %60 : vector<8x128xi32> to vector<8x128xf32>
    %c0_45 = arith.constant 0 : index
    %c0_46 = arith.constant 0 : index
    %62 = vector.load %arg12[%c0_45, %c0_46] : memref<32x128xf32, #tpu.memory_space<vmem>>, vector<8x128xf32>
    tpu.vector_store %arg12[%c0_45, %c0_46], %61 {strides = array<i32>} : memref<32x128xf32, #tpu.memory_space<vmem>>, vector<8x128xf32>,
    %c8 = arith.constant 8 : index
    %c0_47 = arith.constant 0 : index
    %63 = vector.load %arg12[%c8, %c0_47] : memref<32x128xf32, #tpu.memory_space<vmem>>, vector<8x128xf32>
    %64 = vector.broadcast %46 : vector<1x128xf32> to vector<8x128xf32>
    %65 = arith.mulf %63, %64 : vector<8x128xf32>
    %66 = arith.addf %59, %65 : vector<8x128xf32>
    %67 = vector.broadcast %48 : vector<1x128xf32> to vector<8x128xf32>
    %68 = arith.addf %66, %67 : vector<8x128xf32>
    %cst_48 = arith.constant 1.000000e+00 : f32
    %69 = vector.broadcast %cst_48 : f32 to vector<8x128xf32>
    %70 = arith.cmpf oge, %68, %69 : vector<8x128xf32>
    %cst_49 = arith.constant 0.000000e+00 : f32
    %71 = vector.broadcast %cst_49 : f32 to vector<8x128xf32>
    %72 = arith.select %70, %71, %68 : vector<8x128xi1>, vector<8x128xf32>
    %73 = arith.extui %70 : vector<8x128xi1> to vector<8x128xi32>
    %74 = arith.sitofp %73 : vector<8x128xi32> to vector<8x128xf32>
    %c8_50 = arith.constant 8 : index
    %c0_51 = arith.constant 0 : index
    %75 = vector.load %arg12[%c8_50, %c0_51] : memref<32x128xf32, #tpu.memory_space<vmem>>, vector<8x128xf32>
    tpu.vector_store %arg12[%c8_50, %c0_51], %74 {strides = array<i32>} : memref<32x128xf32, #tpu.memory_space<vmem>>, vector<8x128xf32>,
    %c16 = arith.constant 16 : index
    %c0_52 = arith.constant 0 : index
    %76 = vector.load %arg12[%c16, %c0_52] : memref<32x128xf32, #tpu.memory_space<vmem>>, vector<8x128xf32>
    %77 = vector.broadcast %46 : vector<1x128xf32> to vector<8x128xf32>
    %78 = arith.mulf %76, %77 : vector<8x128xf32>
    %79 = arith.addf %72, %78 : vector<8x128xf32>
    %80 = vector.broadcast %48 : vector<1x128xf32> to vector<8x128xf32>
    %81 = arith.addf %79, %80 : vector<8x128xf32>
    %cst_53 = arith.constant 1.000000e+00 : f32
    %82 = vector.broadcast %cst_53 : f32 to vector<8x128xf32>
    %83 = arith.cmpf oge, %81, %82 : vector<8x128xf32>
    %cst_54 = arith.constant 0.000000e+00 : f32
    %84 = vector.broadcast %cst_54 : f32 to vector<8x128xf32>
    %85 = arith.select %83, %84, %81 : vector<8x128xi1>, vector<8x128xf32>
    %86 = arith.extui %83 : vector<8x128xi1> to vector<8x128xi32>
    %87 = arith.sitofp %86 : vector<8x128xi32> to vector<8x128xf32>
    %c16_55 = arith.constant 16 : index
    %c0_56 = arith.constant 0 : index
    %88 = vector.load %arg12[%c16_55, %c0_56] : memref<32x128xf32, #tpu.memory_space<vmem>>, vector<8x128xf32>
    tpu.vector_store %arg12[%c16_55, %c0_56], %87 {strides = array<i32>} : memref<32x128xf32, #tpu.memory_space<vmem>>, vector<8x128xf32>,
    %c24 = arith.constant 24 : index
    %c0_57 = arith.constant 0 : index
    %89 = vector.load %arg12[%c24, %c0_57] : memref<32x128xf32, #tpu.memory_space<vmem>>, vector<8x128xf32>
    %90 = vector.broadcast %46 : vector<1x128xf32> to vector<8x128xf32>
    %91 = arith.mulf %89, %90 : vector<8x128xf32>
    %92 = arith.addf %85, %91 : vector<8x128xf32>
    %93 = vector.broadcast %48 : vector<1x128xf32> to vector<8x128xf32>
    %94 = arith.addf %92, %93 : vector<8x128xf32>
    %cst_58 = arith.constant 1.000000e+00 : f32
    %95 = vector.broadcast %cst_58 : f32 to vector<8x128xf32>
    %96 = arith.cmpf oge, %94, %95 : vector<8x128xf32>
    %97 = arith.extui %96 : vector<8x128xi1> to vector<8x128xi32>
    %98 = arith.sitofp %97 : vector<8x128xi32> to vector<8x128xf32>
    %c24_59 = arith.constant 24 : index
    %c0_60 = arith.constant 0 : index
    %99 = vector.load %arg12[%c24_59, %c0_60] : memref<32x128xf32, #tpu.memory_space<vmem>>, vector<8x128xf32>
    tpu.vector_store %arg12[%c24_59, %c0_60], %98 {strides = array<i32>} : memref<32x128xf32, #tpu.memory_space<vmem>>, vector<8x128xf32>,
    %c0_61 = arith.constant 0 : index
    %c0_62 = arith.constant 0 : index
    %100 = vector.load %arg12[%c0_61, %c0_62] : memref<32x128xf32, #tpu.memory_space<vmem>>, vector<32x128xf32>
    %101 = arith.truncf %100 : vector<32x128xf32> to vector<32x128xbf16>
    %c0_63 = arith.constant 0 : index
    %c0_64 = arith.constant 0 : index
    %102 = vector.load %arg9[%c0_63, %c0_64] : memref<16x32xbf16, #tpu.memory_space<vmem>>, vector<16x32xbf16>
    %cst_65 = arith.constant dense<0.000000e+00> : vector<16x128xf32>
    %103 = tpu.matmul %102, %101, %cst_65 {dimension_numbers = #tpu.dot_dimension_numbers<[1], [0], [0], [1], [0, 0, 1, 1], [], []>} : vector<16x32xbf16>, vector<32x128xbf16>, vector<16x128xf32> -> vector<16x128xf32>
    %104 = arith.truncf %103 : vector<16x128xf32> to vector<16x128xbf16>
    %c0_66 = arith.constant 0 : index
    %c0_67 = arith.constant 0 : index
    %105 = vector.load %arg10[%c0_66, %c0_67] : memref<128x64xbf16, #tpu.memory_space<vmem>>, vector<128x64xbf16>
    %cst_68 = arith.constant dense<0.000000e+00> : vector<16x64xf32>
    %106 = tpu.matmul %104, %105, %cst_68 {dimension_numbers = #tpu.dot_dimension_numbers<[1], [0], [0], [1], [0, 0, 1, 1], [], []>} : vector<16x128xbf16>, vector<128x64xbf16>, vector<16x64xf32> -> vector<16x64xf32>
    %cst_69 = arith.constant 5.000000e-01 : f32
    %107 = vector.broadcast %cst_69 : f32 to vector<16x64xf32>
    %108 = arith.cmpf oge, %106, %107 : vector<16x64xf32>
    %109 = arith.extui %108 : vector<16x64xi1> to vector<16x64xi32>
    %110 = arith.sitofp %109 : vector<16x64xi32> to vector<16x64xf32>
    %c0_70 = arith.constant 0 : index
    %c0_71 = arith.constant 0 : index
    %111 = vector.load %arg11[%c0_70, %c0_71] : memref<16x64xf32, #tpu.memory_space<vmem>>, vector<16x64xf32>
    tpu.vector_store %arg11[%c0_70, %c0_71], %110 {strides = array<i32>} : memref<16x64xf32, #tpu.memory_space<vmem>>, vector<16x64xf32>,
    return
  }
  func.func @transform_0(%arg0: i32) -> (i32, i32) {
    %c0_i32 = arith.constant 0 : i32
    %c0_i32_0 = arith.constant 0 : i32
    %c0_i32_1 = arith.constant 0 : i32
    return %c0_i32, %c0_i32_0 : i32, i32
  }
  func.func @transform_1(%arg0: i32) -> (i32, i32, i32) {
    %c0_i32 = arith.constant 0 : i32
    %c0_i32_0 = arith.constant 0 : i32
    %c0_i32_1 = arith.constant 0 : i32
    %c0_i32_2 = arith.constant 0 : i32
    return %c0_i32, %c0_i32_0, %c0_i32_1 : i32, i32, i32
  }
  func.func @transform_2(%arg0: i32) -> (i32, i32) {
    %c0_i32 = arith.constant 0 : i32
    %c0_i32_0 = arith.constant 0 : i32
    %c0_i32_1 = arith.constant 0 : i32
    return %c0_i32, %c0_i32_0 : i32, i32
  }
  func.func @transform_3(%arg0: i32) -> (i32, i32) {
    %c0_i32 = arith.constant 0 : i32
    %c0_i32_0 = arith.constant 0 : i32
    %c0_i32_1 = arith.constant 0 : i32
    return %c0_i32, %c0_i32_0 : i32, i32
  }
  func.func @transform_4(%arg0: i32) -> (i32, i32) {
    %c0_i32 = arith.constant 0 : i32
    %c0_i32_0 = arith.constant 0 : i32
    %c0_i32_1 = arith.constant 0 : i32
    return %c0_i32, %c0_i32_0 : i32, i32
  }
  func.func @transform_5(%arg0: i32) -> (i32, i32) {
    %c0_i32 = arith.constant 0 : i32
    %c0_i32_0 = arith.constant 0 : i32
    %c0_i32_1 = arith.constant 0 : i32
    return %c0_i32, %c0_i32_0 : i32, i32
  }
  func.func @transform_6(%arg0: i32) -> (i32, i32) {
    %c0_i32 = arith.constant 0 : i32
    %c0_i32_0 = arith.constant 0 : i32
    %c0_i32_1 = arith.constant 0 : i32
    return %c0_i32, %c0_i32_0 : i32, i32
  }
  func.func @transform_7(%arg0: i32) -> (i32, i32) {
    %c0_i32 = arith.constant 0 : i32
    %c0_i32_0 = arith.constant 0 : i32
    %c0_i32_1 = arith.constant 0 : i32
    return %c0_i32, %c0_i32_0 : i32, i32
  }
  func.func @transform_8(%arg0: i32) -> (i32, i32) {
    %c0_i32 = arith.constant 0 : i32
    %c0_i32_0 = arith.constant 0 : i32
    %c0_i32_1 = arith.constant 0 : i32
    return %c0_i32, %c0_i32_0 : i32, i32
  }
  func.func @transform_9(%arg0: i32) -> (i32, i32) {
    %c0_i32 = arith.constant 0 : i32
    %c0_i32_0 = arith.constant 0 : i32
    %c0_i32_1 = arith.constant 0 : i32
    return %c0_i32, %c0_i32_0 : i32, i32
  }
  func.func @transform_10(%arg0: i32) -> (i32, i32) {
    %c0_i32 = arith.constant 0 : i32
    %c0_i32_0 = arith.constant 0 : i32
    %c0_i32_1 = arith.constant 0 : i32
    return %c0_i32, %c0_i32_0 : i32, i32
  }
}

module attributes {stable_mosaic.version = 11 : i64} {
  func.func @_tail_kernel(%arg0: i32, %arg1: memref<16x64xf32, #tpu.memory_space<vmem>>, %arg2: memref<8x16xbf16, #tpu.memory_space<vmem>>, %arg3: memref<64x8xbf16, #tpu.memory_space<vmem>>, %arg4: memref<1x8xf32, #tpu.memory_space<vmem>>, %arg5: memref<2x8xf32, #tpu.memory_space<vmem>>) attributes {dimension_semantics = [#tpu.dimension_semantics<arbitrary>], iteration_bounds = array<i64: 1>, scalar_prefetch = 0 : i64, scratch_operands = 0 : i64, tpu.core_type = #tpu.core_type<tc>, window_params = [{pipeline_mode = #tpu.pipeline_mode<synchronous>, transform_indices = @transform_0, window_bounds = array<i64: 16, 64>}, {pipeline_mode = #tpu.pipeline_mode<synchronous>, transform_indices = @transform_1, window_bounds = array<i64: 8, 16>}, {pipeline_mode = #tpu.pipeline_mode<synchronous>, transform_indices = @transform_2, window_bounds = array<i64: 64, 8>}, {pipeline_mode = #tpu.pipeline_mode<synchronous>, transform_indices = @transform_3, window_bounds = array<i64: 1, 8>}, {pipeline_mode = #tpu.pipeline_mode<synchronous>, transform_indices = @transform_4, window_bounds = array<i64: 2, 8>}]} {
    %c0 = arith.constant 0 : index
    %c0_0 = arith.constant 0 : index
    %0 = vector.load %arg1[%c0, %c0_0] : memref<16x64xf32, #tpu.memory_space<vmem>>, vector<16x64xf32>
    %1 = arith.truncf %0 : vector<16x64xf32> to vector<16x64xbf16>
    %c0_1 = arith.constant 0 : index
    %c0_2 = arith.constant 0 : index
    %2 = vector.load %arg2[%c0_1, %c0_2] : memref<8x16xbf16, #tpu.memory_space<vmem>>, vector<8x16xbf16>
    %cst = arith.constant dense<0.000000e+00> : vector<8x64xf32>
    %3 = tpu.matmul %2, %1, %cst {dimension_numbers = #tpu.dot_dimension_numbers<[1], [0], [0], [1], [0, 0, 1, 1], [], []>} : vector<8x16xbf16>, vector<16x64xbf16>, vector<8x64xf32> -> vector<8x64xf32>
    %4 = arith.truncf %3 : vector<8x64xf32> to vector<8x64xbf16>
    %c0_3 = arith.constant 0 : index
    %c0_4 = arith.constant 0 : index
    %5 = vector.load %arg3[%c0_3, %c0_4] : memref<64x8xbf16, #tpu.memory_space<vmem>>, vector<64x8xbf16>
    %cst_5 = arith.constant dense<0.000000e+00> : vector<8x8xf32>
    %6 = tpu.matmul %4, %5, %cst_5 {dimension_numbers = #tpu.dot_dimension_numbers<[1], [0], [0], [1], [0, 0, 1, 1], [], []>} : vector<8x64xbf16>, vector<64x8xbf16>, vector<8x8xf32> -> vector<8x8xf32>
    %cst_6 = arith.constant 2.500000e-01 : f32
    %7 = vector.broadcast %cst_6 : f32 to vector<8x8xf32>
    %8 = arith.mulf %6, %7 : vector<8x8xf32>
    %c0_7 = arith.constant 0 : index
    %c0_8 = arith.constant 0 : index
    %9 = vector.load %arg4[%c0_7, %c0_8] : memref<1x8xf32, #tpu.memory_space<vmem>>, vector<1x8xf32>
    %10 = vector.broadcast %9 : vector<1x8xf32> to vector<8x8xf32>
    %11 = arith.addf %8, %10 : vector<8x8xf32>
    %cst_9 = arith.constant 0.000000e+00 : f32
    %12 = vector.broadcast %cst_9 : f32 to vector<2x8xf32>
    %cst_10 = arith.constant 0.000000e+00 : f32
    %13 = vector.broadcast %cst_10 : f32 to vector<2x8xf32>
    %14 = vector.extract_strided_slice %11 {offsets = [0, 0], sizes = [2, 8], strides = [1, 1]} : vector<8x8xf32> to vector<2x8xf32>
    %15 = arith.addf %13, %14 : vector<2x8xf32>
    %cst_11 = arith.constant 1.000000e+00 : f32
    %16 = vector.broadcast %cst_11 : f32 to vector<2x8xf32>
    %17 = arith.cmpf oge, %15, %16 : vector<2x8xf32>
    %18 = arith.extui %17 : vector<2x8xi1> to vector<2x8xi32>
    %19 = arith.sitofp %18 : vector<2x8xi32> to vector<2x8xf32>
    %20 = arith.addf %12, %19 : vector<2x8xf32>
    %cst_12 = arith.constant 0.000000e+00 : f32
    %21 = vector.broadcast %cst_12 : f32 to vector<2x8xf32>
    %22 = arith.select %17, %21, %15 : vector<2x8xi1>, vector<2x8xf32>
    %23 = vector.extract_strided_slice %11 {offsets = [2, 0], sizes = [2, 8], strides = [1, 1]} : vector<8x8xf32> to vector<2x8xf32>
    %24 = arith.addf %22, %23 : vector<2x8xf32>
    %cst_13 = arith.constant 1.000000e+00 : f32
    %25 = vector.broadcast %cst_13 : f32 to vector<2x8xf32>
    %26 = arith.cmpf oge, %24, %25 : vector<2x8xf32>
    %27 = arith.extui %26 : vector<2x8xi1> to vector<2x8xi32>
    %28 = arith.sitofp %27 : vector<2x8xi32> to vector<2x8xf32>
    %29 = arith.addf %20, %28 : vector<2x8xf32>
    %cst_14 = arith.constant 0.000000e+00 : f32
    %30 = vector.broadcast %cst_14 : f32 to vector<2x8xf32>
    %31 = arith.select %26, %30, %24 : vector<2x8xi1>, vector<2x8xf32>
    %32 = vector.extract_strided_slice %11 {offsets = [4, 0], sizes = [2, 8], strides = [1, 1]} : vector<8x8xf32> to vector<2x8xf32>
    %33 = arith.addf %31, %32 : vector<2x8xf32>
    %cst_15 = arith.constant 1.000000e+00 : f32
    %34 = vector.broadcast %cst_15 : f32 to vector<2x8xf32>
    %35 = arith.cmpf oge, %33, %34 : vector<2x8xf32>
    %36 = arith.extui %35 : vector<2x8xi1> to vector<2x8xi32>
    %37 = arith.sitofp %36 : vector<2x8xi32> to vector<2x8xf32>
    %38 = arith.addf %29, %37 : vector<2x8xf32>
    %cst_16 = arith.constant 0.000000e+00 : f32
    %39 = vector.broadcast %cst_16 : f32 to vector<2x8xf32>
    %40 = arith.select %35, %39, %33 : vector<2x8xi1>, vector<2x8xf32>
    %41 = vector.extract_strided_slice %11 {offsets = [6, 0], sizes = [2, 8], strides = [1, 1]} : vector<8x8xf32> to vector<2x8xf32>
    %42 = arith.addf %40, %41 : vector<2x8xf32>
    %cst_17 = arith.constant 1.000000e+00 : f32
    %43 = vector.broadcast %cst_17 : f32 to vector<2x8xf32>
    %44 = arith.cmpf oge, %42, %43 : vector<2x8xf32>
    %45 = arith.extui %44 : vector<2x8xi1> to vector<2x8xi32>
    %46 = arith.sitofp %45 : vector<2x8xi32> to vector<2x8xf32>
    %47 = arith.addf %38, %46 : vector<2x8xf32>
    %cst_18 = arith.constant 2.500000e-01 : f32
    %48 = vector.broadcast %cst_18 : f32 to vector<2x8xf32>
    %49 = arith.mulf %47, %48 : vector<2x8xf32>
    %c0_19 = arith.constant 0 : index
    %c0_20 = arith.constant 0 : index
    %50 = vector.load %arg5[%c0_19, %c0_20] : memref<2x8xf32, #tpu.memory_space<vmem>>, vector<2x8xf32>
    tpu.vector_store %arg5[%c0_19, %c0_20], %49 {strides = array<i32>} : memref<2x8xf32, #tpu.memory_space<vmem>>, vector<2x8xf32>,
    return
  }
  func.func @transform_0(%arg0: i32) -> (i32, i32) {
    %c0_i32 = arith.constant 0 : i32
    %c0_i32_0 = arith.constant 0 : i32
    %c0_i32_1 = arith.constant 0 : i32
    return %c0_i32, %c0_i32_0 : i32, i32
  }
  func.func @transform_1(%arg0: i32) -> (i32, i32) {
    %c0_i32 = arith.constant 0 : i32
    %c0_i32_0 = arith.constant 0 : i32
    %c0_i32_1 = arith.constant 0 : i32
    return %c0_i32, %c0_i32_0 : i32, i32
  }
  func.func @transform_2(%arg0: i32) -> (i32, i32) {
    %c0_i32 = arith.constant 0 : i32
    %c0_i32_0 = arith.constant 0 : i32
    %c0_i32_1 = arith.constant 0 : i32
    return %c0_i32, %c0_i32_0 : i32, i32
  }
  func.func @transform_3(%arg0: i32) -> (i32, i32) {
    %c0_i32 = arith.constant 0 : i32
    %c0_i32_0 = arith.constant 0 : i32
    %c0_i32_1 = arith.constant 0 : i32
    return %c0_i32, %c0_i32_0 : i32, i32
  }
  func.func @transform_4(%arg0: i32) -> (i32, i32) {
    %c0_i32 = arith.constant 0 : i32
    %c0_i32_0 = arith.constant 0 : i32
    %c0_i32_1 = arith.constant 0 : i32
    return %c0_i32, %c0_i32_0 : i32, i32
  }
}

</mosaic_0001>

<llo_original>
// kernel: spiking_conv_encoder.4
$region0: #{spiking_conv_encoder.4}
  #allocation0 [shape = 'u32[]', space=smem, size = 0x4, offset = 0x4, fixed_abs, tag = 'smem constant byte address 0x4 - core index']
  #allocation1 [shape = 'u32[144,128]{1,0:T(1,128)}', space=vmem, size = 0x12000, scoped, tag = 'internal scratch']
  #allocation2 [shape = 'f32[128,128]{1,0:T(8,128)}', space=vmem, size = 0x10000, scoped, tag = 'scratch operand']
  %s0 = inlined_call_operand.vmem [shape: f32[128,64], index: 0, kind: input, shape index: {}]
  %s1 = inlined_call_operand.vmem [shape: bf16[3,64,128], index: 1, kind: input, shape index: {}]
  %s2 = inlined_call_operand.vmem [shape: bf16[128,128], index: 2, kind: input, shape index: {}]
  %s3 = inlined_call_operand.vmem [shape: bf16[128,128], index: 3, kind: input, shape index: {}]
  %s4 = inlined_call_operand.vmem [shape: f32[1,8], index: 4, kind: input, shape index: {}]
  %s5 = inlined_call_operand.vmem [shape: f32[1,8], index: 5, kind: input, shape index: {}]
  %s6 = inlined_call_operand.vmem [shape: f32[128,8], index: 6, kind: input, shape index: {}]
  %s7 = inlined_call_operand.vmem [shape: f32[8,128], index: 7, kind: input, shape index: {}]
  %s8 = inlined_call_operand.vmem [shape: bf16[64,128], index: 8, kind: input, shape index: {}]
  %s9 = inlined_call_operand.vmem [shape: bf16[128,64], index: 9, kind: input, shape index: {}]
  %s10 = inlined_call_operand.vmem [shape: f32[64,64], index: 10, kind: output, shape index: {}]
  %s11 = sld [smem:[#allocation0]]
  $region50: #{spiking_conv_encoder.4} parent=0
    _
  %s13 = ssub.s32 1, %s11
  %s14 = scalar_select 0, %s13, %s11
  // Predicated region
  $region2: #{spiking_conv_encoder.4} parent=0 // pred_check
    _
  $region3: #{spiking_conv_encoder.4} parent=0 // pred_check_branch
    %16 = sbr.rel (0) target = $region5
  $region4: #{spiking_conv_encoder.4} parent=0 // pred_region
    _
  $region5: #{spiking_conv_encoder.4} parent=0 // pred_fallthru
    _
  // Predicated region
  $region6: #{spiking_conv_encoder.4} parent=0 // pred_check
    _
  $region7: #{spiking_conv_encoder.4} parent=0 // pred_check_branch
    %18 = sbr.rel (0) target = $region9
  $region8: #{spiking_conv_encoder.4} parent=0 // pred_region
    _
  $region9: #{spiking_conv_encoder.4} parent=0 // pred_fallthru
    _
  // Predicated region
  $region10: #{spiking_conv_encoder.4} parent=0 // pred_check
    _
  $region11: #{spiking_conv_encoder.4} parent=0 // pred_check_branch
    %20 = sbr.rel (0) target = $region13
  $region12: #{spiking_conv_encoder.4} parent=0 // pred_region
    _
  $region13: #{spiking_conv_encoder.4} parent=0 // pred_fallthru
    _
  // Predicated region
  $region14: #{spiking_conv_encoder.4} parent=0 // pred_check
    _
  $region15: #{spiking_conv_encoder.4} parent=0 // pred_check_branch
    %22 = sbr.rel (0) target = $region17
  $region16: #{spiking_conv_encoder.4} parent=0 // pred_region
    _
  $region17: #{spiking_conv_encoder.4} parent=0 // pred_fallthru
    _
  // Predicated region
  $region18: #{spiking_conv_encoder.4} parent=0 // pred_check
    _
  $region19: #{spiking_conv_encoder.4} parent=0 // pred_check_branch
    %24 = sbr.rel (0) target = $region21
  $region20: #{spiking_conv_encoder.4} parent=0 // pred_region
    _
  $region21: #{spiking_conv_encoder.4} parent=0 // pred_fallthru
    _
  // Predicated region
  $region22: #{spiking_conv_encoder.4} parent=0 // pred_check
    _
  $region23: #{spiking_conv_encoder.4} parent=0 // pred_check_branch
    %26 = sbr.rel (0) target = $region25
  $region24: #{spiking_conv_encoder.4} parent=0 // pred_region
    _
  $region25: #{spiking_conv_encoder.4} parent=0 // pred_fallthru
    _
  // Predicated region
  $region26: #{spiking_conv_encoder.4} parent=0 // pred_check
    _
  $region27: #{spiking_conv_encoder.4} parent=0 // pred_check_branch
    %28 = sbr.rel (0) target = $region29
  $region28: #{spiking_conv_encoder.4} parent=0 // pred_region
    _
  $region29: #{spiking_conv_encoder.4} parent=0 // pred_fallthru
    _
  // Predicated region
  $region30: #{spiking_conv_encoder.4} parent=0 // pred_check
    _
  $region31: #{spiking_conv_encoder.4} parent=0 // pred_check_branch
    %30 = sbr.rel (0) target = $region33
  $region32: #{spiking_conv_encoder.4} parent=0 // pred_region
    _
  $region33: #{spiking_conv_encoder.4} parent=0 // pred_fallthru
    _
  // Predicated region
  $region34: #{spiking_conv_encoder.4} parent=0 // pred_check
    _
  $region35: #{spiking_conv_encoder.4} parent=0 // pred_check_branch
    %32 = sbr.rel (0) target = $region37
  $region36: #{spiking_conv_encoder.4} parent=0 // pred_region
    _
  $region37: #{spiking_conv_encoder.4} parent=0 // pred_fallthru
    _
  // Predicated region
  $region38: #{spiking_conv_encoder.4} parent=0 // pred_check
    _
  $region39: #{spiking_conv_encoder.4} parent=0 // pred_check_branch
    %34 = sbr.rel (0) target = $region41
  $region40: #{spiking_conv_encoder.4} parent=0 // pred_region
    _
  $region41: #{spiking_conv_encoder.4} parent=0 // pred_fallthru
    _
  %v36 = vld [vmem:[%s0] sm:$0xff]
  %v37 = vld [vmem:[%s0 + $0x8] sm:$0xff]
  %v38 = vld [vmem:[%s0 + $0x10] sm:$0xff]
  %v39 = vld [vmem:[%s0 + $0x18] sm:$0xff]
  %v40 = vld [vmem:[%s0 + $0x20] sm:$0xff]
  %v41 = vld [vmem:[%s0 + $0x28] sm:$0xff]
  %v42 = vld [vmem:[%s0 + $0x30] sm:$0xff]
  %v43 = vld [vmem:[%s0 + $0x38] sm:$0xff]
  %v44 = vld [vmem:[%s0 + $0x40] sm:$0xff]
  %v45 = vld [vmem:[%s0 + $0x48] sm:$0xff]
  %v46 = vld [vmem:[%s0 + $0x50] sm:$0xff]
  %v47 = vld [vmem:[%s0 + $0x58] sm:$0xff]
  %v48 = vld [vmem:[%s0 + $0x60] sm:$0xff]
  %v49 = vld [vmem:[%s0 + $0x68] sm:$0xff]
  %v50 = vld [vmem:[%s0 + $0x70] sm:$0xff]
  %v51 = vld [vmem:[%s0 + $0x78] sm:$0xff]
  %v52 = vpack.c.bf16 %v37, %v36
  %v53 = vpack.c.bf16 %v39, %v38
  %v54 = vpack.c.bf16 %v41, %v40
  %v55 = vpack.c.bf16 %v43, %v42
  %v56 = vpack.c.bf16 %v45, %v44
  %v57 = vpack.c.bf16 %v47, %v46
  %v58 = vpack.c.bf16 %v49, %v48
  %v59 = vpack.c.bf16 %v51, %v50
  %v60 = vld [vmem:[%s2] sm:$0xf]
  %v61 = vld [vmem:[%s2 + $0x4] sm:$0xf]
  %v62 = vld [vmem:[%s2 + $0x8] sm:$0xf]
  %v63 = vld [vmem:[%s2 + $0xc] sm:$0xf]
  %v64 = vld [vmem:[%s2 + $0x10] sm:$0xf]
  %v65 = vld [vmem:[%s2 + $0x14] sm:$0xf]
  %v66 = vld [vmem:[%s2 + $0x18] sm:$0xf]
  %v67 = vld [vmem:[%s2 + $0x1c] sm:$0xf]
  %v68 = vld [vmem:[%s2 + $0x20] sm:$0xf]
  %v69 = vld [vmem:[%s2 + $0x24] sm:$0xf]
  %v70 = vld [vmem:[%s2 + $0x28] sm:$0xf]
  %v71 = vld [vmem:[%s2 + $0x2c] sm:$0xf]
  %v72 = vld [vmem:[%s2 + $0x30] sm:$0xf]
  %v73 = vld [vmem:[%s2 + $0x34] sm:$0xf]
  %v74 = vld [vmem:[%s2 + $0x38] sm:$0xf]
  %v75 = vld [vmem:[%s2 + $0x3c] sm:$0xf]
  %v92 = vunpack.c.l.b16 %v60
  %v93 = vunpack.c.l.b16 %v61
  %v94 = vunpack.c.l.b16 %v62
  %v95 = vunpack.c.l.b16 %v63
  %v96 = vunpack.c.l.b16 %v64
  %v97 = vunpack.c.l.b16 %v65
  %v98 = vunpack.c.l.b16 %v66
  %v99 = vunpack.c.l.b16 %v67
  %v100 = vunpack.c.l.b16 %v68
  %v101 = vunpack.c.l.b16 %v69
  %v102 = vunpack.c.l.b16 %v70
  %v103 = vunpack.c.l.b16 %v71
  %v104 = vunpack.c.l.b16 %v72
  %v105 = vunpack.c.l.b16 %v73
  %v106 = vunpack.c.l.b16 %v74
  %v107 = vunpack.c.l.b16 %v75
  %v108 = vpack.c.b16 %v93, %v92
  %v109 = vpack.c.b16 %v95, %v94
  %v110 = vpack.c.b16 %v97, %v96
  %v111 = vpack.c.b16 %v99, %v98
  %v112 = vpack.c.b16 %v101, %v100
  %v113 = vpack.c.b16 %v103, %v102
  %v114 = vpack.c.b16 %v105, %v104
  %v115 = vpack.c.b16 %v107, %v106
  %124 = vmatprep.subr.bf16.mxu0 0
  %125 = vmatpush1.bf16.msra.mxu0 %v52
  %126 = vmatprep.subr.bf16.mxu0 0
  %127 = vmatpush1.bf16.msra.mxu0 %v53
  %128 = vmatprep.subr.bf16.mxu0 0
  %129 = vmatpush1.bf16.msra.mxu0 %v54
  %130 = vmatprep.subr.bf16.mxu0 0
  %131 = vmatpush1.bf16.msra.mxu0 %v55
  %132 = vmatprep.subr.bf16.mxu0 0
  %133 = vmatpush1.bf16.msra.mxu0 %v56
  %134 = vmatprep.subr.bf16.mxu0 0
  %135 = vmatpush1.bf16.msra.mxu0 %v57
  %136 = vmatprep.subr.bf16.mxu0 0
  %137 = vmatpush1.bf16.msra.mxu0 %v58
  %138 = vmatprep.subr.bf16.mxu0 0
  %139 = vmatpush1.bf16.msra.mxu0 %v59
  %140 = vmatprep.subr.bf16.mxu0 0
  %141 = vmatpush1.bf16.msra.mxu0 0
  %142 = vmatprep.subr.bf16.mxu0 0
  %143 = vmatpush1.bf16.msra.mxu0 0
  %144 = vmatprep.subr.bf16.mxu0 0
  %145 = vmatpush1.bf16.msra.mxu0 0
  %146 = vmatprep.subr.bf16.mxu0 0
  %147 = vmatpush1.bf16.msra.mxu0 0
  %148 = vmatprep.subr.bf16.mxu0 0
  %149 = vmatpush1.bf16.msra.mxu0 0
  %150 = vmatprep.subr.bf16.mxu0 0
  %151 = vmatpush1.bf16.msra.mxu0 0
  %152 = vmatprep.subr.bf16.mxu0 0
  %153 = vmatpush1.bf16.msra.mxu0 0
  %154 = vmatprep.subr.bf16.mxu0 0
  %155 = vmatpush1.bf16.msra.mxu0 0
  %156 = vmatprep.mubr.bf16.mxu0 0
  %157 = vmatmul.mubr.bf16.gmra.mrb[0].mxu0 %v108
  %v158 = vpop.f32.mrb[0].mxu0
  %v159 = vadd.f32 0.0, %v158
  %v160 = vpop.f32.mrb[0].mxu0
  %v161 = vpop.f32.mrb[0].mxu0
  %v162 = vadd.f32 0.0, %v161
  %v163 = vpop.f32.mrb[0].mxu0
  %164 = vmatprep.mubr.bf16.mxu0 0
  %165 = vmatmul.mubr.bf16.gmra.mrb[0].mxu0 %v109
  %v166 = vpop.f32.mrb[0].mxu0
  %v167 = vadd.f32 0.0, %v166
  %v168 = vpop.f32.mrb[0].mxu0
  %v169 = vpop.f32.mrb[0].mxu0
  %v170 = vadd.f32 0.0, %v169
  %v171 = vpop.f32.mrb[0].mxu0
  %172 = vmatprep.mubr.bf16.mxu0 0
  %173 = vmatmul.mubr.bf16.gmra.mrb[0].mxu0 %v110
  %v174 = vpop.f32.mrb[0].mxu0
  %v175 = vadd.f32 0.0, %v174
  %v176 = vpop.f32.mrb[0].mxu0
  %v177 = vpop.f32.mrb[0].mxu0
  %v178 = vadd.f32 0.0, %v177
  %v179 = vpop.f32.mrb[0].mxu0
  %180 = vmatprep.mubr.bf16.mxu0 0
  %181 = vmatmul.mubr.bf16.gmra.mrb[0].mxu0 %v111
  %v182 = vpop.f32.mrb[0].mxu0
  %v183 = vadd.f32 0.0, %v182
  %v184 = vpop.f32.mrb[0].mxu0
  %v185 = vpop.f32.mrb[0].mxu0
  %v186 = vadd.f32 0.0, %v185
  %v187 = vpop.f32.mrb[0].mxu0
  %188 = vmatprep.mubr.bf16.mxu0 0
  %189 = vmatmul.mubr.bf16.gmra.mrb[0].mxu0 %v112
  %v190 = vpop.f32.mrb[0].mxu0
  %v191 = vadd.f32 0.0, %v190
  %v192 = vpop.f32.mrb[0].mxu0
  %v193 = vpop.f32.mrb[0].mxu0
  %v194 = vadd.f32 0.0, %v193
  %v195 = vpop.f32.mrb[0].mxu0
  %196 = vmatprep.mubr.bf16.mxu0 0
  %197 = vmatmul.mubr.bf16.gmra.mrb[0].mxu0 %v113
  %v198 = vpop.f32.mrb[0].mxu0
  %v199 = vadd.f32 0.0, %v198
  %v200 = vpop.f32.mrb[0].mxu0
  %v201 = vpop.f32.mrb[0].mxu0
  %v202 = vadd.f32 0.0, %v201
  %v203 = vpop.f32.mrb[0].mxu0
  %204 = vmatprep.mubr.bf16.mxu0 0
  %205 = vmatmul.mubr.bf16.gmra.mrb[0].mxu0 %v114
  %v206 = vpop.f32.mrb[0].mxu0
  %v207 = vadd.f32 0.0, %v206
  %v208 = vpop.f32.mrb[0].mxu0
  %v209 = vpop.f32.mrb[0].mxu0
  %v210 = vadd.f32 0.0, %v209
  %v211 = vpop.f32.mrb[0].mxu0
  %212 = vmatprep.mubr.bf16.mxu0 0
  %213 = vmatmul.mubr.bf16.gmra.mrb[0].mxu0 %v115
  %v214 = vpop.f32.mrb[0].mxu0
  %v215 = vadd.f32 0.0, %v214
  %v216 = vpop.f32.mrb[0].mxu0
  %v217 = vpop.f32.mrb[0].mxu0
  %v218 = vadd.f32 0.0, %v217
  %v219 = vpop.f32.mrb[0].mxu0
  %220 = vdwg.mxu0
  %v221 = vpack.c.bf16 %v162, %v159
  %v222 = vpack.c.bf16 %v170, %v167
  %v223 = vpack.c.bf16 %v178, %v175
  %v224 = vpack.c.bf16 %v186, %v183
  %v225 = vpack.c.bf16 %v194, %v191
  %v226 = vpack.c.bf16 %v202, %v199
  %v227 = vpack.c.bf16 %v210, %v207
  %v228 = vpack.c.bf16 %v218, %v215
  %v229 = vld [vmem:[%s3] sm:$0xf]
  %v230 = vld [vmem:[%s3 + $0x4] sm:$0xf]
  %v231 = vld [vmem:[%s3 + $0x8] sm:$0xf]
  %v232 = vld [vmem:[%s3 + $0xc] sm:$0xf]
  %v233 = vld [vmem:[%s3 + $0x10] sm:$0xf]
  %v234 = vld [vmem:[%s3 + $0x14] sm:$0xf]
  %v235 = vld [vmem:[%s3 + $0x18] sm:$0xf]
  %v236 = vld [vmem:[%s3 + $0x1c] sm:$0xf]
  %v237 = vld [vmem:[%s3 + $0x20] sm:$0xf]
  %v238 = vld [vmem:[%s3 + $0x24] sm:$0xf]
  %v239 = vld [vmem:[%s3 + $0x28] sm:$0xf]
  %v240 = vld [vmem:[%s3 + $0x2c] sm:$0xf]
  %v241 = vld [vmem:[%s3 + $0x30] sm:$0xf]
  %v242 = vld [vmem:[%s3 + $0x34] sm:$0xf]
  %v243 = vld [vmem:[%s3 + $0x38] sm:$0xf]
  %v244 = vld [vmem:[%s3 + $0x3c] sm:$0xf]
  %v261 = vunpack.c.l.b16 %v229
  %v262 = vunpack.c.l.b16 %v230
  %v263 = vunpack.c.l.b16 %v231
  %v264 = vunpack.c.l.b16 %v232
  %v265 = vunpack.c.l.b16 %v233
  %v266 = vunpack.c.l.b16 %v234
  %v267 = vunpack.c.l.b16 %v235
  %v268 = vunpack.c.l.b16 %v236
  %v269 = vunpack.c.l.b16 %v237
  %v270 = vunpack.c.l.b16 %v238
  %v271 = vunpack.c.l.b16 %v239
  %v272 = vunpack.c.l.b16 %v240
  %v273 = vunpack.c.l.b16 %v241
  %v274 = vunpack.c.l.b16 %v242
  %v275 = vunpack.c.l.b16 %v243
  %v276 = vunpack.c.l.b16 %v244
  %v277 = vpack.c.b16 %v262, %v261
  %v278 = vpack.c.b16 %v264, %v263
  %v279 = vpack.c.b16 %v266, %v265
  %v280 = vpack.c.b16 %v268, %v267
  %v281 = vpack.c.b16 %v270, %v269
  %v282 = vpack.c.b16 %v272, %v271
  %v283 = vpack.c.b16 %v274, %v273
  %v284 = vpack.c.b16 %v276, %v275
  %293 = vmatprep.subr.bf16.mxu0 0
  %294 = vmatpush1.bf16.msra.mxu0 %v52
  %295 = vmatprep.subr.bf16.mxu0 0
  %296 = vmatpush1.bf16.msra.mxu0 %v53
  %297 = vmatprep.subr.bf16.mxu0 0
  %298 = vmatpush1.bf16.msra.mxu0 %v54
  %299 = vmatprep.subr.bf16.mxu0 0
  %300 = vmatpush1.bf16.msra.mxu0 %v55
  %301 = vmatprep.subr.bf16.mxu0 0
  %302 = vmatpush1.bf16.msra.mxu0 %v56
  %303 = vmatprep.subr.bf16.mxu0 0
  %304 = vmatpush1.bf16.msra.mxu0 %v57
  %305 = vmatprep.subr.bf16.mxu0 0
  %306 = vmatpush1.bf16.msra.mxu0 %v58
  %307 = vmatprep.subr.bf16.mxu0 0
  %308 = vmatpush1.bf16.msra.mxu0 %v59
  %309 = vmatprep.subr.bf16.mxu0 0
  %310 = vmatpush1.bf16.msra.mxu0 0
  %311 = vmatprep.subr.bf16.mxu0 0
  %312 = vmatpush1.bf16.msra.mxu0 0
  %313 = vmatprep.subr.bf16.mxu0 0
  %314 = vmatpush1.bf16.msra.mxu0 0
  %315 = vmatprep.subr.bf16.mxu0 0
  %316 = vmatpush1.bf16.msra.mxu0 0
  %317 = vmatprep.subr.bf16.mxu0 0
  %318 = vmatpush1.bf16.msra.mxu0 0
  %319 = vmatprep.subr.bf16.mxu0 0
  %320 = vmatpush1.bf16.msra.mxu0 0
  %321 = vmatprep.subr.bf16.mxu0 0
  %322 = vmatpush1.bf16.msra.mxu0 0
  %323 = vmatprep.subr.bf16.mxu0 0
  %324 = vmatpush1.bf16.msra.mxu0 0
  %325 = vmatprep.mubr.bf16.mxu0 0
  %326 = vmatmul.mubr.bf16.gmra.mrb[0].mxu0 %v277
  %v327 = vpop.f32.mrb[0].mxu0
  %v328 = vadd.f32 0.0, %v327
  %v329 = vpop.f32.mrb[0].mxu0
  %v330 = vpop.f32.mrb[0].mxu0
  %v331 = vadd.f32 0.0, %v330
  %v332 = vpop.f32.mrb[0].mxu0
  %333 = vmatprep.mubr.bf16.mxu0 0
  %334 = vmatmul.mubr.bf16.gmra.mrb[0].mxu0 %v278
  %v335 = vpop.f32.mrb[0].mxu0
  %v336 = vadd.f32 0.0, %v335
  %v337 = vpop.f32.mrb[0].mxu0
  %v338 = vpop.f32.mrb[0].mxu0
  %v339 = vadd.f32 0.0, %v338
  %v340 = vpop.f32.mrb[0].mxu0
  %341 = vmatprep.mubr.bf16.mxu0 0
  %342 = vmatmul.mubr.bf16.gmra.mrb[0].mxu0 %v279
  %v343 = vpop.f32.mrb[0].mxu0
  %v344 = vadd.f32 0.0, %v343
  %v345 = vpop.f32.mrb[0].mxu0
  %v346 = vpop.f32.mrb[0].mxu0
  %v347 = vadd.f32 0.0, %v346
  %v348 = vpop.f32.mrb[0].mxu0
  %349 = vmatprep.mubr.bf16.mxu0 0
  %350 = vmatmul.mubr.bf16.gmra.mrb[0].mxu0 %v280
  %v351 = vpop.f32.mrb[0].mxu0
  %v352 = vadd.f32 0.0, %v351
  %v353 = vpop.f32.mrb[0].mxu0
  %v354 = vpop.f32.mrb[0].mxu0
  %v355 = vadd.f32 0.0, %v354
  %v356 = vpop.f32.mrb[0].mxu0
  %357 = vmatprep.mubr.bf16.mxu0 0
  %358 = vmatmul.mubr.bf16.gmra.mrb[0].mxu0 %v281
  %v359 = vpop.f32.mrb[0].mxu0
  %v360 = vadd.f32 0.0, %v359
  %v361 = vpop.f32.mrb[0].mxu0
  %v362 = vpop.f32.mrb[0].mxu0
  %v363 = vadd.f32 0.0, %v362
  %v364 = vpop.f32.mrb[0].mxu0
  %365 = vmatprep.mubr.bf16.mxu0 0
  %366 = vmatmul.mubr.bf16.gmra.mrb[0].mxu0 %v282
  %v367 = vpop.f32.mrb[0].mxu0
  %v368 = vadd.f32 0.0, %v367
  %v369 = vpop.f32.mrb[0].mxu0
  %v370 = vpop.f32.mrb[0].mxu0
  %v371 = vadd.f32 0.0, %v370
  %v372 = vpop.f32.mrb[0].mxu0
  %373 = vmatprep.mubr.bf16.mxu0 0
  %374 = vmatmul.mubr.bf16.gmra.mrb[0].mxu0 %v283
  %v375 = vpop.f32.mrb[0].mxu0
  %v376 = vadd.f32 0.0, %v375
  %v377 = vpop.f32.mrb[0].mxu0
  %v378 = vpop.f32.mrb[0].mxu0
  %v379 = vadd.f32 0.0, %v378
  %v380 = vpop.f32.mrb[0].mxu0
  %381 = vmatprep.mubr.bf16.mxu0 0
  %382 = vmatmul.mubr.bf16.gmra.mrb[0].mxu0 %v284
  %v383 = vpop.f32.mrb[0].mxu0
  %v384 = vadd.f32 0.0, %v383
  %v385 = vpop.f32.mrb[0].mxu0
  %v386 = vpop.f32.mrb[0].mxu0
  %v387 = vadd.f32 0.0, %v386
  %v388 = vpop.f32.mrb[0].mxu0
  %389 = vdwg.mxu0
  %v390 = vpack.c.bf16 %v331, %v328
  %v391 = vpack.c.bf16 %v339, %v336
  %v392 = vpack.c.bf16 %v347, %v344
  %v393 = vpack.c.bf16 %v355, %v352
  %v394 = vpack.c.bf16 %v363, %v360
  %v395 = vpack.c.bf16 %v371, %v368
  %v396 = vpack.c.bf16 %v379, %v376
  %v397 = vpack.c.bf16 %v387, %v384
  %s398 = scalar_lea.vmem %s1, 32
  %v399 = vld [vmem:[%s398] sm:$0xf]
  %v400 = vld [vmem:[%s398 + $0x4] sm:$0xf]
  %v401 = vld [vmem:[%s398 + $0x8] sm:$0xf]
  %v402 = vld [vmem:[%s398 + $0xc] sm:$0xf]
  %v403 = vld [vmem:[%s398 + $0x10] sm:$0xf]
  %v404 = vld [vmem:[%s398 + $0x14] sm:$0xf]
  %v405 = vld [vmem:[%s398 + $0x18] sm:$0xf]
  %v406 = vld [vmem:[%s398 + $0x1c] sm:$0xf]
  %v407 = vld [vmem:[%s1] sm:$0xf]
  %v408 = vld [vmem:[%s1 + $0x4] sm:$0xf]
  %v409 = vld [vmem:[%s1 + $0x8] sm:$0xf]
  %v410 = vld [vmem:[%s1 + $0xc] sm:$0xf]
  %v411 = vld [vmem:[%s1 + $0x10] sm:$0xf]
  %v412 = vld [vmem:[%s1 + $0x14] sm:$0xf]
  %v413 = vld [vmem:[%s1 + $0x18] sm:$0xf]
  %v414 = vld [vmem:[%s1 + $0x1c] sm:$0xf]
  %v423 = vunpack.c.l.b16 %v407
  %v424 = vunpack.c.l.b16 %v408
  %v425 = vunpack.c.l.b16 %v409
  %v426 = vunpack.c.l.b16 %v410
  %v427 = vunpack.c.l.b16 %v411
  %v428 = vunpack.c.l.b16 %v412
  %v429 = vunpack.c.l.b16 %v413
  %v430 = vunpack.c.l.b16 %v414
  %v431 = vpack.c.b16 %v424, %v423
  %v432 = vpack.c.b16 %v426, %v425
  %v433 = vpack.c.b16 %v428, %v427
  %v434 = vpack.c.b16 %v430, %v429
  %vm439 = vcmask 523264
  %v441 = vsel %vm439, %v221, 0
  %v444 = vsel %vm439, %v222, 0
  %v447 = vsel %vm439, %v223, 0
  %v450 = vsel %vm439, %v224, 0
  %v453 = vsel %vm439, %v225, 0
  %v456 = vsel %vm439, %v226, 0
  %v459 = vsel %vm439, %v227, 0
  %v462 = vsel %vm439, %v228, 0
  %464 = vmatprep.subr.bf16.mxu0 0
  %465 = vmatpush1.bf16.msra.mxu0 %v431
  %466 = vmatprep.subr.bf16.mxu0 0
  %467 = vmatpush1.bf16.msra.mxu0 %v432
  %468 = vmatprep.subr.bf16.mxu0 0
  %469 = vmatpush1.bf16.msra.mxu0 %v433
  %470 = vmatprep.subr.bf16.mxu0 0
  %471 = vmatpush1.bf16.msra.mxu0 %v434
  %472 = vmatprep.subr.bf16.mxu0 0
  %473 = vmatpush1.bf16.msra.mxu0 0
  %474 = vmatprep.subr.bf16.mxu0 0
  %475 = vmatpush1.bf16.msra.mxu0 0
  %476 = vmatprep.subr.bf16.mxu0 0
  %477 = vmatpush1.bf16.msra.mxu0 0
  %478 = vmatprep.subr.bf16.mxu0 0
  %479 = vmatpush1.bf16.msra.mxu0 0
  %480 = vmatprep.subr.bf16.mxu0 0
  %481 = vmatpush1.bf16.msra.mxu0 0
  %482 = vmatprep.subr.bf16.mxu0 0
  %483 = vmatpush1.bf16.msra.mxu0 0
  %484 = vmatprep.subr.bf16.mxu0 0
  %485 = vmatpush1.bf16.msra.mxu0 0
  %486 = vmatprep.subr.bf16.mxu0 0
  %487 = vmatpush1.bf16.msra.mxu0 0
  %488 = vmatprep.subr.bf16.mxu0 0
  %489 = vmatpush1.bf16.msra.mxu0 0
  %490 = vmatprep.subr.bf16.mxu0 0
  %491 = vmatpush1.bf16.msra.mxu0 0
  %492 = vmatprep.subr.bf16.mxu0 0
  %493 = vmatpush1.bf16.msra.mxu0 0
  %494 = vmatprep.subr.bf16.mxu0 0
  %495 = vmatpush1.bf16.msra.mxu0 0
  %496 = vmatprep.mubr.bf16.mxu0 0
  %497 = vmatmul.mubr.bf16.gmra.mrb[0].mxu0 %v441
  %v498 = vpop.f32.mrb[0].mxu0
  %v499 = vadd.f32 0.0, %v498
  %v500 = vpop.f32.mrb[0].mxu0
  %v501 = vpop.f32.mrb[0].mxu0
  %v502 = vadd.f32 0.0, %v501
  %v503 = vpop.f32.mrb[0].mxu0
  %504 = vmatprep.mubr.bf16.mxu0 0
  %505 = vmatmul.mubr.bf16.gmra.mrb[0].mxu0 %v444
  %v506 = vpop.f32.mrb[0].mxu0
  %v507 = vadd.f32 0.0, %v506
  %v508 = vpop.f32.mrb[0].mxu0
  %v509 = vpop.f32.mrb[0].mxu0
  %v510 = vadd.f32 0.0, %v509
  %v511 = vpop.f32.mrb[0].mxu0
  %512 = vmatprep.mubr.bf16.mxu0 0
  %513 = vmatmul.mubr.bf16.gmra.mrb[0].mxu0 %v447
  %v514 = vpop.f32.mrb[0].mxu0
  %v515 = vadd.f32 0.0, %v514
  %v516 = vpop.f32.mrb[0].mxu0
  %v517 = vpop.f32.mrb[0].mxu0
  %v518 = vadd.f32 0.0, %v517
  %v519 = vpop.f32.mrb[0].mxu0
  %520 = vmatprep.mubr.bf16.mxu0 0
  %521 = vmatmul.mubr.bf16.gmra.mrb[0].mxu0 %v450
  %v522 = vpop.f32.mrb[0].mxu0
  %v523 = vadd.f32 0.0, %v522
  %v524 = vpop.f32.mrb[0].mxu0
  %v525 = vpop.f32.mrb[0].mxu0
  %v526 = vadd.f32 0.0, %v525
  %v527 = vpop.f32.mrb[0].mxu0
  %528 = vmatprep.mubr.bf16.mxu0 0
  %529 = vmatmul.mubr.bf16.gmra.mrb[0].mxu0 %v453
  %v530 = vpop.f32.mrb[0].mxu0
  %v531 = vadd.f32 0.0, %v530
  %v532 = vpop.f32.mrb[0].mxu0
  %v533 = vpop.f32.mrb[0].mxu0
  %v534 = vadd.f32 0.0, %v533
  %v535 = vpop.f32.mrb[0].mxu0
  %536 = vmatprep.mubr.bf16.mxu0 0
  %537 = vmatmul.mubr.bf16.gmra.mrb[0].mxu0 %v456
  %v538 = vpop.f32.mrb[0].mxu0
  %v539 = vadd.f32 0.0, %v538
  %v540 = vpop.f32.mrb[0].mxu0
  %v541 = vpop.f32.mrb[0].mxu0
  %v542 = vadd.f32 0.0, %v541
  %v543 = vpop.f32.mrb[0].mxu0
  %544 = vmatprep.mubr.bf16.mxu0 0
  %545 = vmatmul.mubr.bf16.gmra.mrb[0].mxu0 %v459
  %v546 = vpop.f32.mrb[0].mxu0
  %v547 = vadd.f32 0.0, %v546
  %v548 = vpop.f32.mrb[0].mxu0
  %v549 = vpop.f32.mrb[0].mxu0
  %v550 = vadd.f32 0.0, %v549
  %v551 = vpop.f32.mrb[0].mxu0
  %552 = vmatprep.mubr.bf16.mxu0 0
  %553 = vmatmul.mubr.bf16.gmra.mrb[0].mxu0 %v462
  %v554 = vpop.f32.mrb[0].mxu0
  %v555 = vadd.f32 0.0, %v554
  %v556 = vpop.f32.mrb[0].mxu0
  %v557 = vpop.f32.mrb[0].mxu0
  %v558 = vadd.f32 0.0, %v557
  %v559 = vpop.f32.mrb[0].mxu0
  %560 = vdwg.mxu0
  %v569 = vunpack.c.l.b16 %v399
  %v570 = vunpack.c.l.b16 %v400
  %v571 = vunpack.c.l.b16 %v401
  %v572 = vunpack.c.l.b16 %v402
  %v573 = vunpack.c.l.b16 %v403
  %v574 = vunpack.c.l.b16 %v404
  %v575 = vunpack.c.l.b16 %v405
  %v576 = vunpack.c.l.b16 %v406
  %v577 = vpack.c.b16 %v570, %v569
  %v578 = vpack.c.b16 %v572, %v571
  %v579 = vpack.c.b16 %v574, %v573
  %v580 = vpack.c.b16 %v576, %v575
  %v586 = vsel %vm439, %v52, 0
  %v589 = vsel %vm439, %v53, 0
  %v592 = vsel %vm439, %v54, 0
  %v595 = vsel %vm439, %v55, 0
  %v598 = vsel %vm439, %v56, 0
  %v601 = vsel %vm439, %v57, 0
  %v604 = vsel %vm439, %v58, 0
  %v607 = vsel %vm439, %v59, 0
  %609 = vmatprep.subr.bf16.mxu0 0
  %610 = vmatpush1.bf16.msra.mxu0 %v577
  %611 = vmatprep.subr.bf16.mxu0 0
  %612 = vmatpush1.bf16.msra.mxu0 %v578
  %613 = vmatprep.subr.bf16.mxu0 0
  %614 = vmatpush1.bf16.msra.mxu0 %v579
  %615 = vmatprep.subr.bf16.mxu0 0
  %616 = vmatpush1.bf16.msra.mxu0 %v580
  %617 = vmatprep.subr.bf16.mxu0 0
  %618 = vmatpush1.bf16.msra.mxu0 0
  %619 = vmatprep.subr.bf16.mxu0 0
  %620 = vmatpush1.bf16.msra.mxu0 0
  %621 = vmatprep.subr.bf16.mxu0 0
  %622 = vmatpush1.bf16.msra.mxu0 0
  %623 = vmatprep.subr.bf16.mxu0 0
  %624 = vmatpush1.bf16.msra.mxu0 0
  %625 = vmatprep.subr.bf16.mxu0 0
  %626 = vmatpush1.bf16.msra.mxu0 0
  %627 = vmatprep.subr.bf16.mxu0 0
  %628 = vmatpush1.bf16.msra.mxu0 0
  %629 = vmatprep.subr.bf16.mxu0 0
  %630 = vmatpush1.bf16.msra.mxu0 0
  %631 = vmatprep.subr.bf16.mxu0 0
  %632 = vmatpush1.bf16.msra.mxu0 0
  %633 = vmatprep.subr.bf16.mxu0 0
  %634 = vmatpush1.bf16.msra.mxu0 0
  %635 = vmatprep.subr.bf16.mxu0 0
  %636 = vmatpush1.bf16.msra.mxu0 0
  %637 = vmatprep.subr.bf16.mxu0 0
  %638 = vmatpush1.bf16.msra.mxu0 0
  %639 = vmatprep.subr.bf16.mxu0 0
  %640 = vmatpush1.bf16.msra.mxu0 0
  %641 = vmatprep.mubr.bf16.mxu0 0
  %642 = vmatmul.mubr.bf16.gmra.mrb[0].mxu0 %v586
  %v643 = vpop.f32.mrb[0].mxu0
  %v644 = vadd.f32 %v499, %v643
  %v645 = vpop.f32.mrb[0].mxu0
  %v646 = vpop.f32.mrb[0].mxu0
  %v647 = vadd.f32 %v502, %v646
  %v648 = vpop.f32.mrb[0].mxu0
  %649 = vmatprep.mubr.bf16.mxu0 0
  %650 = vmatmul.mubr.bf16.gmra.mrb[0].mxu0 %v589
  %v651 = vpop.f32.mrb[0].mxu0
  %v652 = vadd.f32 %v507, %v651
  %v653 = vpop.f32.mrb[0].mxu0
  %v654 = vpop.f32.mrb[0].mxu0
  %v655 = vadd.f32 %v510, %v654
  %v656 = vpop.f32.mrb[0].mxu0
  %657 = vmatprep.mubr.bf16.mxu0 0
  %658 = vmatmul.mubr.bf16.gmra.mrb[0].mxu0 %v592
  %v659 = vpop.f32.mrb[0].mxu0
  %v660 = vadd.f32 %v515, %v659
  %v661 = vpop.f32.mrb[0].mxu0
  %v662 = vpop.f32.mrb[0].mxu0
  %v663 = vadd.f32 %v518, %v662
  %v664 = vpop.f32.mrb[0].mxu0
  %665 = vmatprep.mubr.bf16.mxu0 0
  %666 = vmatmul.mubr.bf16.gmra.mrb[0].mxu0 %v595
  %v667 = vpop.f32.mrb[0].mxu0
  %v668 = vadd.f32 %v523, %v667
  %v669 = vpop.f32.mrb[0].mxu0
  %v670 = vpop.f32.mrb[0].mxu0
  %v671 = vadd.f32 %v526, %v670
  %v672 = vpop.f32.mrb[0].mxu0
  %673 = vmatprep.mubr.bf16.mxu0 0
  %674 = vmatmul.mubr.bf16.gmra.mrb[0].mxu0 %v598
  %v675 = vpop.f32.mrb[0].mxu0
  %v676 = vadd.f32 %v531, %v675
  %v677 = vpop.f32.mrb[0].mxu0
  %v678 = vpop.f32.mrb[0].mxu0
  %v679 = vadd.f32 %v534, %v678
  %v680 = vpop.f32.mrb[0].mxu0
  %681 = vmatprep.mubr.bf16.mxu0 0
  %682 = vmatmul.mubr.bf16.gmra.mrb[0].mxu0 %v601
  %v683 = vpop.f32.mrb[0].mxu0
  %v684 = vadd.f32 %v539, %v683
  %v685 = vpop.f32.mrb[0].mxu0
  %v686 = vpop.f32.mrb[0].mxu0
  %v687 = vadd.f32 %v542, %v686
  %v688 = vpop.f32.mrb[0].mxu0
  %689 = vmatprep.mubr.bf16.mxu0 0
  %690 = vmatmul.mubr.bf16.gmra.mrb[0].mxu0 %v604
  %v691 = vpop.f32.mrb[0].mxu0
  %v692 = vadd.f32 %v547, %v691
  %v693 = vpop.f32.mrb[0].mxu0
  %v694 = vpop.f32.mrb[0].mxu0
  %v695 = vadd.f32 %v550, %v694
  %v696 = vpop.f32.mrb[0].mxu0
  %697 = vmatprep.mubr.bf16.mxu0 0
  %698 = vmatmul.mubr.bf16.gmra.mrb[0].mxu0 %v607
  %v699 = vpop.f32.mrb[0].mxu0
  %v700 = vadd.f32 %v555, %v699
  %v701 = vpop.f32.mrb[0].mxu0
  %v702 = vpop.f32.mrb[0].mxu0
  %v703 = vadd.f32 %v558, %v702
  %v704 = vpop.f32.mrb[0].mxu0
  %705 = vdwg.mxu0
  %s706 = scalar_lea.vmem %s1, 64
  %v707 = vld [vmem:[%s706] sm:$0xf]
  %v708 = vld [vmem:[%s706 + $0x4] sm:$0xf]
  %v709 = vld [vmem:[%s706 + $0x8] sm:$0xf]
  %v710 = vld [vmem:[%s706 + $0xc] sm:$0xf]
  %v711 = vld [vmem:[%s706 + $0x10] sm:$0xf]
  %v712 = vld [vmem:[%s706 + $0x14] sm:$0xf]
  %v713 = vld [vmem:[%s706 + $0x18] sm:$0xf]
  %v714 = vld [vmem:[%s706 + $0x1c] sm:$0xf]
  %v723 = vunpack.c.l.b16 %v707
  %v724 = vunpack.c.l.b16 %v708
  %v725 = vunpack.c.l.b16 %v709
  %v726 = vunpack.c.l.b16 %v710
  %v727 = vunpack.c.l.b16 %v711
  %v728 = vunpack.c.l.b16 %v712
  %v729 = vunpack.c.l.b16 %v713
  %v730 = vunpack.c.l.b16 %v714
  %v731 = vpack.c.b16 %v724, %v723
  %v732 = vpack.c.b16 %v726, %v725
  %v733 = vpack.c.b16 %v728, %v727
  %v734 = vpack.c.b16 %v730, %v729
  %v740 = vsel %vm439, %v390, 0
  %v743 = vsel %vm439, %v391, 0
  %v746 = vsel %vm439, %v392, 0
  %v749 = vsel %vm439, %v393, 0
  %v752 = vsel %vm439, %v394, 0
  %v755 = vsel %vm439, %v395, 0
  %v758 = vsel %vm439, %v396, 0
  %v761 = vsel %vm439, %v397, 0
  %763 = vmatprep.subr.bf16.mxu0 0
  %764 = vmatpush1.bf16.msra.mxu0 %v731
  %765 = vmatprep.subr.bf16.mxu0 0
  %766 = vmatpush1.bf16.msra.mxu0 %v732
  %767 = vmatprep.subr.bf16.mxu0 0
  %768 = vmatpush1.bf16.msra.mxu0 %v733
  %769 = vmatprep.subr.bf16.mxu0 0
  %770 = vmatpush1.bf16.msra.mxu0 %v734
  %771 = vmatprep.subr.bf16.mxu0 0
  %772 = vmatpush1.bf16.msra.mxu0 0
  %773 = vmatprep.subr.bf16.mxu0 0
  %774 = vmatpush1.bf16.msra.mxu0 0
  %775 = vmatprep.subr.bf16.mxu0 0
  %776 = vmatpush1.bf16.msra.mxu0 0
  %777 = vmatprep.subr.bf16.mxu0 0
  %778 = vmatpush1.bf16.msra.mxu0 0
  %779 = vmatprep.subr.bf16.mxu0 0
  %780 = vmatpush1.bf16.msra.mxu0 0
  %781 = vmatprep.subr.bf16.mxu0 0
  %782 = vmatpush1.bf16.msra.mxu0 0
  %783 = vmatprep.subr.bf16.mxu0 0
  %784 = vmatpush1.bf16.msra.mxu0 0
  %785 = vmatprep.subr.bf16.mxu0 0
  %786 = vmatpush1.bf16.msra.mxu0 0
  %787 = vmatprep.subr.bf16.mxu0 0
  %788 = vmatpush1.bf16.msra.mxu0 0
  %789 = vmatprep.subr.bf16.mxu0 0
  %790 = vmatpush1.bf16.msra.mxu0 0
  %791 = vmatprep.subr.bf16.mxu0 0
  %792 = vmatpush1.bf16.msra.mxu0 0
  %793 = vmatprep.subr.bf16.mxu0 0
  %794 = vmatpush1.bf16.msra.mxu0 0
  %795 = vmatprep.mubr.bf16.mxu0 0
  %796 = vmatmul.mubr.bf16.gmra.mrb[0].mxu0 %v740
  %v797 = vpop.f32.mrb[0].mxu0
  %v798 = vadd.f32 0.0, %v797
  %v799 = vpop.f32.mrb[0].mxu0
  %v800 = vpop.f32.mrb[0].mxu0
  %v801 = vadd.f32 0.0, %v800
  %v802 = vpop.f32.mrb[0].mxu0
  %803 = vmatprep.mubr.bf16.mxu0 0
  %804 = vmatmul.mubr.bf16.gmra.mrb[0].mxu0 %v743
  %v805 = vpop.f32.mrb[0].mxu0
  %v806 = vadd.f32 0.0, %v805
  %v807 = vpop.f32.mrb[0].mxu0
  %v808 = vpop.f32.mrb[0].mxu0
  %v809 = vadd.f32 0.0, %v808
  %v810 = vpop.f32.mrb[0].mxu0
  %811 = vmatprep.mubr.bf16.mxu0 0
  %812 = vmatmul.mubr.bf16.gmra.mrb[0].mxu0 %v746
  %v813 = vpop.f32.mrb[0].mxu0
  %v814 = vadd.f32 0.0, %v813
  %v815 = vpop.f32.mrb[0].mxu0
  %v816 = vpop.f32.mrb[0].mxu0
  %v817 = vadd.f32 0.0, %v816
  %v818 = vpop.f32.mrb[0].mxu0
  %819 = vmatprep.mubr.bf16.mxu0 0
  %820 = vmatmul.mubr.bf16.gmra.mrb[0].mxu0 %v749
  %v821 = vpop.f32.mrb[0].mxu0
  %v822 = vadd.f32 0.0, %v821
  %v823 = vpop.f32.mrb[0].mxu0
  %v824 = vpop.f32.mrb[0].mxu0
  %v825 = vadd.f32 0.0, %v824
  %v826 = vpop.f32.mrb[0].mxu0
  %827 = vmatprep.mubr.bf16.mxu0 0
  %828 = vmatmul.mubr.bf16.gmra.mrb[0].mxu0 %v752
  %v829 = vpop.f32.mrb[0].mxu0
  %v830 = vadd.f32 0.0, %v829
  %v831 = vpop.f32.mrb[0].mxu0
  %v832 = vpop.f32.mrb[0].mxu0
  %v833 = vadd.f32 0.0, %v832
  %v834 = vpop.f32.mrb[0].mxu0
  %835 = vmatprep.mubr.bf16.mxu0 0
  %836 = vmatmul.mubr.bf16.gmra.mrb[0].mxu0 %v755
  %v837 = vpop.f32.mrb[0].mxu0
  %v838 = vadd.f32 0.0, %v837
  %v839 = vpop.f32.mrb[0].mxu0
  %v840 = vpop.f32.mrb[0].mxu0
  %v841 = vadd.f32 0.0, %v840
  %v842 = vpop.f32.mrb[0].mxu0
  %843 = vmatprep.mubr.bf16.mxu0 0
  %844 = vmatmul.mubr.bf16.gmra.mrb[0].mxu0 %v758
  %v845 = vpop.f32.mrb[0].mxu0
  %v846 = vadd.f32 0.0, %v845
  %v847 = vpop.f32.mrb[0].mxu0
  %v848 = vpop.f32.mrb[0].mxu0
  %v849 = vadd.f32 0.0, %v848
  %v850 = vpop.f32.mrb[0].mxu0
  %851 = vmatprep.mubr.bf16.mxu0 0
  %852 = vmatmul.mubr.bf16.gmra.mrb[0].mxu0 %v761
  %v853 = vpop.f32.mrb[0].mxu0
  %v854 = vadd.f32 0.0, %v853
  %v855 = vpop.f32.mrb[0].mxu0
  %v856 = vpop.f32.mrb[0].mxu0
  %v857 = vadd.f32 0.0, %v856
  %v858 = vpop.f32.mrb[0].mxu0
  %859 = vdwg.mxu0
  %v860 = vadd.f32 %v644, %v798
  %v861 = vadd.f32 %v647, %v801
  %v862 = vadd.f32 %v652, %v806
  %v863 = vadd.f32 %v655, %v809
  %v864 = vadd.f32 %v660, %v814
  %v865 = vadd.f32 %v663, %v817
  %v866 = vadd.f32 %v668, %v822
  %v867 = vadd.f32 %v671, %v825
  %v868 = vadd.f32 %v676, %v830
  %v869 = vadd.f32 %v679, %v833
  %v870 = vadd.f32 %v684, %v838
  %v871 = vadd.f32 %v687, %v841
  %v872 = vadd.f32 %v692, %v846
  %v873 = vadd.f32 %v695, %v849
  %v874 = vadd.f32 %v700, %v854
  %v875 = vadd.f32 %v703, %v857
  %876 = vst [vmem:[#allocation2] sm:$0xff] %v860
  %877 = vst [vmem:[#allocation2 + $0x8] sm:$0xff] %v861
  %878 = vst [vmem:[#allocation2 + $0x10] sm:$0xff] %v862
  %879 = vst [vmem:[#allocation2 + $0x18] sm:$0xff] %v863
  %880 = vst [vmem:[#allocation2 + $0x20] sm:$0xff] %v864
  %881 = vst [vmem:[#allocation2 + $0x28] sm:$0xff] %v865
  %882 = vst [vmem:[#allocation2 + $0x30] sm:$0xff] %v866
  %883 = vst [vmem:[#allocation2 + $0x38] sm:$0xff] %v867
  %884 = vst [vmem:[#allocation2 + $0x40] sm:$0xff] %v868
  %885 = vst [vmem:[#allocation2 + $0x48] sm:$0xff] %v869
  %886 = vst [vmem:[#allocation2 + $0x50] sm:$0xff] %v870
  %887 = vst [vmem:[#allocation2 + $0x58] sm:$0xff] %v871
  %888 = vst [vmem:[#allocation2 + $0x60] sm:$0xff] %v872
  %889 = vst [vmem:[#allocation2 + $0x68] sm:$0xff] %v873
  %890 = vst [vmem:[#allocation2 + $0x70] sm:$0xff] %v874
  %891 = vst [vmem:[#allocation2 + $0x78] sm:$0xff] %v875
  %v892 = vld [vmem:[%s6] sm:$0xff]
  %v893 = vld [vmem:[%s6 + $0x8] sm:$0xff]
  %v894 = vld [vmem:[%s6 + $0x10] sm:$0xff]
  %v895 = vld [vmem:[%s6 + $0x18] sm:$0xff]
  %v896 = vld [vmem:[%s6 + $0x20] sm:$0xff]
  %v897 = vld [vmem:[%s6 + $0x28] sm:$0xff]
  %v898 = vld [vmem:[%s6 + $0x30] sm:$0xff]
  %v899 = vld [vmem:[%s6 + $0x38] sm:$0xff]
  %v900 = vld [vmem:[%s6 + $0x40] sm:$0xff]
  %v901 = vld [vmem:[%s6 + $0x48] sm:$0xff]
  %v902 = vld [vmem:[%s6 + $0x50] sm:$0xff]
  %v903 = vld [vmem:[%s6 + $0x58] sm:$0xff]
  %v904 = vld [vmem:[%s6 + $0x60] sm:$0xff]
  %v905 = vld [vmem:[%s6 + $0x68] sm:$0xff]
  %v906 = vld [vmem:[%s6 + $0x70] sm:$0xff]
  %v907 = vld [vmem:[%s6 + $0x78] sm:$0xff]
  %908 = vmatprep.subr.mxu0 0.0
  %909 = vmatpush1.msra.mxu0 %v892
  %910 = vmatprep.subr.mxu0 0.0
  %911 = vmatpush1.msra.mxu0 %v893
  %912 = vmatprep.subr.mxu0 0.0
  %913 = vmatpush1.msra.mxu0 %v894
  %914 = vmatprep.subr.mxu0 0.0
  %915 = vmatpush1.msra.mxu0 %v895
  %916 = vmatprep.subr.mxu0 0.0
  %917 = vmatpush1.msra.mxu0 %v896
  %918 = vmatprep.subr.mxu0 0.0
  %919 = vmatpush1.msra.mxu0 %v897
  %920 = vmatprep.subr.mxu0 0.0
  %921 = vmatpush1.msra.mxu0 %v898
  %922 = vmatprep.subr.mxu0 0.0
  %923 = vmatpush1.msra.mxu0 %v899
  %924 = vmatprep.subr.mxu0 0.0
  %925 = vmatpush1.msra.mxu0 %v900
  %926 = vmatprep.subr.mxu0 0.0
  %927 = vmatpush1.msra.mxu0 %v901
  %928 = vmatprep.subr.mxu0 0.0
  %929 = vmatpush1.msra.mxu0 %v902
  %930 = vmatprep.subr.mxu0 0.0
  %931 = vmatpush1.msra.mxu0 %v903
  %932 = vmatprep.subr.mxu0 0.0
  %933 = vmatpush1.msra.mxu0 %v904
  %934 = vmatprep.subr.mxu0 0.0
  %935 = vmatpush1.msra.mxu0 %v905
  %936 = vmatprep.subr.mxu0 0.0
  %937 = vmatpush1.msra.mxu0 %v906
  %938 = vmatprep.subr.mxu0 0.0
  %939 = vmatpush1.msra.mxu0 %v907
  %940 = vmatprep.subr.mxu0 0.0
  %941 = vmatpush1.msra.mxu0 0.0
  %942 = vmatprep.subr.mxu0 0.0
  %943 = vmatpush1.msra.mxu0 0.0
  %944 = vmatprep.subr.mxu0 0.0
  %945 = vmatpush1.msra.mxu0 0.0
  %946 = vmatprep.subr.mxu0 0.0
  %947 = vmatpush1.msra.mxu0 0.0
  %948 = vmatprep.subr.mxu0 0.0
  %949 = vmatpush1.msra.mxu0 0.0
  %950 = vmatprep.subr.mxu0 0.0
  %951 = vmatpush1.msra.mxu0 0.0
  %952 = vmatprep.subr.mxu0 0.0
  %953 = vmatpush1.msra.mxu0 0.0
  %954 = vmatprep.subr.mxu0 0.0
  %955 = vmatpush1.msra.mxu0 0.0
  %956 = vmatprep.subr.mxu0 0.0
  %957 = vmatpush1.msra.mxu0 0.0
  %958 = vmatprep.subr.mxu0 0.0
  %959 = vmatpush1.msra.mxu0 0.0
  %960 = vmatprep.subr.mxu0 0.0
  %961 = vmatpush1.msra.mxu0 0.0
  %962 = vmatprep.subr.mxu0 0.0
  %963 = vmatpush1.msra.mxu0 0.0
  %964 = vmatprep.subr.mxu0 0.0
  %965 = vmatpush1.msra.mxu0 0.0
  %966 = vmatprep.subr.mxu0 0.0
  %967 = vmatpush1.msra.mxu0 0.0
  %968 = vmatprep.subr.mxu0 0.0
  %969 = vmatpush1.msra.mxu0 0.0
  %970 = vmatprep.subr.mxu0 0.0
  %971 = vmatpush1.msra.mxu0 0.0
  %972 = vmatprep.mubr.f32.mxu0 0.0
  %973 = vmatmul.mubr.f32.gmra.mrb[0].mxu0 %v860
  %v974 = vpop.f32.mrb[0].mxu0
  %v975 = vadd.f32 0.0, %v974
  %v976 = vpop.f32.mrb[0].mxu0
  %977 = vmatprep.mubr.f32.mxu0 0.0
  %978 = vmatmul.mubr.f32.gmra.mrb[0].mxu0 %v861
  %v979 = vpop.f32.mrb[0].mxu0
  %v980 = vadd.f32 0.0, %v979
  %v981 = vpop.f32.mrb[0].mxu0
  %982 = vmatprep.mubr.f32.mxu0 0.0
  %983 = vmatmul.mubr.f32.gmra.mrb[0].mxu0 %v862
  %v984 = vpop.f32.mrb[0].mxu0
  %v985 = vadd.f32 0.0, %v984
  %v986 = vpop.f32.mrb[0].mxu0
  %987 = vmatprep.mubr.f32.mxu0 0.0
  %988 = vmatmul.mubr.f32.gmra.mrb[0].mxu0 %v863
  %v989 = vpop.f32.mrb[0].mxu0
  %v990 = vadd.f32 0.0, %v989
  %v991 = vpop.f32.mrb[0].mxu0
  %992 = vmatprep.mubr.f32.mxu0 0.0
  %993 = vmatmul.mubr.f32.gmra.mrb[0].mxu0 %v864
  %v994 = vpop.f32.mrb[0].mxu0
  %v995 = vadd.f32 0.0, %v994
  %v996 = vpop.f32.mrb[0].mxu0
  %997 = vmatprep.mubr.f32.mxu0 0.0
  %998 = vmatmul.mubr.f32.gmra.mrb[0].mxu0 %v865
  %v999 = vpop.f32.mrb[0].mxu0
  %v1000 = vadd.f32 0.0, %v999
  %v1001 = vpop.f32.mrb[0].mxu0
  %1002 = vmatprep.mubr.f32.mxu0 0.0
  %1003 = vmatmul.mubr.f32.gmra.mrb[0].mxu0 %v866
  %v1004 = vpop.f32.mrb[0].mxu0
  %v1005 = vadd.f32 0.0, %v1004
  %v1006 = vpop.f32.mrb[0].mxu0
  %1007 = vmatprep.mubr.f32.mxu0 0.0
  %1008 = vmatmul.mubr.f32.gmra.mrb[0].mxu0 %v867
  %v1009 = vpop.f32.mrb[0].mxu0
  %v1010 = vadd.f32 0.0, %v1009
  %v1011 = vpop.f32.mrb[0].mxu0
  %1012 = vmatprep.mubr.f32.mxu0 0.0
  %1013 = vmatmul.mubr.f32.gmra.mrb[0].mxu0 %v868
  %v1014 = vpop.f32.mrb[0].mxu0
  %v1015 = vadd.f32 0.0, %v1014
  %v1016 = vpop.f32.mrb[0].mxu0
  %1017 = vmatprep.mubr.f32.mxu0 0.0
  %1018 = vmatmul.mubr.f32.gmra.mrb[0].mxu0 %v869
  %v1019 = vpop.f32.mrb[0].mxu0
  %v1020 = vadd.f32 0.0, %v1019
  %v1021 = vpop.f32.mrb[0].mxu0
  %1022 = vmatprep.mubr.f32.mxu0 0.0
  %1023 = vmatmul.mubr.f32.gmra.mrb[0].mxu0 %v870
  %v1024 = vpop.f32.mrb[0].mxu0
  %v1025 = vadd.f32 0.0, %v1024
  %v1026 = vpop.f32.mrb[0].mxu0
  %1027 = vmatprep.mubr.f32.mxu0 0.0
  %1028 = vmatmul.mubr.f32.gmra.mrb[0].mxu0 %v871
  %v1029 = vpop.f32.mrb[0].mxu0
  %v1030 = vadd.f32 0.0, %v1029
  %v1031 = vpop.f32.mrb[0].mxu0
  %1032 = vmatprep.mubr.f32.mxu0 0.0
  %1033 = vmatmul.mubr.f32.gmra.mrb[0].mxu0 %v872
  %v1034 = vpop.f32.mrb[0].mxu0
  %v1035 = vadd.f32 0.0, %v1034
  %v1036 = vpop.f32.mrb[0].mxu0
  %1037 = vmatprep.mubr.f32.mxu0 0.0
  %1038 = vmatmul.mubr.f32.gmra.mrb[0].mxu0 %v873
  %v1039 = vpop.f32.mrb[0].mxu0
  %v1040 = vadd.f32 0.0, %v1039
  %v1041 = vpop.f32.mrb[0].mxu0
  %1042 = vmatprep.mubr.f32.mxu0 0.0
  %1043 = vmatmul.mubr.f32.gmra.mrb[0].mxu0 %v874
  %v1044 = vpop.f32.mrb[0].mxu0
  %v1045 = vadd.f32 0.0, %v1044
  %v1046 = vpop.f32.mrb[0].mxu0
  %1047 = vmatprep.mubr.f32.mxu0 0.0
  %1048 = vmatmul.mubr.f32.gmra.mrb[0].mxu0 %v875
  %v1049 = vpop.f32.mrb[0].mxu0
  %v1050 = vadd.f32 0.0, %v1049
  %v1051 = vpop.f32.mrb[0].mxu0
  %1052 = vdwg.mxu0
  %vm1053 = vcmask 64512
  %v1054 = vsel %vm1053, %v975, 0.0
  %v1055 = vsel %vm1053, %v980, 0.0
  %v1056 = vadd.f32 %v1054, %v1055
  %v1057 = vsel %vm1053, %v985, 0.0
  %v1058 = vadd.f32 %v1056, %v1057
  %v1059 = vsel %vm1053, %v990, 0.0
  %v1060 = vadd.f32 %v1058, %v1059
  %v1061 = vsel %vm1053, %v995, 0.0
  %v1062 = vadd.f32 %v1060, %v1061
  %v1063 = vsel %vm1053, %v1000, 0.0
  %v1064 = vadd.f32 %v1062, %v1063
  %v1065 = vsel %vm1053, %v1005, 0.0
  %v1066 = vadd.f32 %v1064, %v1065
  %v1067 = vsel %vm1053, %v1010, 0.0
  %v1068 = vadd.f32 %v1066, %v1067
  %v1069 = vsel %vm1053, %v1015, 0.0
  %v1070 = vadd.f32 %v1068, %v1069
  %v1071 = vsel %vm1053, %v1020, 0.0
  %v1072 = vadd.f32 %v1070, %v1071
  %v1073 = vsel %vm1053, %v1025, 0.0
  %v1074 = vadd.f32 %v1072, %v1073
  %v1075 = vsel %vm1053, %v1030, 0.0
  %v1076 = vadd.f32 %v1074, %v1075
  %v1077 = vsel %vm1053, %v1035, 0.0
  %v1078 = vadd.f32 %v1076, %v1077
  %v1079 = vsel %vm1053, %v1040, 0.0
  %v1080 = vadd.f32 %v1078, %v1079
  %v1081 = vsel %vm1053, %v1045, 0.0
  %v1082 = vadd.f32 %v1080, %v1081
  %v1083 = vsel %vm1053, %v1050, 0.0
  %v1084 = vadd.f32 %v1082, %v1083
  %v1085 = vrot.slane %v1084, 4
  %v1086 = vadd.f32 %v1084, %v1085
  %v1087 = vrot.slane %v1086, 2
  %v1088 = vadd.f32 %v1086, %v1087
  %v1089 = vrot.slane %v1088, 1
  %v1090 = vadd.f32 %v1088, %v1089
  %v1091 = vmul.f32 %v860, %v860
  %v1092 = vmul.f32 %v861, %v861
  %v1093 = vmul.f32 %v862, %v862
  %v1094 = vmul.f32 %v863, %v863
  %v1095 = vmul.f32 %v864, %v864
  %v1096 = vmul.f32 %v865, %v865
  %v1097 = vmul.f32 %v866, %v866
  %v1098 = vmul.f32 %v867, %v867
  %v1099 = vmul.f32 %v868, %v868
  %v1100 = vmul.f32 %v869, %v869
  %v1101 = vmul.f32 %v870, %v870
  %v1102 = vmul.f32 %v871, %v871
  %v1103 = vmul.f32 %v872, %v872
  %v1104 = vmul.f32 %v873, %v873
  %v1105 = vmul.f32 %v874, %v874
  %v1106 = vmul.f32 %v875, %v875
  %1107 = vmatprep.subr.mxu0 0.0
  %1108 = vmatpush1.msra.mxu0 %v892
  %1109 = vmatprep.subr.mxu0 0.0
  %1110 = vmatpush1.msra.mxu0 %v893
  %1111 = vmatprep.subr.mxu0 0.0
  %1112 = vmatpush1.msra.mxu0 %v894
  %1113 = vmatprep.subr.mxu0 0.0
  %1114 = vmatpush1.msra.mxu0 %v895
  %1115 = vmatprep.subr.mxu0 0.0
  %1116 = vmatpush1.msra.mxu0 %v896
  %1117 = vmatprep.subr.mxu0 0.0
  %1118 = vmatpush1.msra.mxu0 %v897
  %1119 = vmatprep.subr.mxu0 0.0
  %1120 = vmatpush1.msra.mxu0 %v898
  %1121 = vmatprep.subr.mxu0 0.0
  %1122 = vmatpush1.msra.mxu0 %v899
  %1123 = vmatprep.subr.mxu0 0.0
  %1124 = vmatpush1.msra.mxu0 %v900
  %1125 = vmatprep.subr.mxu0 0.0
  %1126 = vmatpush1.msra.mxu0 %v901
  %1127 = vmatprep.subr.mxu0 0.0
  %1128 = vmatpush1.msra.mxu0 %v902
  %1129 = vmatprep.subr.mxu0 0.0
  %1130 = vmatpush1.msra.mxu0 %v903
  %1131 = vmatprep.subr.mxu0 0.0
  %1132 = vmatpush1.msra.mxu0 %v904
  %1133 = vmatprep.subr.mxu0 0.0
  %1134 = vmatpush1.msra.mxu0 %v905
  %1135 = vmatprep.subr.mxu0 0.0
  %1136 = vmatpush1.msra.mxu0 %v906
  %1137 = vmatprep.subr.mxu0 0.0
  %1138 = vmatpush1.msra.mxu0 %v907
  %1139 = vmatprep.subr.mxu0 0.0
  %1140 = vmatpush1.msra.mxu0 0.0
  %1141 = vmatprep.subr.mxu0 0.0
  %1142 = vmatpush1.msra.mxu0 0.0
  %1143 = vmatprep.subr.mxu0 0.0
  %1144 = vmatpush1.msra.mxu0 0.0
  %1145 = vmatprep.subr.mxu0 0.0
  %1146 = vmatpush1.msra.mxu0 0.0
  %1147 = vmatprep.subr.mxu0 0.0
  %1148 = vmatpush1.msra.mxu0 0.0
  %1149 = vmatprep.subr.mxu0 0.0
  %1150 = vmatpush1.msra.mxu0 0.0
  %1151 = vmatprep.subr.mxu0 0.0
  %1152 = vmatpush1.msra.mxu0 0.0
  %1153 = vmatprep.subr.mxu0 0.0
  %1154 = vmatpush1.msra.mxu0 0.0
  %1155 = vmatprep.subr.mxu0 0.0
  %1156 = vmatpush1.msra.mxu0 0.0
  %1157 = vmatprep.subr.mxu0 0.0
  %1158 = vmatpush1.msra.mxu0 0.0
  %1159 = vmatprep.subr.mxu0 0.0
  %1160 = vmatpush1.msra.mxu0 0.0
  %1161 = vmatprep.subr.mxu0 0.0
  %1162 = vmatpush1.msra.mxu0 0.0
  %1163 = vmatprep.subr.mxu0 0.0
  %1164 = vmatpush1.msra.mxu0 0.0
  %1165 = vmatprep.subr.mxu0 0.0
  %1166 = vmatpush1.msra.mxu0 0.0
  %1167 = vmatprep.subr.mxu0 0.0
  %1168 = vmatpush1.msra.mxu0 0.0
  %1169 = vmatprep.subr.mxu0 0.0
  %1170 = vmatpush1.msra.mxu0 0.0
  %1171 = vmatprep.mubr.f32.mxu0 0.0
  %1172 = vmatmul.mubr.f32.gmra.mrb[0].mxu0 %v1091
  %v1173 = vpop.f32.mrb[0].mxu0
  %v1174 = vadd.f32 0.0, %v1173
  %v1175 = vpop.f32.mrb[0].mxu0
  %1176 = vmatprep.mubr.f32.mxu0 0.0
  %1177 = vmatmul.mubr.f32.gmra.mrb[0].mxu0 %v1092
  %v1178 = vpop.f32.mrb[0].mxu0
  %v1179 = vadd.f32 0.0, %v1178
  %v1180 = vpop.f32.mrb[0].mxu0
  %1181 = vmatprep.mubr.f32.mxu0 0.0
  %1182 = vmatmul.mubr.f32.gmra.mrb[0].mxu0 %v1093
  %v1183 = vpop.f32.mrb[0].mxu0
  %v1184 = vadd.f32 0.0, %v1183
  %v1185 = vpop.f32.mrb[0].mxu0
  %1186 = vmatprep.mubr.f32.mxu0 0.0
  %1187 = vmatmul.mubr.f32.gmra.mrb[0].mxu0 %v1094
  %v1188 = vpop.f32.mrb[0].mxu0
  %v1189 = vadd.f32 0.0, %v1188
  %v1190 = vpop.f32.mrb[0].mxu0
  %1191 = vmatprep.mubr.f32.mxu0 0.0
  %1192 = vmatmul.mubr.f32.gmra.mrb[0].mxu0 %v1095
  %v1193 = vpop.f32.mrb[0].mxu0
  %v1194 = vadd.f32 0.0, %v1193
  %v1195 = vpop.f32.mrb[0].mxu0
  %1196 = vmatprep.mubr.f32.mxu0 0.0
  %1197 = vmatmul.mubr.f32.gmra.mrb[0].mxu0 %v1096
  %v1198 = vpop.f32.mrb[0].mxu0
  %v1199 = vadd.f32 0.0, %v1198
  %v1200 = vpop.f32.mrb[0].mxu0
  %1201 = vmatprep.mubr.f32.mxu0 0.0
  %1202 = vmatmul.mubr.f32.gmra.mrb[0].mxu0 %v1097
  %v1203 = vpop.f32.mrb[0].mxu0
  %v1204 = vadd.f32 0.0, %v1203
  %v1205 = vpop.f32.mrb[0].mxu0
  %1206 = vmatprep.mubr.f32.mxu0 0.0
  %1207 = vmatmul.mubr.f32.gmra.mrb[0].mxu0 %v1098
  %v1208 = vpop.f32.mrb[0].mxu0
  %v1209 = vadd.f32 0.0, %v1208
  %v1210 = vpop.f32.mrb[0].mxu0
  %1211 = vmatprep.mubr.f32.mxu0 0.0
  %1212 = vmatmul.mubr.f32.gmra.mrb[0].mxu0 %v1099
  %v1213 = vpop.f32.mrb[0].mxu0
  %v1214 = vadd.f32 0.0, %v1213
  %v1215 = vpop.f32.mrb[0].mxu0
  %1216 = vmatprep.mubr.f32.mxu0 0.0
  %1217 = vmatmul.mubr.f32.gmra.mrb[0].mxu0 %v1100
  %v1218 = vpop.f32.mrb[0].mxu0
  %v1219 = vadd.f32 0.0, %v1218
  %v1220 = vpop.f32.mrb[0].mxu0
  %1221 = vmatprep.mubr.f32.mxu0 0.0
  %1222 = vmatmul.mubr.f32.gmra.mrb[0].mxu0 %v1101
  %v1223 = vpop.f32.mrb[0].mxu0
  %v1224 = vadd.f32 0.0, %v1223
  %v1225 = vpop.f32.mrb[0].mxu0
  %1226 = vmatprep.mubr.f32.mxu0 0.0
  %1227 = vmatmul.mubr.f32.gmra.mrb[0].mxu0 %v1102
  %v1228 = vpop.f32.mrb[0].mxu0
  %v1229 = vadd.f32 0.0, %v1228
  %v1230 = vpop.f32.mrb[0].mxu0
  %1231 = vmatprep.mubr.f32.mxu0 0.0
  %1232 = vmatmul.mubr.f32.gmra.mrb[0].mxu0 %v1103
  %v1233 = vpop.f32.mrb[0].mxu0
  %v1234 = vadd.f32 0.0, %v1233
  %v1235 = vpop.f32.mrb[0].mxu0
  %1236 = vmatprep.mubr.f32.mxu0 0.0
  %1237 = vmatmul.mubr.f32.gmra.mrb[0].mxu0 %v1104
  %v1238 = vpop.f32.mrb[0].mxu0
  %v1239 = vadd.f32 0.0, %v1238
  %v1240 = vpop.f32.mrb[0].mxu0
  %1241 = vmatprep.mubr.f32.mxu0 0.0
  %1242 = vmatmul.mubr.f32.gmra.mrb[0].mxu0 %v1105
  %v1243 = vpop.f32.mrb[0].mxu0
  %v1244 = vadd.f32 0.0, %v1243
  %v1245 = vpop.f32.mrb[0].mxu0
  %1246 = vmatprep.mubr.f32.mxu0 0.0
  %1247 = vmatmul.mubr.f32.gmra.mrb[0].mxu0 %v1106
  %v1248 = vpop.f32.mrb[0].mxu0
  %v1249 = vadd.f32 0.0, %v1248
  %v1250 = vpop.f32.mrb[0].mxu0
  %1251 = vdwg.mxu0
  %v1252 = vsel %vm1053, %v1174, 0.0
  %v1253 = vsel %vm1053, %v1179, 0.0
  %v1254 = vadd.f32 %v1252, %v1253
  %v1255 = vsel %vm1053, %v1184, 0.0
  %v1256 = vadd.f32 %v1254, %v1255
  %v1257 = vsel %vm1053, %v1189, 0.0
  %v1258 = vadd.f32 %v1256, %v1257
  %v1259 = vsel %vm1053, %v1194, 0.0
  %v1260 = vadd.f32 %v1258, %v1259
  %v1261 = vsel %vm1053, %v1199, 0.0
  %v1262 = vadd.f32 %v1260, %v1261
  %v1263 = vsel %vm1053, %v1204, 0.0
  %v1264 = vadd.f32 %v1262, %v1263
  %v1265 = vsel %vm1053, %v1209, 0.0
  %v1266 = vadd.f32 %v1264, %v1265
  %v1267 = vsel %vm1053, %v1214, 0.0
  %v1268 = vadd.f32 %v1266, %v1267
  %v1269 = vsel %vm1053, %v1219, 0.0
  %v1270 = vadd.f32 %v1268, %v1269
  %v1271 = vsel %vm1053, %v1224, 0.0
  %v1272 = vadd.f32 %v1270, %v1271
  %v1273 = vsel %vm1053, %v1229, 0.0
  %v1274 = vadd.f32 %v1272, %v1273
  %v1275 = vsel %vm1053, %v1234, 0.0
  %v1276 = vadd.f32 %v1274, %v1275
  %v1277 = vsel %vm1053, %v1239, 0.0
  %v1278 = vadd.f32 %v1276, %v1277
  %v1279 = vsel %vm1053, %v1244, 0.0
  %v1280 = vadd.f32 %v1278, %v1279
  %v1281 = vsel %vm1053, %v1249, 0.0
  %v1282 = vadd.f32 %v1280, %v1281
  %v1283 = vrot.slane %v1282, 4
  %v1284 = vadd.f32 %v1282, %v1283
  %v1285 = vrot.slane %v1284, 2
  %v1286 = vadd.f32 %v1284, %v1285
  %v1287 = vrot.slane %v1286, 1
  %v1288 = vadd.f32 %v1286, %v1287
  %v1289 = vmul.f32 %v1090, 0.00048828125
  %v1290 = vmul.f32 %v1288, 0.00048828125
  %v1291 = vmul.f32 %v1289, %v1289
  %v1292 = vsub.f32 %v1290, %v1291
  %v1293 = vmax.f32 %v1292, 0.0
  %v1294 = vld [vmem:[%s4] sm:$0x1]
  %v1295 = vadd.f32 %v1293, 1e-05
  %v1296 = vrsqrt.pop %v1295
  %v1297 = vmul.f32 %v1294, %v1296
  %v1298 = vld [vmem:[%s5] sm:$0x1]
  %v1299 = vmul.f32 %v1289, %v1297
  %v1300 = vsub.f32 %v1298, %v1299
  %v1301 = vld [vmem:[%s7] sm:$0xff]
  %v1303 = vsel %vm1053, %v1297, 0
  %1305 = vmatprep.subr.mxu0 0.0
  %1306 = vmatpush1.msra.mxu0 %v1301
  %1307 = vmatprep.subr.mxu0 0.0
  %1308 = vmatpush1.msra.mxu0 0.0
  %1309 = vmatprep.subr.mxu0 0.0
  %1310 = vmatpush1.msra.mxu0 0.0
  %1311 = vmatprep.subr.mxu0 0.0
  %1312 = vmatpush1.msra.mxu0 0.0
  %1313 = vmatprep.subr.mxu0 0.0
  %1314 = vmatpush1.msra.mxu0 0.0
  %1315 = vmatprep.subr.mxu0 0.0
  %1316 = vmatpush1.msra.mxu0 0.0
  %1317 = vmatprep.subr.mxu0 0.0
  %1318 = vmatpush1.msra.mxu0 0.0
  %1319 = vmatprep.subr.mxu0 0.0
  %1320 = vmatpush1.msra.mxu0 0.0
  %1321 = vmatprep.subr.mxu0 0.0
  %1322 = vmatpush1.msra.mxu0 0.0
  %1323 = vmatprep.subr.mxu0 0.0
  %1324 = vmatpush1.msra.mxu0 0.0
  %1325 = vmatprep.subr.mxu0 0.0
  %1326 = vmatpush1.msra.mxu0 0.0
  %1327 = vmatprep.subr.mxu0 0.0
  %1328 = vmatpush1.msra.mxu0 0.0
  %1329 = vmatprep.subr.mxu0 0.0
  %1330 = vmatpush1.msra.mxu0 0.0
  %1331 = vmatprep.subr.mxu0 0.0
  %1332 = vmatpush1.msra.mxu0 0.0
  %1333 = vmatprep.subr.mxu0 0.0
  %1334 = vmatpush1.msra.mxu0 0.0
  %1335 = vmatprep.subr.mxu0 0.0
  %1336 = vmatpush1.msra.mxu0 0.0
  %1337 = vmatprep.subr.mxu0 0.0
  %1338 = vmatpush1.msra.mxu0 0.0
  %1339 = vmatprep.subr.mxu0 0.0
  %1340 = vmatpush1.msra.mxu0 0.0
  %1341 = vmatprep.subr.mxu0 0.0
  %1342 = vmatpush1.msra.mxu0 0.0
  %1343 = vmatprep.subr.mxu0 0.0
  %1344 = vmatpush1.msra.mxu0 0.0
  %1345 = vmatprep.subr.mxu0 0.0
  %1346 = vmatpush1.msra.mxu0 0.0
  %1347 = vmatprep.subr.mxu0 0.0
  %1348 = vmatpush1.msra.mxu0 0.0
  %1349 = vmatprep.subr.mxu0 0.0
  %1350 = vmatpush1.msra.mxu0 0.0
  %1351 = vmatprep.subr.mxu0 0.0
  %1352 = vmatpush1.msra.mxu0 0.0
  %1353 = vmatprep.subr.mxu0 0.0
  %1354 = vmatpush1.msra.mxu0 0.0
  %1355 = vmatprep.subr.mxu0 0.0
  %1356 = vmatpush1.msra.mxu0 0.0
  %1357 = vmatprep.subr.mxu0 0.0
  %1358 = vmatpush1.msra.mxu0 0.0
  %1359 = vmatprep.subr.mxu0 0.0
  %1360 = vmatpush1.msra.mxu0 0.0
  %1361 = vmatprep.subr.mxu0 0.0
  %1362 = vmatpush1.msra.mxu0 0.0
  %1363 = vmatprep.subr.mxu0 0.0
  %1364 = vmatpush1.msra.mxu0 0.0
  %1365 = vmatprep.subr.mxu0 0.0
  %1366 = vmatpush1.msra.mxu0 0.0
  %1367 = vmatprep.subr.mxu0 0.0
  %1368 = vmatpush1.msra.mxu0 0.0
  %1369 = vmatprep.mubr.f32.mxu0 0.0
  %1370 = vmatmul.mubr.f32.gmra.mrb[0].mxu0 %v1303
  %v1371 = vpop.f32.mrb[0].mxu0
  %v1372 = vadd.f32 0.0, %v1371
  %v1373 = vpop.f32.mrb[0].mxu0
  %1374 = vdwg.mxu0
  %v1376 = vsel %vm1053, %v1300, 0
  %1378 = vmatprep.subr.mxu0 0.0
  %1379 = vmatpush1.msra.mxu0 %v1301
  %1380 = vmatprep.subr.mxu0 0.0
  %1381 = vmatpush1.msra.mxu0 0.0
  %1382 = vmatprep.subr.mxu0 0.0
  %1383 = vmatpush1.msra.mxu0 0.0
  %1384 = vmatprep.subr.mxu0 0.0
  %1385 = vmatpush1.msra.mxu0 0.0
  %1386 = vmatprep.subr.mxu0 0.0
  %1387 = vmatpush1.msra.mxu0 0.0
  %1388 = vmatprep.subr.mxu0 0.0
  %1389 = vmatpush1.msra.mxu0 0.0
  %1390 = vmatprep.subr.mxu0 0.0
  %1391 = vmatpush1.msra.mxu0 0.0
  %1392 = vmatprep.subr.mxu0 0.0
  %1393 = vmatpush1.msra.mxu0 0.0
  %1394 = vmatprep.subr.mxu0 0.0
  %1395 = vmatpush1.msra.mxu0 0.0
  %1396 = vmatprep.subr.mxu0 0.0
  %1397 = vmatpush1.msra.mxu0 0.0
  %1398 = vmatprep.subr.mxu0 0.0
  %1399 = vmatpush1.msra.mxu0 0.0
  %1400 = vmatprep.subr.mxu0 0.0
  %1401 = vmatpush1.msra.mxu0 0.0
  %1402 = vmatprep.subr.mxu0 0.0
  %1403 = vmatpush1.msra.mxu0 0.0
  %1404 = vmatprep.subr.mxu0 0.0
  %1405 = vmatpush1.msra.mxu0 0.0
  %1406 = vmatprep.subr.mxu0 0.0
  %1407 = vmatpush1.msra.mxu0 0.0
  %1408 = vmatprep.subr.mxu0 0.0
  %1409 = vmatpush1.msra.mxu0 0.0
  %1410 = vmatprep.subr.mxu0 0.0
  %1411 = vmatpush1.msra.mxu0 0.0
  %1412 = vmatprep.subr.mxu0 0.0
  %1413 = vmatpush1.msra.mxu0 0.0
  %1414 = vmatprep.subr.mxu0 0.0
  %1415 = vmatpush1.msra.mxu0 0.0
  %1416 = vmatprep.subr.mxu0 0.0
  %1417 = vmatpush1.msra.mxu0 0.0
  %1418 = vmatprep.subr.mxu0 0.0
  %1419 = vmatpush1.msra.mxu0 0.0
  %1420 = vmatprep.subr.mxu0 0.0
  %1421 = vmatpush1.msra.mxu0 0.0
  %1422 = vmatprep.subr.mxu0 0.0
  %1423 = vmatpush1.msra.mxu0 0.0
  %1424 = vmatprep.subr.mxu0 0.0
  %1425 = vmatpush1.msra.mxu0 0.0
  %1426 = vmatprep.subr.mxu0 0.0
  %1427 = vmatpush1.msra.mxu0 0.0
  %1428 = vmatprep.subr.mxu0 0.0
  %1429 = vmatpush1.msra.mxu0 0.0
  %1430 = vmatprep.subr.mxu0 0.0
  %1431 = vmatpush1.msra.mxu0 0.0
  %1432 = vmatprep.subr.mxu0 0.0
  %1433 = vmatpush1.msra.mxu0 0.0
  %1434 = vmatprep.subr.mxu0 0.0
  %1435 = vmatpush1.msra.mxu0 0.0
  %1436 = vmatprep.subr.mxu0 0.0
  %1437 = vmatpush1.msra.mxu0 0.0
  %1438 = vmatprep.subr.mxu0 0.0
  %1439 = vmatpush1.msra.mxu0 0.0
  %1440 = vmatprep.subr.mxu0 0.0
  %1441 = vmatpush1.msra.mxu0 0.0
  %1442 = vmatprep.mubr.f32.mxu0 0.0
  %1443 = vmatmul.mubr.f32.gmra.mrb[0].mxu0 %v1376
  %v1444 = vpop.f32.mrb[0].mxu0
  %v1445 = vadd.f32 0.0, %v1444
  %v1446 = vpop.f32.mrb[0].mxu0
  %1447 = vdwg.mxu0
  %v1448 = vld [vmem:[#allocation2] sm:$0xff]
  %v1449 = vld [vmem:[#allocation2 + $0x8] sm:$0xff]
  %v1450 = vld [vmem:[#allocation2 + $0x10] sm:$0xff]
  %v1451 = vld [vmem:[#allocation2 + $0x18] sm:$0xff]
  %v1452 = vlaneseq
  %v1453 = vshrl.u32 %v1452, 7
  %v1454 = vsub.s32 0, %v1453
  %v1455 = vrot.slane %v1372, %v1454
  %v1456 = vmul.f32 %v1448, %v1455
  %v1457 = vmul.f32 %v1449, %v1455
  %v1458 = vmul.f32 %v1450, %v1455
  %v1459 = vmul.f32 %v1451, %v1455
  %v1460 = vadd.f32 %v1456, 0.0
  %v1461 = vadd.f32 %v1457, 0.0
  %v1462 = vadd.f32 %v1458, 0.0
  %v1463 = vadd.f32 %v1459, 0.0
  %v1464 = vlaneseq
  %v1465 = vshrl.u32 %v1464, 7
  %v1466 = vsub.s32 0, %v1465
  %v1467 = vrot.slane %v1445, %v1466
  %v1468 = vadd.f32 %v1460, %v1467
  %v1469 = vadd.f32 %v1461, %v1467
  %v1470 = vadd.f32 %v1462, %v1467
  %v1471 = vadd.f32 %v1463, %v1467
  %vm1472 = vcmp.ge.f32.partialorder %v1468, 1.0
  %vm1473 = vcmp.ge.f32.partialorder %v1469, 1.0
  %vm1474 = vcmp.ge.f32.partialorder %v1470, 1.0
  %vm1475 = vcmp.ge.f32.partialorder %v1471, 1.0
  %v1476 = vsel %vm1472, 0.0, %v1468
  %v1477 = vsel %vm1473, 0.0, %v1469
  %v1478 = vsel %vm1474, 0.0, %v1470
  %v1479 = vsel %vm1475, 0.0, %v1471
  %v1480 = vsel %vm1472, 1, 0
  %v1481 = vsel %vm1473, 1, 0
  %v1482 = vsel %vm1474, 1, 0
  %v1483 = vsel %vm1475, 1, 0
  %v1484 = vcvt.s32.f32 %v1480
  %v1485 = vcvt.s32.f32 %v1481
  %v1486 = vcvt.s32.f32 %v1482
  %v1487 = vcvt.s32.f32 %v1483
  %1488 = vst [vmem:[#allocation2] sm:$0xff] %v1484
  %1489 = vst [vmem:[#allocation2 + $0x8] sm:$0xff] %v1485
  %1490 = vst [vmem:[#allocation2 + $0x10] sm:$0xff] %v1486
  %1491 = vst [vmem:[#allocation2 + $0x18] sm:$0xff] %v1487
  %v1492 = vld [vmem:[#allocation2 + $0x20] sm:$0xff]
  %v1493 = vld [vmem:[#allocation2 + $0x28] sm:$0xff]
  %v1494 = vld [vmem:[#allocation2 + $0x30] sm:$0xff]
  %v1495 = vld [vmem:[#allocation2 + $0x38] sm:$0xff]
  %v1496 = vmul.f32 %v1492, %v1455
  %v1497 = vmul.f32 %v1493, %v1455
  %v1498 = vmul.f32 %v1494, %v1455
  %v1499 = vmul.f32 %v1495, %v1455
  %v1500 = vadd.f32 %v1476, %v1496
  %v1501 = vadd.f32 %v1477, %v1497
  %v1502 = vadd.f32 %v1478, %v1498
  %v1503 = vadd.f32 %v1479, %v1499
  %v1504 = vadd.f32 %v1500, %v1467
  %v1505 = vadd.f32 %v1501, %v1467
  %v1506 = vadd.f32 %v1502, %v1467
  %v1507 = vadd.f32 %v1503, %v1467
  %vm1508 = vcmp.ge.f32.partialorder %v1504, 1.0
  %vm1509 = vcmp.ge.f32.partialorder %v1505, 1.0
  %vm1510 = vcmp.ge.f32.partialorder %v1506, 1.0
  %vm1511 = vcmp.ge.f32.partialorder %v1507, 1.0
  %v1512 = vsel %vm1508, 0.0, %v1504
  %v1513 = vsel %vm1509, 0.0, %v1505
  %v1514 = vsel %vm1510, 0.0, %v1506
  %v1515 = vsel %vm1511, 0.0, %v1507
  %v1516 = vsel %vm1508, 1, 0
  %v1517 = vsel %vm1509, 1, 0
  %v1518 = vsel %vm1510, 1, 0
  %v1519 = vsel %vm1511, 1, 0
  %v1520 = vcvt.s32.f32 %v1516
  %v1521 = vcvt.s32.f32 %v1517
  %v1522 = vcvt.s32.f32 %v1518
  %v1523 = vcvt.s32.f32 %v1519
  %1524 = vst [vmem:[#allocation2 + $0x20] sm:$0xff] %v1520
  %1525 = vst [vmem:[#allocation2 + $0x28] sm:$0xff] %v1521
  %1526 = vst [vmem:[#allocation2 + $0x30] sm:$0xff] %v1522
  %1527 = vst [vmem:[#allocation2 + $0x38] sm:$0xff] %v1523
  %v1528 = vld [vmem:[#allocation2 + $0x40] sm:$0xff]
  %v1529 = vld [vmem:[#allocation2 + $0x48] sm:$0xff]
  %v1530 = vld [vmem:[#allocation2 + $0x50] sm:$0xff]
  %v1531 = vld [vmem:[#allocation2 + $0x58] sm:$0xff]
  %v1532 = vmul.f32 %v1528, %v1455
  %v1533 = vmul.f32 %v1529, %v1455
  %v1534 = vmul.f32 %v1530, %v1455
  %v1535 = vmul.f32 %v1531, %v1455
  %v1536 = vadd.f32 %v1512, %v1532
  %v1537 = vadd.f32 %v1513, %v1533
  %v1538 = vadd.f32 %v1514, %v1534
  %v1539 = vadd.f32 %v1515, %v1535
  %v1540 = vadd.f32 %v1536, %v1467
  %v1541 = vadd.f32 %v1537, %v1467
  %v1542 = vadd.f32 %v1538, %v1467
  %v1543 = vadd.f32 %v1539, %v1467
  %vm1544 = vcmp.ge.f32.partialorder %v1540, 1.0
  %vm1545 = vcmp.ge.f32.partialorder %v1541, 1.0
  %vm1546 = vcmp.ge.f32.partialorder %v1542, 1.0
  %vm1547 = vcmp.ge.f32.partialorder %v1543, 1.0
  %v1548 = vsel %vm1544, 0.0, %v1540
  %v1549 = vsel %vm1545, 0.0, %v1541
  %v1550 = vsel %vm1546, 0.0, %v1542
  %v1551 = vsel %vm1547, 0.0, %v1543
  %v1552 = vsel %vm1544, 1, 0
  %v1553 = vsel %vm1545, 1, 0
  %v1554 = vsel %vm1546, 1, 0
  %v1555 = vsel %vm1547, 1, 0
  %v1556 = vcvt.s32.f32 %v1552
  %v1557 = vcvt.s32.f32 %v1553
  %v1558 = vcvt.s32.f32 %v1554
  %v1559 = vcvt.s32.f32 %v1555
  %1560 = vst [vmem:[#allocation2 + $0x40] sm:$0xff] %v1556
  %1561 = vst [vmem:[#allocation2 + $0x48] sm:$0xff] %v1557
  %1562 = vst [vmem:[#allocation2 + $0x50] sm:$0xff] %v1558
  %1563 = vst [vmem:[#allocation2 + $0x58] sm:$0xff] %v1559
  %v1564 = vld [vmem:[#allocation2 + $0x60] sm:$0xff]
  %v1565 = vld [vmem:[#allocation2 + $0x68] sm:$0xff]
  %v1566 = vld [vmem:[#allocation2 + $0x70] sm:$0xff]
  %v1567 = vld [vmem:[#allocation2 + $0x78] sm:$0xff]
  %v1568 = vmul.f32 %v1564, %v1455
  %v1569 = vmul.f32 %v1565, %v1455
  %v1570 = vmul.f32 %v1566, %v1455
  %v1571 = vmul.f32 %v1567, %v1455
  %v1572 = vadd.f32 %v1548, %v1568
  %v1573 = vadd.f32 %v1549, %v1569
  %v1574 = vadd.f32 %v1550, %v1570
  %v1575 = vadd.f32 %v1551, %v1571
  %v1576 = vadd.f32 %v1572, %v1467
  %v1577 = vadd.f32 %v1573, %v1467
  %v1578 = vadd.f32 %v1574, %v1467
  %v1579 = vadd.f32 %v1575, %v1467
  %vm1580 = vcmp.ge.f32.partialorder %v1576, 1.0
  %vm1581 = vcmp.ge.f32.partialorder %v1577, 1.0
  %vm1582 = vcmp.ge.f32.partialorder %v1578, 1.0
  %vm1583 = vcmp.ge.f32.partialorder %v1579, 1.0
  %v1584 = vsel %vm1580, 1, 0
  %v1585 = vsel %vm1581, 1, 0
  %v1586 = vsel %vm1582, 1, 0
  %v1587 = vsel %vm1583, 1, 0
  %v1588 = vcvt.s32.f32 %v1584
  %v1589 = vcvt.s32.f32 %v1585
  %v1590 = vcvt.s32.f32 %v1586
  %v1591 = vcvt.s32.f32 %v1587
  %1592 = vst [vmem:[#allocation2 + $0x60] sm:$0xff] %v1588
  %1593 = vst [vmem:[#allocation2 + $0x68] sm:$0xff] %v1589
  %1594 = vst [vmem:[#allocation2 + $0x70] sm:$0xff] %v1590
  %1595 = vst [vmem:[#allocation2 + $0x78] sm:$0xff] %v1591
  %v1596 = vld [vmem:[#allocation2] sm:$0xff]
  %v1597 = vld [vmem:[#allocation2 + $0x8] sm:$0xff]
  %v1598 = vld [vmem:[#allocation2 + $0x10] sm:$0xff]
  %v1599 = vld [vmem:[#allocation2 + $0x18] sm:$0xff]
  %v1600 = vld [vmem:[#allocation2 + $0x20] sm:$0xff]
  %v1601 = vld [vmem:[#allocation2 + $0x28] sm:$0xff]
  %v1602 = vld [vmem:[#allocation2 + $0x30] sm:$0xff]
  %v1603 = vld [vmem:[#allocation2 + $0x38] sm:$0xff]
  %v1604 = vld [vmem:[#allocation2 + $0x40] sm:$0xff]
  %v1605 = vld [vmem:[#allocation2 + $0x48] sm:$0xff]
  %v1606 = vld [vmem:[#allocation2 + $0x50] sm:$0xff]
  %v1607 = vld [vmem:[#allocation2 + $0x58] sm:$0xff]
  %v1608 = vld [vmem:[#allocation2 + $0x60] sm:$0xff]
  %v1609 = vld [vmem:[#allocation2 + $0x68] sm:$0xff]
  %v1610 = vld [vmem:[#allocation2 + $0x70] sm:$0xff]
  %v1611 = vld [vmem:[#allocation2 + $0x78] sm:$0xff]
  %v1612 = vpack.c.bf16 %v1597, %v1596
  %v1613 = vpack.c.bf16 %v1599, %v1598
  %v1614 = vpack.c.bf16 %v1601, %v1600
  %v1615 = vpack.c.bf16 %v1603, %v1602
  %v1616 = vpack.c.bf16 %v1605, %v1604
  %v1617 = vpack.c.bf16 %v1607, %v1606
  %v1618 = vpack.c.bf16 %v1609, %v1608
  %v1619 = vpack.c.bf16 %v1611, %v1610
  %v1620 = vld [vmem:[%s8] sm:$0xf]
  %v1621 = vld [vmem:[%s8 + $0x4] sm:$0xf]
  %v1622 = vld [vmem:[%s8 + $0x8] sm:$0xf]
  %v1623 = vld [vmem:[%s8 + $0xc] sm:$0xf]
  %v1624 = vld [vmem:[%s8 + $0x10] sm:$0xf]
  %v1625 = vld [vmem:[%s8 + $0x14] sm:$0xf]
  %v1626 = vld [vmem:[%s8 + $0x18] sm:$0xf]
  %v1627 = vld [vmem:[%s8 + $0x1c] sm:$0xf]
  %v1636 = vunpack.c.l.b16 %v1620
  %v1637 = vunpack.c.l.b16 %v1621
  %v1638 = vunpack.c.l.b16 %v1622
  %v1639 = vunpack.c.l.b16 %v1623
  %v1640 = vunpack.c.l.b16 %v1624
  %v1641 = vunpack.c.l.b16 %v1625
  %v1642 = vunpack.c.l.b16 %v1626
  %v1643 = vunpack.c.l.b16 %v1627
  %v1644 = vpack.c.b16 %v1637, %v1636
  %v1645 = vpack.c.b16 %v1639, %v1638
  %v1646 = vpack.c.b16 %v1641, %v1640
  %v1647 = vpack.c.b16 %v1643, %v1642
  %1652 = vmatprep.subr.bf16.mxu0 0
  %1653 = vmatpush1.bf16.msra.mxu0 %v1612
  %1654 = vmatprep.subr.bf16.mxu0 0
  %1655 = vmatpush1.bf16.msra.mxu0 %v1613
  %1656 = vmatprep.subr.bf16.mxu0 0
  %1657 = vmatpush1.bf16.msra.mxu0 %v1614
  %1658 = vmatprep.subr.bf16.mxu0 0
  %1659 = vmatpush1.bf16.msra.mxu0 %v1615
  %1660 = vmatprep.subr.bf16.mxu0 0
  %1661 = vmatpush1.bf16.msra.mxu0 %v1616
  %1662 = vmatprep.subr.bf16.mxu0 0
  %1663 = vmatpush1.bf16.msra.mxu0 %v1617
  %1664 = vmatprep.subr.bf16.mxu0 0
  %1665 = vmatpush1.bf16.msra.mxu0 %v1618
  %1666 = vmatprep.subr.bf16.mxu0 0
  %1667 = vmatpush1.bf16.msra.mxu0 %v1619
  %1668 = vmatprep.subr.bf16.mxu0 0
  %1669 = vmatpush1.bf16.msra.mxu0 0
  %1670 = vmatprep.subr.bf16.mxu0 0
  %1671 = vmatpush1.bf16.msra.mxu0 0
  %1672 = vmatprep.subr.bf16.mxu0 0
  %1673 = vmatpush1.bf16.msra.mxu0 0
  %1674 = vmatprep.subr.bf16.mxu0 0
  %1675 = vmatpush1.bf16.msra.mxu0 0
  %1676 = vmatprep.subr.bf16.mxu0 0
  %1677 = vmatpush1.bf16.msra.mxu0 0
  %1678 = vmatprep.subr.bf16.mxu0 0
  %1679 = vmatpush1.bf16.msra.mxu0 0
  %1680 = vmatprep.subr.bf16.mxu0 0
  %1681 = vmatpush1.bf16.msra.mxu0 0
  %1682 = vmatprep.subr.bf16.mxu0 0
  %1683 = vmatpush1.bf16.msra.mxu0 0
  %1684 = vmatprep.mubr.bf16.mxu0 0
  %1685 = vmatmul.mubr.bf16.gmra.mrb[0].mxu0 %v1644
  %v1686 = vpop.f32.mrb[0].mxu0
  %v1687 = vadd.f32 0.0, %v1686
  %v1688 = vpop.f32.mrb[0].mxu0
  %v1689 = vpop.f32.mrb[0].mxu0
  %v1690 = vadd.f32 0.0, %v1689
  %v1691 = vpop.f32.mrb[0].mxu0
  %1692 = vmatprep.mubr.bf16.mxu0 0
  %1693 = vmatmul.mubr.bf16.gmra.mrb[0].mxu0 %v1645
  %v1694 = vpop.f32.mrb[0].mxu0
  %v1695 = vadd.f32 0.0, %v1694
  %v1696 = vpop.f32.mrb[0].mxu0
  %v1697 = vpop.f32.mrb[0].mxu0
  %v1698 = vadd.f32 0.0, %v1697
  %v1699 = vpop.f32.mrb[0].mxu0
  %1700 = vmatprep.mubr.bf16.mxu0 0
  %1701 = vmatmul.mubr.bf16.gmra.mrb[0].mxu0 %v1646
  %v1702 = vpop.f32.mrb[0].mxu0
  %v1703 = vadd.f32 0.0, %v1702
  %v1704 = vpop.f32.mrb[0].mxu0
  %v1705 = vpop.f32.mrb[0].mxu0
  %v1706 = vadd.f32 0.0, %v1705
  %v1707 = vpop.f32.mrb[0].mxu0
  %1708 = vmatprep.mubr.bf16.mxu0 0
  %1709 = vmatmul.mubr.bf16.gmra.mrb[0].mxu0 %v1647
  %v1710 = vpop.f32.mrb[0].mxu0
  %v1711 = vadd.f32 0.0, %v1710
  %v1712 = vpop.f32.mrb[0].mxu0
  %v1713 = vpop.f32.mrb[0].mxu0
  %v1714 = vadd.f32 0.0, %v1713
  %v1715 = vpop.f32.mrb[0].mxu0
  %1716 = vdwg.mxu0
  %v1717 = vpack.c.bf16 %v1690, %v1687
  %v1718 = vpack.c.bf16 %v1698, %v1695
  %v1719 = vpack.c.bf16 %v1706, %v1703
  %v1720 = vpack.c.bf16 %v1714, %v1711
  %v1721 = vld [vmem:[%s9] sm:$0xf]
  %v1722 = vld [vmem:[%s9 + $0x4] sm:$0xf]
  %v1723 = vld [vmem:[%s9 + $0x8] sm:$0xf]
  %v1724 = vld [vmem:[%s9 + $0xc] sm:$0xf]
  %v1725 = vld [vmem:[%s9 + $0x10] sm:$0xf]
  %v1726 = vld [vmem:[%s9 + $0x14] sm:$0xf]
  %v1727 = vld [vmem:[%s9 + $0x18] sm:$0xf]
  %v1728 = vld [vmem:[%s9 + $0x1c] sm:$0xf]
  %v1729 = vld [vmem:[%s9 + $0x20] sm:$0xf]
  %v1730 = vld [vmem:[%s9 + $0x24] sm:$0xf]
  %v1731 = vld [vmem:[%s9 + $0x28] sm:$0xf]
  %v1732 = vld [vmem:[%s9 + $0x2c] sm:$0xf]
  %v1733 = vld [vmem:[%s9 + $0x30] sm:$0xf]
  %v1734 = vld [vmem:[%s9 + $0x34] sm:$0xf]
  %v1735 = vld [vmem:[%s9 + $0x38] sm:$0xf]
  %v1736 = vld [vmem:[%s9 + $0x3c] sm:$0xf]
  %v1753 = vunpack.c.l.b16 %v1721
  %v1754 = vunpack.c.l.b16 %v1722
  %v1755 = vunpack.c.l.b16 %v1723
  %v1756 = vunpack.c.l.b16 %v1724
  %v1757 = vunpack.c.l.b16 %v1725
  %v1758 = vunpack.c.l.b16 %v1726
  %v1759 = vunpack.c.l.b16 %v1727
  %v1760 = vunpack.c.l.b16 %v1728
  %v1761 = vunpack.c.l.b16 %v1729
  %v1762 = vunpack.c.l.b16 %v1730
  %v1763 = vunpack.c.l.b16 %v1731
  %v1764 = vunpack.c.l.b16 %v1732
  %v1765 = vunpack.c.l.b16 %v1733
  %v1766 = vunpack.c.l.b16 %v1734
  %v1767 = vunpack.c.l.b16 %v1735
  %v1768 = vunpack.c.l.b16 %v1736
  %v1769 = vpack.c.b16 %v1754, %v1753
  %v1770 = vpack.c.b16 %v1756, %v1755
  %v1771 = vpack.c.b16 %v1758, %v1757
  %v1772 = vpack.c.b16 %v1760, %v1759
  %v1773 = vpack.c.b16 %v1762, %v1761
  %v1774 = vpack.c.b16 %v1764, %v1763
  %v1775 = vpack.c.b16 %v1766, %v1765
  %v1776 = vpack.c.b16 %v1768, %v1767
  %1785 = vmatprep.subr.bf16.mxu0 0
  %1786 = vmatpush1.bf16.msra.mxu0 %v1769
  %1787 = vmatprep.subr.bf16.mxu0 0
  %1788 = vmatpush1.bf16.msra.mxu0 %v1770
  %1789 = vmatprep.subr.bf16.mxu0 0
  %1790 = vmatpush1.bf16.msra.mxu0 %v1771
  %1791 = vmatprep.subr.bf16.mxu0 0
  %1792 = vmatpush1.bf16.msra.mxu0 %v1772
  %1793 = vmatprep.subr.bf16.mxu0 0
  %1794 = vmatpush1.bf16.msra.mxu0 %v1773
  %1795 = vmatprep.subr.bf16.mxu0 0
  %1796 = vmatpush1.bf16.msra.mxu0 %v1774
  %1797 = vmatprep.subr.bf16.mxu0 0
  %1798 = vmatpush1.bf16.msra.mxu0 %v1775
  %1799 = vmatprep.subr.bf16.mxu0 0
  %1800 = vmatpush1.bf16.msra.mxu0 %v1776
  %1801 = vmatprep.subr.bf16.mxu0 0
  %1802 = vmatpush1.bf16.msra.mxu0 0
  %1803 = vmatprep.subr.bf16.mxu0 0
  %1804 = vmatpush1.bf16.msra.mxu0 0
  %1805 = vmatprep.subr.bf16.mxu0 0
  %1806 = vmatpush1.bf16.msra.mxu0 0
  %1807 = vmatprep.subr.bf16.mxu0 0
  %1808 = vmatpush1.bf16.msra.mxu0 0
  %1809 = vmatprep.subr.bf16.mxu0 0
  %1810 = vmatpush1.bf16.msra.mxu0 0
  %1811 = vmatprep.subr.bf16.mxu0 0
  %1812 = vmatpush1.bf16.msra.mxu0 0
  %1813 = vmatprep.subr.bf16.mxu0 0
  %1814 = vmatpush1.bf16.msra.mxu0 0
  %1815 = vmatprep.subr.bf16.mxu0 0
  %1816 = vmatpush1.bf16.msra.mxu0 0
  %1817 = vmatprep.mubr.bf16.mxu0 0
  %1818 = vmatmul.mubr.bf16.gmra.mrb[0].mxu0 %v1717
  %v1819 = vpop.f32.mrb[0].mxu0
  %v1820 = vadd.f32 0.0, %v1819
  %v1821 = vpop.f32.mrb[0].mxu0
  %v1822 = vpop.f32.mrb[0].mxu0
  %v1823 = vadd.f32 0.0, %v1822
  %v1824 = vpop.f32.mrb[0].mxu0
  %1825 = vmatprep.mubr.bf16.mxu0 0
  %1826 = vmatmul.mubr.bf16.gmra.mrb[0].mxu0 %v1718
  %v1827 = vpop.f32.mrb[0].mxu0
  %v1828 = vadd.f32 0.0, %v1827
  %v1829 = vpop.f32.mrb[0].mxu0
  %v1830 = vpop.f32.mrb[0].mxu0
  %v1831 = vadd.f32 0.0, %v1830
  %v1832 = vpop.f32.mrb[0].mxu0
  %1833 = vmatprep.mubr.bf16.mxu0 0
  %1834 = vmatmul.mubr.bf16.gmra.mrb[0].mxu0 %v1719
  %v1835 = vpop.f32.mrb[0].mxu0
  %v1836 = vadd.f32 0.0, %v1835
  %v1837 = vpop.f32.mrb[0].mxu0
  %v1838 = vpop.f32.mrb[0].mxu0
  %v1839 = vadd.f32 0.0, %v1838
  %v1840 = vpop.f32.mrb[0].mxu0
  %1841 = vmatprep.mubr.bf16.mxu0 0
  %1842 = vmatmul.mubr.bf16.gmra.mrb[0].mxu0 %v1720
  %v1843 = vpop.f32.mrb[0].mxu0
  %v1844 = vadd.f32 0.0, %v1843
  %v1845 = vpop.f32.mrb[0].mxu0
  %v1846 = vpop.f32.mrb[0].mxu0
  %v1847 = vadd.f32 0.0, %v1846
  %v1848 = vpop.f32.mrb[0].mxu0
  %1849 = vdwg.mxu0
  %vm1850 = vcmp.ge.f32.partialorder %v1820, 0.5
  %vm1851 = vcmp.ge.f32.partialorder %v1823, 0.5
  %vm1852 = vcmp.ge.f32.partialorder %v1828, 0.5
  %vm1853 = vcmp.ge.f32.partialorder %v1831, 0.5
  %vm1854 = vcmp.ge.f32.partialorder %v1836, 0.5
  %vm1855 = vcmp.ge.f32.partialorder %v1839, 0.5
  %vm1856 = vcmp.ge.f32.partialorder %v1844, 0.5
  %vm1857 = vcmp.ge.f32.partialorder %v1847, 0.5
  %v1858 = vsel %vm1850, 1, 0
  %v1859 = vsel %vm1851, 1, 0
  %v1860 = vsel %vm1852, 1, 0
  %v1861 = vsel %vm1853, 1, 0
  %v1862 = vsel %vm1854, 1, 0
  %v1863 = vsel %vm1855, 1, 0
  %v1864 = vsel %vm1856, 1, 0
  %v1865 = vsel %vm1857, 1, 0
  %v1866 = vcvt.s32.f32 %v1858
  %v1867 = vcvt.s32.f32 %v1859
  %v1868 = vcvt.s32.f32 %v1860
  %v1869 = vcvt.s32.f32 %v1861
  %v1870 = vcvt.s32.f32 %v1862
  %v1871 = vcvt.s32.f32 %v1863
  %v1872 = vcvt.s32.f32 %v1864
  %v1873 = vcvt.s32.f32 %v1865
  %1874 = vst.msk [vmem:[%s10] sm:$0xff] %vm439, %v1866
  %1875 = vst.msk [vmem:[%s10 + $0x8] sm:$0xff] %vm439, %v1867
  %1876 = vst.msk [vmem:[%s10 + $0x10] sm:$0xff] %vm439, %v1868
  %1877 = vst.msk [vmem:[%s10 + $0x18] sm:$0xff] %vm439, %v1869
  %1878 = vst.msk [vmem:[%s10 + $0x20] sm:$0xff] %vm439, %v1870
  %1879 = vst.msk [vmem:[%s10 + $0x28] sm:$0xff] %vm439, %v1871
  %1880 = vst.msk [vmem:[%s10 + $0x30] sm:$0xff] %vm439, %v1872
  %1881 = vst.msk [vmem:[%s10 + $0x38] sm:$0xff] %vm439, %v1873
  // Predicated region
  $region42: #{spiking_conv_encoder.4} parent=0 // pred_check
    _
  $region43: #{spiking_conv_encoder.4} parent=0 // pred_check_branch
    %1883 = sbr.rel (0) target = $region45
  $region44: #{spiking_conv_encoder.4} parent=0 // pred_region
    _
  $region45: #{spiking_conv_encoder.4} parent=0 // pred_fallthru
    _
  // Predicated region
  $region46: #{spiking_conv_encoder.4} parent=0 // pred_check
    _
  $region47: #{spiking_conv_encoder.4} parent=0 // pred_check_branch
    %1885 = sbr.rel (0) target = $region49
  $region48: #{spiking_conv_encoder.4} parent=0 // pred_region
    _
  $region49: #{spiking_conv_encoder.4} parent=0 // pred_fallthru
    _

// kernel: spiking_conv_encoder.5
$region0: #{spiking_conv_encoder.5}
  #allocation0 [shape = 'u32[]', space=smem, size = 0x4, offset = 0x4, fixed_abs, tag = 'smem constant byte address 0x4 - core index']
  #allocation1 [shape = 'u32[144,128]{1,0:T(1,128)}', space=vmem, size = 0x12000, scoped, tag = 'internal scratch']
  #allocation2 [shape = 'f32[64,128]{1,0:T(8,128)}', space=vmem, size = 0x8000, scoped, tag = 'scratch operand']
  %s0 = inlined_call_operand.vmem [shape: f32[64,64], index: 0, kind: input, shape index: {}]
  %s1 = inlined_call_operand.vmem [shape: bf16[3,64,128], index: 1, kind: input, shape index: {}]
  %s2 = inlined_call_operand.vmem [shape: bf16[64,64], index: 2, kind: input, shape index: {}]
  %s3 = inlined_call_operand.vmem [shape: bf16[64,64], index: 3, kind: input, shape index: {}]
  %s4 = inlined_call_operand.vmem [shape: f32[1,16], index: 4, kind: input, shape index: {}]
  %s5 = inlined_call_operand.vmem [shape: f32[1,16], index: 5, kind: input, shape index: {}]
  %s6 = inlined_call_operand.vmem [shape: f32[128,16], index: 6, kind: input, shape index: {}]
  %s7 = inlined_call_operand.vmem [shape: f32[16,128], index: 7, kind: input, shape index: {}]
  %s8 = inlined_call_operand.vmem [shape: bf16[32,64], index: 8, kind: input, shape index: {}]
  %s9 = inlined_call_operand.vmem [shape: bf16[128,64], index: 9, kind: input, shape index: {}]
  %s10 = inlined_call_operand.vmem [shape: f32[32,64], index: 10, kind: output, shape index: {}]
  %s11 = sld [smem:[#allocation0]]
  $region50: #{spiking_conv_encoder.5} parent=0
    _
  %s13 = ssub.s32 1, %s11
  %s14 = scalar_select 0, %s13, %s11
  // Predicated region
  $region2: #{spiking_conv_encoder.5} parent=0 // pred_check
    _
  $region3: #{spiking_conv_encoder.5} parent=0 // pred_check_branch
    %16 = sbr.rel (0) target = $region5
  $region4: #{spiking_conv_encoder.5} parent=0 // pred_region
    _
  $region5: #{spiking_conv_encoder.5} parent=0 // pred_fallthru
    _
  // Predicated region
  $region6: #{spiking_conv_encoder.5} parent=0 // pred_check
    _
  $region7: #{spiking_conv_encoder.5} parent=0 // pred_check_branch
    %18 = sbr.rel (0) target = $region9
  $region8: #{spiking_conv_encoder.5} parent=0 // pred_region
    _
  $region9: #{spiking_conv_encoder.5} parent=0 // pred_fallthru
    _
  // Predicated region
  $region10: #{spiking_conv_encoder.5} parent=0 // pred_check
    _
  $region11: #{spiking_conv_encoder.5} parent=0 // pred_check_branch
    %20 = sbr.rel (0) target = $region13
  $region12: #{spiking_conv_encoder.5} parent=0 // pred_region
    _
  $region13: #{spiking_conv_encoder.5} parent=0 // pred_fallthru
    _
  // Predicated region
  $region14: #{spiking_conv_encoder.5} parent=0 // pred_check
    _
  $region15: #{spiking_conv_encoder.5} parent=0 // pred_check_branch
    %22 = sbr.rel (0) target = $region17
  $region16: #{spiking_conv_encoder.5} parent=0 // pred_region
    _
  $region17: #{spiking_conv_encoder.5} parent=0 // pred_fallthru
    _
  // Predicated region
  $region18: #{spiking_conv_encoder.5} parent=0 // pred_check
    _
  $region19: #{spiking_conv_encoder.5} parent=0 // pred_check_branch
    %24 = sbr.rel (0) target = $region21
  $region20: #{spiking_conv_encoder.5} parent=0 // pred_region
    _
  $region21: #{spiking_conv_encoder.5} parent=0 // pred_fallthru
    _
  // Predicated region
  $region22: #{spiking_conv_encoder.5} parent=0 // pred_check
    _
  $region23: #{spiking_conv_encoder.5} parent=0 // pred_check_branch
    %26 = sbr.rel (0) target = $region25
  $region24: #{spiking_conv_encoder.5} parent=0 // pred_region
    _
  $region25: #{spiking_conv_encoder.5} parent=0 // pred_fallthru
    _
  // Predicated region
  $region26: #{spiking_conv_encoder.5} parent=0 // pred_check
    _
  $region27: #{spiking_conv_encoder.5} parent=0 // pred_check_branch
    %28 = sbr.rel (0) target = $region29
  $region28: #{spiking_conv_encoder.5} parent=0 // pred_region
    _
  $region29: #{spiking_conv_encoder.5} parent=0 // pred_fallthru
    _
  // Predicated region
  $region30: #{spiking_conv_encoder.5} parent=0 // pred_check
    _
  $region31: #{spiking_conv_encoder.5} parent=0 // pred_check_branch
    %30 = sbr.rel (0) target = $region33
  $region32: #{spiking_conv_encoder.5} parent=0 // pred_region
    _
  $region33: #{spiking_conv_encoder.5} parent=0 // pred_fallthru
    _
  // Predicated region
  $region34: #{spiking_conv_encoder.5} parent=0 // pred_check
    _
  $region35: #{spiking_conv_encoder.5} parent=0 // pred_check_branch
    %32 = sbr.rel (0) target = $region37
  $region36: #{spiking_conv_encoder.5} parent=0 // pred_region
    _
  $region37: #{spiking_conv_encoder.5} parent=0 // pred_fallthru
    _
  // Predicated region
  $region38: #{spiking_conv_encoder.5} parent=0 // pred_check
    _
  $region39: #{spiking_conv_encoder.5} parent=0 // pred_check_branch
    %34 = sbr.rel (0) target = $region41
  $region40: #{spiking_conv_encoder.5} parent=0 // pred_region
    _
  $region41: #{spiking_conv_encoder.5} parent=0 // pred_fallthru
    _
  %v36 = vld [vmem:[%s0] sm:$0xff]
  %v37 = vld [vmem:[%s0 + $0x8] sm:$0xff]
  %v38 = vld [vmem:[%s0 + $0x10] sm:$0xff]
  %v39 = vld [vmem:[%s0 + $0x18] sm:$0xff]
  %v40 = vld [vmem:[%s0 + $0x20] sm:$0xff]
  %v41 = vld [vmem:[%s0 + $0x28] sm:$0xff]
  %v42 = vld [vmem:[%s0 + $0x30] sm:$0xff]
  %v43 = vld [vmem:[%s0 + $0x38] sm:$0xff]
  %v44 = vpack.c.bf16 %v37, %v36
  %v45 = vpack.c.bf16 %v39, %v38
  %v46 = vpack.c.bf16 %v41, %v40
  %v47 = vpack.c.bf16 %v43, %v42
  %v48 = vld [vmem:[%s2] sm:$0xf]
  %v49 = vld [vmem:[%s2 + $0x4] sm:$0xf]
  %v50 = vld [vmem:[%s2 + $0x8] sm:$0xf]
  %v51 = vld [vmem:[%s2 + $0xc] sm:$0xf]
  %v52 = vld [vmem:[%s2 + $0x10] sm:$0xf]
  %v53 = vld [vmem:[%s2 + $0x14] sm:$0xf]
  %v54 = vld [vmem:[%s2 + $0x18] sm:$0xf]
  %v55 = vld [vmem:[%s2 + $0x1c] sm:$0xf]
  %v64 = vunpack.c.l.b16 %v48
  %v65 = vunpack.c.l.b16 %v49
  %v66 = vunpack.c.l.b16 %v50
  %v67 = vunpack.c.l.b16 %v51
  %v68 = vunpack.c.l.b16 %v52
  %v69 = vunpack.c.l.b16 %v53
  %v70 = vunpack.c.l.b16 %v54
  %v71 = vunpack.c.l.b16 %v55
  %v72 = vpack.c.b16 %v65, %v64
  %v73 = vpack.c.b16 %v67, %v66
  %v74 = vpack.c.b16 %v69, %v68
  %v75 = vpack.c.b16 %v71, %v70
  %vm76 = vcmask 523264
  %v78 = vsel %vm76, %v72, 0
  %v81 = vsel %vm76, %v73, 0
  %v84 = vsel %vm76, %v74, 0
  %v87 = vsel %vm76, %v75, 0
  %89 = vmatprep.subr.bf16.mxu0 0
  %90 = vmatpush1.bf16.msra.mxu0 %v44
  %91 = vmatprep.subr.bf16.mxu0 0
  %92 = vmatpush1.bf16.msra.mxu0 %v45
  %93 = vmatprep.subr.bf16.mxu0 0
  %94 = vmatpush1.bf16.msra.mxu0 %v46
  %95 = vmatprep.subr.bf16.mxu0 0
  %96 = vmatpush1.bf16.msra.mxu0 %v47
  %97 = vmatprep.subr.bf16.mxu0 0
  %98 = vmatpush1.bf16.msra.mxu0 0
  %99 = vmatprep.subr.bf16.mxu0 0
  %100 = vmatpush1.bf16.msra.mxu0 0
  %101 = vmatprep.subr.bf16.mxu0 0
  %102 = vmatpush1.bf16.msra.mxu0 0
  %103 = vmatprep.subr.bf16.mxu0 0
  %104 = vmatpush1.bf16.msra.mxu0 0
  %105 = vmatprep.subr.bf16.mxu0 0
  %106 = vmatpush1.bf16.msra.mxu0 0
  %107 = vmatprep.subr.bf16.mxu0 0
  %108 = vmatpush1.bf16.msra.mxu0 0
  %109 = vmatprep.subr.bf16.mxu0 0
  %110 = vmatpush1.bf16.msra.mxu0 0
  %111 = vmatprep.subr.bf16.mxu0 0
  %112 = vmatpush1.bf16.msra.mxu0 0
  %113 = vmatprep.subr.bf16.mxu0 0
  %114 = vmatpush1.bf16.msra.mxu0 0
  %115 = vmatprep.subr.bf16.mxu0 0
  %116 = vmatpush1.bf16.msra.mxu0 0
  %117 = vmatprep.subr.bf16.mxu0 0
  %118 = vmatpush1.bf16.msra.mxu0 0
  %119 = vmatprep.subr.bf16.mxu0 0
  %120 = vmatpush1.bf16.msra.mxu0 0
  %121 = vmatprep.mubr.bf16.mxu0 0
  %122 = vmatmul.mubr.bf16.gmra.mrb[0].mxu0 %v78
  %v123 = vpop.f32.mrb[0].mxu0
  %v124 = vadd.f32 0.0, %v123
  %v125 = vpop.f32.mrb[0].mxu0
  %v126 = vpop.f32.mrb[0].mxu0
  %v127 = vadd.f32 0.0, %v126
  %v128 = vpop.f32.mrb[0].mxu0
  %129 = vmatprep.mubr.bf16.mxu0 0
  %130 = vmatmul.mubr.bf16.gmra.mrb[0].mxu0 %v81
  %v131 = vpop.f32.mrb[0].mxu0
  %v132 = vadd.f32 0.0, %v131
  %v133 = vpop.f32.mrb[0].mxu0
  %v134 = vpop.f32.mrb[0].mxu0
  %v135 = vadd.f32 0.0, %v134
  %v136 = vpop.f32.mrb[0].mxu0
  %137 = vmatprep.mubr.bf16.mxu0 0
  %138 = vmatmul.mubr.bf16.gmra.mrb[0].mxu0 %v84
  %v139 = vpop.f32.mrb[0].mxu0
  %v140 = vadd.f32 0.0, %v139
  %v141 = vpop.f32.mrb[0].mxu0
  %v142 = vpop.f32.mrb[0].mxu0
  %v143 = vadd.f32 0.0, %v142
  %v144 = vpop.f32.mrb[0].mxu0
  %145 = vmatprep.mubr.bf16.mxu0 0
  %146 = vmatmul.mubr.bf16.gmra.mrb[0].mxu0 %v87
  %v147 = vpop.f32.mrb[0].mxu0
  %v148 = vadd.f32 0.0, %v147
  %v149 = vpop.f32.mrb[0].mxu0
  %v150 = vpop.f32.mrb[0].mxu0
  %v151 = vadd.f32 0.0, %v150
  %v152 = vpop.f32.mrb[0].mxu0
  %153 = vdwg.mxu0
  %v154 = vpack.c.bf16 %v127, %v124
  %v155 = vpack.c.bf16 %v135, %v132
  %v156 = vpack.c.bf16 %v143, %v140
  %v157 = vpack.c.bf16 %v151, %v148
  %v158 = vld [vmem:[%s3] sm:$0xf]
  %v159 = vld [vmem:[%s3 + $0x4] sm:$0xf]
  %v160 = vld [vmem:[%s3 + $0x8] sm:$0xf]
  %v161 = vld [vmem:[%s3 + $0xc] sm:$0xf]
  %v162 = vld [vmem:[%s3 + $0x10] sm:$0xf]
  %v163 = vld [vmem:[%s3 + $0x14] sm:$0xf]
  %v164 = vld [vmem:[%s3 + $0x18] sm:$0xf]
  %v165 = vld [vmem:[%s3 + $0x1c] sm:$0xf]
  %v174 = vunpack.c.l.b16 %v158
  %v175 = vunpack.c.l.b16 %v159
  %v176 = vunpack.c.l.b16 %v160
  %v177 = vunpack.c.l.b16 %v161
  %v178 = vunpack.c.l.b16 %v162
  %v179 = vunpack.c.l.b16 %v163
  %v180 = vunpack.c.l.b16 %v164
  %v181 = vunpack.c.l.b16 %v165
  %v182 = vpack.c.b16 %v175, %v174
  %v183 = vpack.c.b16 %v177, %v176
  %v184 = vpack.c.b16 %v179, %v178
  %v185 = vpack.c.b16 %v181, %v180
  %v187 = vsel %vm76, %v182, 0
  %v190 = vsel %vm76, %v183, 0
  %v193 = vsel %vm76, %v184, 0
  %v196 = vsel %vm76, %v185, 0
  %198 = vmatprep.subr.bf16.mxu0 0
  %199 = vmatpush1.bf16.msra.mxu0 %v44
  %200 = vmatprep.subr.bf16.mxu0 0
  %201 = vmatpush1.bf16.msra.mxu0 %v45
  %202 = vmatprep.subr.bf16.mxu0 0
  %203 = vmatpush1.bf16.msra.mxu0 %v46
  %204 = vmatprep.subr.bf16.mxu0 0
  %205 = vmatpush1.bf16.msra.mxu0 %v47
  %206 = vmatprep.subr.bf16.mxu0 0
  %207 = vmatpush1.bf16.msra.mxu0 0
  %208 = vmatprep.subr.bf16.mxu0 0
  %209 = vmatpush1.bf16.msra.mxu0 0
  %210 = vmatprep.subr.bf16.mxu0 0
  %211 = vmatpush1.bf16.msra.mxu0 0
  %212 = vmatprep.subr.bf16.mxu0 0
  %213 = vmatpush1.bf16.msra.mxu0 0
  %214 = vmatprep.subr.bf16.mxu0 0
  %215 = vmatpush1.bf16.msra.mxu0 0
  %216 = vmatprep.subr.bf16.mxu0 0
  %217 = vmatpush1.bf16.msra.mxu0 0
  %218 = vmatprep.subr.bf16.mxu0 0
  %219 = vmatpush1.bf16.msra.mxu0 0
  %220 = vmatprep.subr.bf16.mxu0 0
  %221 = vmatpush1.bf16.msra.mxu0 0
  %222 = vmatprep.subr.bf16.mxu0 0
  %223 = vmatpush1.bf16.msra.mxu0 0
  %224 = vmatprep.subr.bf16.mxu0 0
  %225 = vmatpush1.bf16.msra.mxu0 0
  %226 = vmatprep.subr.bf16.mxu0 0
  %227 = vmatpush1.bf16.msra.mxu0 0
  %228 = vmatprep.subr.bf16.mxu0 0
  %229 = vmatpush1.bf16.msra.mxu0 0
  %230 = vmatprep.mubr.bf16.mxu0 0
  %231 = vmatmul.mubr.bf16.gmra.mrb[0].mxu0 %v187
  %v232 = vpop.f32.mrb[0].mxu0
  %v233 = vadd.f32 0.0, %v232
  %v234 = vpop.f32.mrb[0].mxu0
  %v235 = vpop.f32.mrb[0].mxu0
  %v236 = vadd.f32 0.0, %v235
  %v237 = vpop.f32.mrb[0].mxu0
  %238 = vmatprep.mubr.bf16.mxu0 0
  %239 = vmatmul.mubr.bf16.gmra.mrb[0].mxu0 %v190
  %v240 = vpop.f32.mrb[0].mxu0
  %v241 = vadd.f32 0.0, %v240
  %v242 = vpop.f32.mrb[0].mxu0
  %v243 = vpop.f32.mrb[0].mxu0
  %v244 = vadd.f32 0.0, %v243
  %v245 = vpop.f32.mrb[0].mxu0
  %246 = vmatprep.mubr.bf16.mxu0 0
  %247 = vmatmul.mubr.bf16.gmra.mrb[0].mxu0 %v193
  %v248 = vpop.f32.mrb[0].mxu0
  %v249 = vadd.f32 0.0, %v248
  %v250 = vpop.f32.mrb[0].mxu0
  %v251 = vpop.f32.mrb[0].mxu0
  %v252 = vadd.f32 0.0, %v251
  %v253 = vpop.f32.mrb[0].mxu0
  %254 = vmatprep.mubr.bf16.mxu0 0
  %255 = vmatmul.mubr.bf16.gmra.mrb[0].mxu0 %v196
  %v256 = vpop.f32.mrb[0].mxu0
  %v257 = vadd.f32 0.0, %v256
  %v258 = vpop.f32.mrb[0].mxu0
  %v259 = vpop.f32.mrb[0].mxu0
  %v260 = vadd.f32 0.0, %v259
  %v261 = vpop.f32.mrb[0].mxu0
  %262 = vdwg.mxu0
  %v263 = vpack.c.bf16 %v236, %v233
  %v264 = vpack.c.bf16 %v244, %v241
  %v265 = vpack.c.bf16 %v252, %v249
  %v266 = vpack.c.bf16 %v260, %v257
  %s267 = scalar_lea.vmem %s1, 32
  %v268 = vld [vmem:[%s267] sm:$0xf]
  %v269 = vld [vmem:[%s267 + $0x4] sm:$0xf]
  %v270 = vld [vmem:[%s267 + $0x8] sm:$0xf]
  %v271 = vld [vmem:[%s267 + $0xc] sm:$0xf]
  %v272 = vld [vmem:[%s267 + $0x10] sm:$0xf]
  %v273 = vld [vmem:[%s267 + $0x14] sm:$0xf]
  %v274 = vld [vmem:[%s267 + $0x18] sm:$0xf]
  %v275 = vld [vmem:[%s267 + $0x1c] sm:$0xf]
  %v276 = vld [vmem:[%s1] sm:$0xf]
  %v277 = vld [vmem:[%s1 + $0x4] sm:$0xf]
  %v278 = vld [vmem:[%s1 + $0x8] sm:$0xf]
  %v279 = vld [vmem:[%s1 + $0xc] sm:$0xf]
  %v280 = vld [vmem:[%s1 + $0x10] sm:$0xf]
  %v281 = vld [vmem:[%s1 + $0x14] sm:$0xf]
  %v282 = vld [vmem:[%s1 + $0x18] sm:$0xf]
  %v283 = vld [vmem:[%s1 + $0x1c] sm:$0xf]
  %v292 = vunpack.c.l.b16 %v276
  %v293 = vunpack.c.l.b16 %v277
  %v294 = vunpack.c.l.b16 %v278
  %v295 = vunpack.c.l.b16 %v279
  %v296 = vunpack.c.l.b16 %v280
  %v297 = vunpack.c.l.b16 %v281
  %v298 = vunpack.c.l.b16 %v282
  %v299 = vunpack.c.l.b16 %v283
  %v300 = vpack.c.b16 %v293, %v292
  %v301 = vpack.c.b16 %v295, %v294
  %v302 = vpack.c.b16 %v297, %v296
  %v303 = vpack.c.b16 %v299, %v298
  %v309 = vsel %vm76, %v154, 0
  %v312 = vsel %vm76, %v155, 0
  %v315 = vsel %vm76, %v156, 0
  %v318 = vsel %vm76, %v157, 0
  %320 = vmatprep.subr.bf16.mxu0 0
  %321 = vmatpush1.bf16.msra.mxu0 %v300
  %322 = vmatprep.subr.bf16.mxu0 0
  %323 = vmatpush1.bf16.msra.mxu0 %v301
  %324 = vmatprep.subr.bf16.mxu0 0
  %325 = vmatpush1.bf16.msra.mxu0 %v302
  %326 = vmatprep.subr.bf16.mxu0 0
  %327 = vmatpush1.bf16.msra.mxu0 %v303
  %328 = vmatprep.subr.bf16.mxu0 0
  %329 = vmatpush1.bf16.msra.mxu0 0
  %330 = vmatprep.subr.bf16.mxu0 0
  %331 = vmatpush1.bf16.msra.mxu0 0
  %332 = vmatprep.subr.bf16.mxu0 0
  %333 = vmatpush1.bf16.msra.mxu0 0
  %334 = vmatprep.subr.bf16.mxu0 0
  %335 = vmatpush1.bf16.msra.mxu0 0
  %336 = vmatprep.subr.bf16.mxu0 0
  %337 = vmatpush1.bf16.msra.mxu0 0
  %338 = vmatprep.subr.bf16.mxu0 0
  %339 = vmatpush1.bf16.msra.mxu0 0
  %340 = vmatprep.subr.bf16.mxu0 0
  %341 = vmatpush1.bf16.msra.mxu0 0
  %342 = vmatprep.subr.bf16.mxu0 0
  %343 = vmatpush1.bf16.msra.mxu0 0
  %344 = vmatprep.subr.bf16.mxu0 0
  %345 = vmatpush1.bf16.msra.mxu0 0
  %346 = vmatprep.subr.bf16.mxu0 0
  %347 = vmatpush1.bf16.msra.mxu0 0
  %348 = vmatprep.subr.bf16.mxu0 0
  %349 = vmatpush1.bf16.msra.mxu0 0
  %350 = vmatprep.subr.bf16.mxu0 0
  %351 = vmatpush1.bf16.msra.mxu0 0
  %352 = vmatprep.mubr.bf16.mxu0 0
  %353 = vmatmul.mubr.bf16.gmra.mrb[0].mxu0 %v309
  %v354 = vpop.f32.mrb[0].mxu0
  %v355 = vadd.f32 0.0, %v354
  %v356 = vpop.f32.mrb[0].mxu0
  %v357 = vpop.f32.mrb[0].mxu0
  %v358 = vadd.f32 0.0, %v357
  %v359 = vpop.f32.mrb[0].mxu0
  %360 = vmatprep.mubr.bf16.mxu0 0
  %361 = vmatmul.mubr.bf16.gmra.mrb[0].mxu0 %v312
  %v362 = vpop.f32.mrb[0].mxu0
  %v363 = vadd.f32 0.0, %v362
  %v364 = vpop.f32.mrb[0].mxu0
  %v365 = vpop.f32.mrb[0].mxu0
  %v366 = vadd.f32 0.0, %v365
  %v367 = vpop.f32.mrb[0].mxu0
  %368 = vmatprep.mubr.bf16.mxu0 0
  %369 = vmatmul.mubr.bf16.gmra.mrb[0].mxu0 %v315
  %v370 = vpop.f32.mrb[0].mxu0
  %v371 = vadd.f32 0.0, %v370
  %v372 = vpop.f32.mrb[0].mxu0
  %v373 = vpop.f32.mrb[0].mxu0
  %v374 = vadd.f32 0.0, %v373
  %v375 = vpop.f32.mrb[0].mxu0
  %376 = vmatprep.mubr.bf16.mxu0 0
  %377 = vmatmul.mubr.bf16.gmra.mrb[0].mxu0 %v318
  %v378 = vpop.f32.mrb[0].mxu0
  %v379 = vadd.f32 0.0, %v378
  %v380 = vpop.f32.mrb[0].mxu0
  %v381 = vpop.f32.mrb[0].mxu0
  %v382 = vadd.f32 0.0, %v381
  %v383 = vpop.f32.mrb[0].mxu0
  %384 = vdwg.mxu0
  %v393 = vunpack.c.l.b16 %v268
  %v394 = vunpack.c.l.b16 %v269
  %v395 = vunpack.c.l.b16 %v270
  %v396 = vunpack.c.l.b16 %v271
  %v397 = vunpack.c.l.b16 %v272
  %v398 = vunpack.c.l.b16 %v273
  %v399 = vunpack.c.l.b16 %v274
  %v400 = vunpack.c.l.b16 %v275
  %v401 = vpack.c.b16 %v394, %v393
  %v402 = vpack.c.b16 %v396, %v395
  %v403 = vpack.c.b16 %v398, %v397
  %v404 = vpack.c.b16 %v400, %v399
  %v410 = vsel %vm76, %v44, 0
  %v413 = vsel %vm76, %v45, 0
  %v416 = vsel %vm76, %v46, 0
  %v419 = vsel %vm76, %v47, 0
  %421 = vmatprep.subr.bf16.mxu0 0
  %422 = vmatpush1.bf16.msra.mxu0 %v401
  %423 = vmatprep.subr.bf16.mxu0 0
  %424 = vmatpush1.bf16.msra.mxu0 %v402
  %425 = vmatprep.subr.bf16.mxu0 0
  %426 = vmatpush1.bf16.msra.mxu0 %v403
  %427 = vmatprep.subr.bf16.mxu0 0
  %428 = vmatpush1.bf16.msra.mxu0 %v404
  %429 = vmatprep.subr.bf16.mxu0 0
  %430 = vmatpush1.bf16.msra.mxu0 0
  %431 = vmatprep.subr.bf16.mxu0 0
  %432 = vmatpush1.bf16.msra.mxu0 0
  %433 = vmatprep.subr.bf16.mxu0 0
  %434 = vmatpush1.bf16.msra.mxu0 0
  %435 = vmatprep.subr.bf16.mxu0 0
  %436 = vmatpush1.bf16.msra.mxu0 0
  %437 = vmatprep.subr.bf16.mxu0 0
  %438 = vmatpush1.bf16.msra.mxu0 0
  %439 = vmatprep.subr.bf16.mxu0 0
  %440 = vmatpush1.bf16.msra.mxu0 0
  %441 = vmatprep.subr.bf16.mxu0 0
  %442 = vmatpush1.bf16.msra.mxu0 0
  %443 = vmatprep.subr.bf16.mxu0 0
  %444 = vmatpush1.bf16.msra.mxu0 0
  %445 = vmatprep.subr.bf16.mxu0 0
  %446 = vmatpush1.bf16.msra.mxu0 0
  %447 = vmatprep.subr.bf16.mxu0 0
  %448 = vmatpush1.bf16.msra.mxu0 0
  %449 = vmatprep.subr.bf16.mxu0 0
  %450 = vmatpush1.bf16.msra.mxu0 0
  %451 = vmatprep.subr.bf16.mxu0 0
  %452 = vmatpush1.bf16.msra.mxu0 0
  %453 = vmatprep.mubr.bf16.mxu0 0
  %454 = vmatmul.mubr.bf16.gmra.mrb[0].mxu0 %v410
  %v455 = vpop.f32.mrb[0].mxu0
  %v456 = vadd.f32 %v355, %v455
  %v457 = vpop.f32.mrb[0].mxu0
  %v458 = vpop.f32.mrb[0].mxu0
  %v459 = vadd.f32 %v358, %v458
  %v460 = vpop.f32.mrb[0].mxu0
  %461 = vmatprep.mubr.bf16.mxu0 0
  %462 = vmatmul.mubr.bf16.gmra.mrb[0].mxu0 %v413
  %v463 = vpop.f32.mrb[0].mxu0
  %v464 = vadd.f32 %v363, %v463
  %v465 = vpop.f32.mrb[0].mxu0
  %v466 = vpop.f32.mrb[0].mxu0
  %v467 = vadd.f32 %v366, %v466
  %v468 = vpop.f32.mrb[0].mxu0
  %469 = vmatprep.mubr.bf16.mxu0 0
  %470 = vmatmul.mubr.bf16.gmra.mrb[0].mxu0 %v416
  %v471 = vpop.f32.mrb[0].mxu0
  %v472 = vadd.f32 %v371, %v471
  %v473 = vpop.f32.mrb[0].mxu0
  %v474 = vpop.f32.mrb[0].mxu0
  %v475 = vadd.f32 %v374, %v474
  %v476 = vpop.f32.mrb[0].mxu0
  %477 = vmatprep.mubr.bf16.mxu0 0
  %478 = vmatmul.mubr.bf16.gmra.mrb[0].mxu0 %v419
  %v479 = vpop.f32.mrb[0].mxu0
  %v480 = vadd.f32 %v379, %v479
  %v481 = vpop.f32.mrb[0].mxu0
  %v482 = vpop.f32.mrb[0].mxu0
  %v483 = vadd.f32 %v382, %v482
  %v484 = vpop.f32.mrb[0].mxu0
  %485 = vdwg.mxu0
  %s486 = scalar_lea.vmem %s1, 64
  %v487 = vld [vmem:[%s486] sm:$0xf]
  %v488 = vld [vmem:[%s486 + $0x4] sm:$0xf]
  %v489 = vld [vmem:[%s486 + $0x8] sm:$0xf]
  %v490 = vld [vmem:[%s486 + $0xc] sm:$0xf]
  %v491 = vld [vmem:[%s486 + $0x10] sm:$0xf]
  %v492 = vld [vmem:[%s486 + $0x14] sm:$0xf]
  %v493 = vld [vmem:[%s486 + $0x18] sm:$0xf]
  %v494 = vld [vmem:[%s486 + $0x1c] sm:$0xf]
  %v503 = vunpack.c.l.b16 %v487
  %v504 = vunpack.c.l.b16 %v488
  %v505 = vunpack.c.l.b16 %v489
  %v506 = vunpack.c.l.b16 %v490
  %v507 = vunpack.c.l.b16 %v491
  %v508 = vunpack.c.l.b16 %v492
  %v509 = vunpack.c.l.b16 %v493
  %v510 = vunpack.c.l.b16 %v494
  %v511 = vpack.c.b16 %v504, %v503
  %v512 = vpack.c.b16 %v506, %v505
  %v513 = vpack.c.b16 %v508, %v507
  %v514 = vpack.c.b16 %v510, %v509
  %v520 = vsel %vm76, %v263, 0
  %v523 = vsel %vm76, %v264, 0
  %v526 = vsel %vm76, %v265, 0
  %v529 = vsel %vm76, %v266, 0
  %531 = vmatprep.subr.bf16.mxu0 0
  %532 = vmatpush1.bf16.msra.mxu0 %v511
  %533 = vmatprep.subr.bf16.mxu0 0
  %534 = vmatpush1.bf16.msra.mxu0 %v512
  %535 = vmatprep.subr.bf16.mxu0 0
  %536 = vmatpush1.bf16.msra.mxu0 %v513
  %537 = vmatprep.subr.bf16.mxu0 0
  %538 = vmatpush1.bf16.msra.mxu0 %v514
  %539 = vmatprep.subr.bf16.mxu0 0
  %540 = vmatpush1.bf16.msra.mxu0 0
  %541 = vmatprep.subr.bf16.mxu0 0
  %542 = vmatpush1.bf16.msra.mxu0 0
  %543 = vmatprep.subr.bf16.mxu0 0
  %544 = vmatpush1.bf16.msra.mxu0 0
  %545 = vmatprep.subr.bf16.mxu0 0
  %546 = vmatpush1.bf16.msra.mxu0 0
  %547 = vmatprep.subr.bf16.mxu0 0
  %548 = vmatpush1.bf16.msra.mxu0 0
  %549 = vmatprep.subr.bf16.mxu0 0
  %550 = vmatpush1.bf16.msra.mxu0 0
  %551 = vmatprep.subr.bf16.mxu0 0
  %552 = vmatpush1.bf16.msra.mxu0 0
  %553 = vmatprep.subr.bf16.mxu0 0
  %554 = vmatpush1.bf16.msra.mxu0 0
  %555 = vmatprep.subr.bf16.mxu0 0
  %556 = vmatpush1.bf16.msra.mxu0 0
  %557 = vmatprep.subr.bf16.mxu0 0
  %558 = vmatpush1.bf16.msra.mxu0 0
  %559 = vmatprep.subr.bf16.mxu0 0
  %560 = vmatpush1.bf16.msra.mxu0 0
  %561 = vmatprep.subr.bf16.mxu0 0
  %562 = vmatpush1.bf16.msra.mxu0 0
  %563 = vmatprep.mubr.bf16.mxu0 0
  %564 = vmatmul.mubr.bf16.gmra.mrb[0].mxu0 %v520
  %v565 = vpop.f32.mrb[0].mxu0
  %v566 = vadd.f32 0.0, %v565
  %v567 = vpop.f32.mrb[0].mxu0
  %v568 = vpop.f32.mrb[0].mxu0
  %v569 = vadd.f32 0.0, %v568
  %v570 = vpop.f32.mrb[0].mxu0
  %571 = vmatprep.mubr.bf16.mxu0 0
  %572 = vmatmul.mubr.bf16.gmra.mrb[0].mxu0 %v523
  %v573 = vpop.f32.mrb[0].mxu0
  %v574 = vadd.f32 0.0, %v573
  %v575 = vpop.f32.mrb[0].mxu0
  %v576 = vpop.f32.mrb[0].mxu0
  %v577 = vadd.f32 0.0, %v576
  %v578 = vpop.f32.mrb[0].mxu0
  %579 = vmatprep.mubr.bf16.mxu0 0
  %580 = vmatmul.mubr.bf16.gmra.mrb[0].mxu0 %v526
  %v581 = vpop.f32.mrb[0].mxu0
  %v582 = vadd.f32 0.0, %v581
  %v583 = vpop.f32.mrb[0].mxu0
  %v584 = vpop.f32.mrb[0].mxu0
  %v585 = vadd.f32 0.0, %v584
  %v586 = vpop.f32.mrb[0].mxu0
  %587 = vmatprep.mubr.bf16.mxu0 0
  %588 = vmatmul.mubr.bf16.gmra.mrb[0].mxu0 %v529
  %v589 = vpop.f32.mrb[0].mxu0
  %v590 = vadd.f32 0.0, %v589
  %v591 = vpop.f32.mrb[0].mxu0
  %v592 = vpop.f32.mrb[0].mxu0
  %v593 = vadd.f32 0.0, %v592
  %v594 = vpop.f32.mrb[0].mxu0
  %595 = vdwg.mxu0
  %v596 = vadd.f32 %v456, %v566
  %v597 = vadd.f32 %v459, %v569
  %v598 = vadd.f32 %v464, %v574
  %v599 = vadd.f32 %v467, %v577
  %v600 = vadd.f32 %v472, %v582
  %v601 = vadd.f32 %v475, %v585
  %v602 = vadd.f32 %v480, %v590
  %v603 = vadd.f32 %v483, %v593
  %604 = vst [vmem:[#allocation2] sm:$0xff] %v596
  %605 = vst [vmem:[#allocation2 + $0x8] sm:$0xff] %v597
  %606 = vst [vmem:[#allocation2 + $0x10] sm:$0xff] %v598
  %607 = vst [vmem:[#allocation2 + $0x18] sm:$0xff] %v599
  %608 = vst [vmem:[#allocation2 + $0x20] sm:$0xff] %v600
  %609 = vst [vmem:[#allocation2 + $0x28] sm:$0xff] %v601
  %610 = vst [vmem:[#allocation2 + $0x30] sm:$0xff] %v602
  %611 = vst [vmem:[#allocation2 + $0x38] sm:$0xff] %v603
  %v612 = vld [vmem:[%s6] sm:$0xff]
  %v613 = vld [vmem:[%s6 + $0x8] sm:$0xff]
  %v614 = vld [vmem:[%s6 + $0x10] sm:$0xff]
  %v615 = vld [vmem:[%s6 + $0x18] sm:$0xff]
  %v616 = vld [vmem:[%s6 + $0x20] sm:$0xff]
  %v617 = vld [vmem:[%s6 + $0x28] sm:$0xff]
  %v618 = vld [vmem:[%s6 + $0x30] sm:$0xff]
  %v619 = vld [vmem:[%s6 + $0x38] sm:$0xff]
  %v620 = vld [vmem:[%s6 + $0x40] sm:$0xff]
  %v621 = vld [vmem:[%s6 + $0x48] sm:$0xff]
  %v622 = vld [vmem:[%s6 + $0x50] sm:$0xff]
  %v623 = vld [vmem:[%s6 + $0x58] sm:$0xff]
  %v624 = vld [vmem:[%s6 + $0x60] sm:$0xff]
  %v625 = vld [vmem:[%s6 + $0x68] sm:$0xff]
  %v626 = vld [vmem:[%s6 + $0x70] sm:$0xff]
  %v627 = vld [vmem:[%s6 + $0x78] sm:$0xff]
  %628 = vmatprep.subr.mxu0 0.0
  %629 = vmatpush1.msra.mxu0 %v612
  %630 = vmatprep.subr.mxu0 0.0
  %631 = vmatpush1.msra.mxu0 %v613
  %632 = vmatprep.subr.mxu0 0.0
  %633 = vmatpush1.msra.mxu0 %v614
  %634 = vmatprep.subr.mxu0 0.0
  %635 = vmatpush1.msra.mxu0 %v615
  %636 = vmatprep.subr.mxu0 0.0
  %637 = vmatpush1.msra.mxu0 %v616
  %638 = vmatprep.subr.mxu0 0.0
  %639 = vmatpush1.msra.mxu0 %v617
  %640 = vmatprep.subr.mxu0 0.0
  %641 = vmatpush1.msra.mxu0 %v618
  %642 = vmatprep.subr.mxu0 0.0
  %643 = vmatpush1.msra.mxu0 %v619
  %644 = vmatprep.subr.mxu0 0.0
  %645 = vmatpush1.msra.mxu0 %v620
  %646 = vmatprep.subr.mxu0 0.0
  %647 = vmatpush1.msra.mxu0 %v621
  %648 = vmatprep.subr.mxu0 0.0
  %649 = vmatpush1.msra.mxu0 %v622
  %650 = vmatprep.subr.mxu0 0.0
  %651 = vmatpush1.msra.mxu0 %v623
  %652 = vmatprep.subr.mxu0 0.0
  %653 = vmatpush1.msra.mxu0 %v624
  %654 = vmatprep.subr.mxu0 0.0
  %655 = vmatpush1.msra.mxu0 %v625
  %656 = vmatprep.subr.mxu0 0.0
  %657 = vmatpush1.msra.mxu0 %v626
  %658 = vmatprep.subr.mxu0 0.0
  %659 = vmatpush1.msra.mxu0 %v627
  %660 = vmatprep.subr.mxu0 0.0
  %661 = vmatpush1.msra.mxu0 0.0
  %662 = vmatprep.subr.mxu0 0.0
  %663 = vmatpush1.msra.mxu0 0.0
  %664 = vmatprep.subr.mxu0 0.0
  %665 = vmatpush1.msra.mxu0 0.0
  %666 = vmatprep.subr.mxu0 0.0
  %667 = vmatpush1.msra.mxu0 0.0
  %668 = vmatprep.subr.mxu0 0.0
  %669 = vmatpush1.msra.mxu0 0.0
  %670 = vmatprep.subr.mxu0 0.0
  %671 = vmatpush1.msra.mxu0 0.0
  %672 = vmatprep.subr.mxu0 0.0
  %673 = vmatpush1.msra.mxu0 0.0
  %674 = vmatprep.subr.mxu0 0.0
  %675 = vmatpush1.msra.mxu0 0.0
  %676 = vmatprep.subr.mxu0 0.0
  %677 = vmatpush1.msra.mxu0 0.0
  %678 = vmatprep.subr.mxu0 0.0
  %679 = vmatpush1.msra.mxu0 0.0
  %680 = vmatprep.subr.mxu0 0.0
  %681 = vmatpush1.msra.mxu0 0.0
  %682 = vmatprep.subr.mxu0 0.0
  %683 = vmatpush1.msra.mxu0 0.0
  %684 = vmatprep.subr.mxu0 0.0
  %685 = vmatpush1.msra.mxu0 0.0
  %686 = vmatprep.subr.mxu0 0.0
  %687 = vmatpush1.msra.mxu0 0.0
  %688 = vmatprep.subr.mxu0 0.0
  %689 = vmatpush1.msra.mxu0 0.0
  %690 = vmatprep.subr.mxu0 0.0
  %691 = vmatpush1.msra.mxu0 0.0
  %692 = vmatprep.mubr.f32.mxu0 0.0
  %693 = vmatmul.mubr.f32.gmra.mrb[0].mxu0 %v596
  %v694 = vpop.f32.mrb[0].mxu0
  %v695 = vadd.f32 0.0, %v694
  %v696 = vpop.f32.mrb[0].mxu0
  %697 = vmatprep.mubr.f32.mxu0 0.0
  %698 = vmatmul.mubr.f32.gmra.mrb[0].mxu0 %v597
  %v699 = vpop.f32.mrb[0].mxu0
  %v700 = vadd.f32 0.0, %v699
  %v701 = vpop.f32.mrb[0].mxu0
  %702 = vmatprep.mubr.f32.mxu0 0.0
  %703 = vmatmul.mubr.f32.gmra.mrb[0].mxu0 %v598
  %v704 = vpop.f32.mrb[0].mxu0
  %v705 = vadd.f32 0.0, %v704
  %v706 = vpop.f32.mrb[0].mxu0
  %707 = vmatprep.mubr.f32.mxu0 0.0
  %708 = vmatmul.mubr.f32.gmra.mrb[0].mxu0 %v599
  %v709 = vpop.f32.mrb[0].mxu0
  %v710 = vadd.f32 0.0, %v709
  %v711 = vpop.f32.mrb[0].mxu0
  %712 = vmatprep.mubr.f32.mxu0 0.0
  %713 = vmatmul.mubr.f32.gmra.mrb[0].mxu0 %v600
  %v714 = vpop.f32.mrb[0].mxu0
  %v715 = vadd.f32 0.0, %v714
  %v716 = vpop.f32.mrb[0].mxu0
  %717 = vmatprep.mubr.f32.mxu0 0.0
  %718 = vmatmul.mubr.f32.gmra.mrb[0].mxu0 %v601
  %v719 = vpop.f32.mrb[0].mxu0
  %v720 = vadd.f32 0.0, %v719
  %v721 = vpop.f32.mrb[0].mxu0
  %722 = vmatprep.mubr.f32.mxu0 0.0
  %723 = vmatmul.mubr.f32.gmra.mrb[0].mxu0 %v602
  %v724 = vpop.f32.mrb[0].mxu0
  %v725 = vadd.f32 0.0, %v724
  %v726 = vpop.f32.mrb[0].mxu0
  %727 = vmatprep.mubr.f32.mxu0 0.0
  %728 = vmatmul.mubr.f32.gmra.mrb[0].mxu0 %v603
  %v729 = vpop.f32.mrb[0].mxu0
  %v730 = vadd.f32 0.0, %v729
  %v731 = vpop.f32.mrb[0].mxu0
  %732 = vdwg.mxu0
  %vm733 = vcmask 130048
  %v734 = vsel %vm733, %v695, 0.0
  %v735 = vsel %vm733, %v700, 0.0
  %v736 = vadd.f32 %v734, %v735
  %v737 = vsel %vm733, %v705, 0.0
  %v738 = vadd.f32 %v736, %v737
  %v739 = vsel %vm733, %v710, 0.0
  %v740 = vadd.f32 %v738, %v739
  %v741 = vsel %vm733, %v715, 0.0
  %v742 = vadd.f32 %v740, %v741
  %v743 = vsel %vm733, %v720, 0.0
  %v744 = vadd.f32 %v742, %v743
  %v745 = vsel %vm733, %v725, 0.0
  %v746 = vadd.f32 %v744, %v745
  %v747 = vsel %vm733, %v730, 0.0
  %v748 = vadd.f32 %v746, %v747
  %v749 = vrot.slane %v748, 4
  %v750 = vadd.f32 %v748, %v749
  %v751 = vrot.slane %v750, 2
  %v752 = vadd.f32 %v750, %v751
  %v753 = vrot.slane %v752, 1
  %v754 = vadd.f32 %v752, %v753
  %v755 = vmul.f32 %v596, %v596
  %v756 = vmul.f32 %v597, %v597
  %v757 = vmul.f32 %v598, %v598
  %v758 = vmul.f32 %v599, %v599
  %v759 = vmul.f32 %v600, %v600
  %v760 = vmul.f32 %v601, %v601
  %v761 = vmul.f32 %v602, %v602
  %v762 = vmul.f32 %v603, %v603
  %763 = vmatprep.subr.mxu0 0.0
  %764 = vmatpush1.msra.mxu0 %v612
  %765 = vmatprep.subr.mxu0 0.0
  %766 = vmatpush1.msra.mxu0 %v613
  %767 = vmatprep.subr.mxu0 0.0
  %768 = vmatpush1.msra.mxu0 %v614
  %769 = vmatprep.subr.mxu0 0.0
  %770 = vmatpush1.msra.mxu0 %v615
  %771 = vmatprep.subr.mxu0 0.0
  %772 = vmatpush1.msra.mxu0 %v616
  %773 = vmatprep.subr.mxu0 0.0
  %774 = vmatpush1.msra.mxu0 %v617
  %775 = vmatprep.subr.mxu0 0.0
  %776 = vmatpush1.msra.mxu0 %v618
  %777 = vmatprep.subr.mxu0 0.0
  %778 = vmatpush1.msra.mxu0 %v619
  %779 = vmatprep.subr.mxu0 0.0
  %780 = vmatpush1.msra.mxu0 %v620
  %781 = vmatprep.subr.mxu0 0.0
  %782 = vmatpush1.msra.mxu0 %v621
  %783 = vmatprep.subr.mxu0 0.0
  %784 = vmatpush1.msra.mxu0 %v622
  %785 = vmatprep.subr.mxu0 0.0
  %786 = vmatpush1.msra.mxu0 %v623
  %787 = vmatprep.subr.mxu0 0.0
  %788 = vmatpush1.msra.mxu0 %v624
  %789 = vmatprep.subr.mxu0 0.0
  %790 = vmatpush1.msra.mxu0 %v625
  %791 = vmatprep.subr.mxu0 0.0
  %792 = vmatpush1.msra.mxu0 %v626
  %793 = vmatprep.subr.mxu0 0.0
  %794 = vmatpush1.msra.mxu0 %v627
  %795 = vmatprep.subr.mxu0 0.0
  %796 = vmatpush1.msra.mxu0 0.0
  %797 = vmatprep.subr.mxu0 0.0
  %798 = vmatpush1.msra.mxu0 0.0
  %799 = vmatprep.subr.mxu0 0.0
  %800 = vmatpush1.msra.mxu0 0.0
  %801 = vmatprep.subr.mxu0 0.0
  %802 = vmatpush1.msra.mxu0 0.0
  %803 = vmatprep.subr.mxu0 0.0
  %804 = vmatpush1.msra.mxu0 0.0
  %805 = vmatprep.subr.mxu0 0.0
  %806 = vmatpush1.msra.mxu0 0.0
  %807 = vmatprep.subr.mxu0 0.0
  %808 = vmatpush1.msra.mxu0 0.0
  %809 = vmatprep.subr.mxu0 0.0
  %810 = vmatpush1.msra.mxu0 0.0
  %811 = vmatprep.subr.mxu0 0.0
  %812 = vmatpush1.msra.mxu0 0.0
  %813 = vmatprep.subr.mxu0 0.0
  %814 = vmatpush1.msra.mxu0 0.0
  %815 = vmatprep.subr.mxu0 0.0
  %816 = vmatpush1.msra.mxu0 0.0
  %817 = vmatprep.subr.mxu0 0.0
  %818 = vmatpush1.msra.mxu0 0.0
  %819 = vmatprep.subr.mxu0 0.0
  %820 = vmatpush1.msra.mxu0 0.0
  %821 = vmatprep.subr.mxu0 0.0
  %822 = vmatpush1.msra.mxu0 0.0
  %823 = vmatprep.subr.mxu0 0.0
  %824 = vmatpush1.msra.mxu0 0.0
  %825 = vmatprep.subr.mxu0 0.0
  %826 = vmatpush1.msra.mxu0 0.0
  %827 = vmatprep.mubr.f32.mxu0 0.0
  %828 = vmatmul.mubr.f32.gmra.mrb[0].mxu0 %v755
  %v829 = vpop.f32.mrb[0].mxu0
  %v830 = vadd.f32 0.0, %v829
  %v831 = vpop.f32.mrb[0].mxu0
  %832 = vmatprep.mubr.f32.mxu0 0.0
  %833 = vmatmul.mubr.f32.gmra.mrb[0].mxu0 %v756
  %v834 = vpop.f32.mrb[0].mxu0
  %v835 = vadd.f32 0.0, %v834
  %v836 = vpop.f32.mrb[0].mxu0
  %837 = vmatprep.mubr.f32.mxu0 0.0
  %838 = vmatmul.mubr.f32.gmra.mrb[0].mxu0 %v757
  %v839 = vpop.f32.mrb[0].mxu0
  %v840 = vadd.f32 0.0, %v839
  %v841 = vpop.f32.mrb[0].mxu0
  %842 = vmatprep.mubr.f32.mxu0 0.0
  %843 = vmatmul.mubr.f32.gmra.mrb[0].mxu0 %v758
  %v844 = vpop.f32.mrb[0].mxu0
  %v845 = vadd.f32 0.0, %v844
  %v846 = vpop.f32.mrb[0].mxu0
  %847 = vmatprep.mubr.f32.mxu0 0.0
  %848 = vmatmul.mubr.f32.gmra.mrb[0].mxu0 %v759
  %v849 = vpop.f32.mrb[0].mxu0
  %v850 = vadd.f32 0.0, %v849
  %v851 = vpop.f32.mrb[0].mxu0
  %852 = vmatprep.mubr.f32.mxu0 0.0
  %853 = vmatmul.mubr.f32.gmra.mrb[0].mxu0 %v760
  %v854 = vpop.f32.mrb[0].mxu0
  %v855 = vadd.f32 0.0, %v854
  %v856 = vpop.f32.mrb[0].mxu0
  %857 = vmatprep.mubr.f32.mxu0 0.0
  %858 = vmatmul.mubr.f32.gmra.mrb[0].mxu0 %v761
  %v859 = vpop.f32.mrb[0].mxu0
  %v860 = vadd.f32 0.0, %v859
  %v861 = vpop.f32.mrb[0].mxu0
  %862 = vmatprep.mubr.f32.mxu0 0.0
  %863 = vmatmul.mubr.f32.gmra.mrb[0].mxu0 %v762
  %v864 = vpop.f32.mrb[0].mxu0
  %v865 = vadd.f32 0.0, %v864
  %v866 = vpop.f32.mrb[0].mxu0
  %867 = vdwg.mxu0
  %v868 = vsel %vm733, %v830, 0.0
  %v869 = vsel %vm733, %v835, 0.0
  %v870 = vadd.f32 %v868, %v869
  %v871 = vsel %vm733, %v840, 0.0
  %v872 = vadd.f32 %v870, %v871
  %v873 = vsel %vm733, %v845, 0.0
  %v874 = vadd.f32 %v872, %v873
  %v875 = vsel %vm733, %v850, 0.0
  %v876 = vadd.f32 %v874, %v875
  %v877 = vsel %vm733, %v855, 0.0
  %v878 = vadd.f32 %v876, %v877
  %v879 = vsel %vm733, %v860, 0.0
  %v880 = vadd.f32 %v878, %v879
  %v881 = vsel %vm733, %v865, 0.0
  %v882 = vadd.f32 %v880, %v881
  %v883 = vrot.slane %v882, 4
  %v884 = vadd.f32 %v882, %v883
  %v885 = vrot.slane %v884, 2
  %v886 = vadd.f32 %v884, %v885
  %v887 = vrot.slane %v886, 1
  %v888 = vadd.f32 %v886, %v887
  %v889 = vmul.f32 %v754, 0.001953125
  %v890 = vmul.f32 %v888, 0.001953125
  %v891 = vmul.f32 %v889, %v889
  %v892 = vsub.f32 %v890, %v891
  %v893 = vmax.f32 %v892, 0.0
  %v894 = vld [vmem:[%s4] sm:$0x1]
  %v895 = vadd.f32 %v893, 1e-05
  %v896 = vrsqrt.pop %v895
  %v897 = vmul.f32 %v894, %v896
  %v898 = vld [vmem:[%s5] sm:$0x1]
  %v899 = vmul.f32 %v889, %v897
  %v900 = vsub.f32 %v898, %v899
  %v901 = vld [vmem:[%s7] sm:$0xff]
  %v902 = vld [vmem:[%s7 + $0x8] sm:$0xff]
  %v904 = vsel %vm733, %v897, 0
  %906 = vmatprep.subr.mxu0 0.0
  %907 = vmatpush1.msra.mxu0 %v901
  %908 = vmatprep.subr.mxu0 0.0
  %909 = vmatpush1.msra.mxu0 %v902
  %910 = vmatprep.subr.mxu0 0.0
  %911 = vmatpush1.msra.mxu0 0.0
  %912 = vmatprep.subr.mxu0 0.0
  %913 = vmatpush1.msra.mxu0 0.0
  %914 = vmatprep.subr.mxu0 0.0
  %915 = vmatpush1.msra.mxu0 0.0
  %916 = vmatprep.subr.mxu0 0.0
  %917 = vmatpush1.msra.mxu0 0.0
  %918 = vmatprep.subr.mxu0 0.0
  %919 = vmatpush1.msra.mxu0 0.0
  %920 = vmatprep.subr.mxu0 0.0
  %921 = vmatpush1.msra.mxu0 0.0
  %922 = vmatprep.subr.mxu0 0.0
  %923 = vmatpush1.msra.mxu0 0.0
  %924 = vmatprep.subr.mxu0 0.0
  %925 = vmatpush1.msra.mxu0 0.0
  %926 = vmatprep.subr.mxu0 0.0
  %927 = vmatpush1.msra.mxu0 0.0
  %928 = vmatprep.subr.mxu0 0.0
  %929 = vmatpush1.msra.mxu0 0.0
  %930 = vmatprep.subr.mxu0 0.0
  %931 = vmatpush1.msra.mxu0 0.0
  %932 = vmatprep.subr.mxu0 0.0
  %933 = vmatpush1.msra.mxu0 0.0
  %934 = vmatprep.subr.mxu0 0.0
  %935 = vmatpush1.msra.mxu0 0.0
  %936 = vmatprep.subr.mxu0 0.0
  %937 = vmatpush1.msra.mxu0 0.0
  %938 = vmatprep.subr.mxu0 0.0
  %939 = vmatpush1.msra.mxu0 0.0
  %940 = vmatprep.subr.mxu0 0.0
  %941 = vmatpush1.msra.mxu0 0.0
  %942 = vmatprep.subr.mxu0 0.0
  %943 = vmatpush1.msra.mxu0 0.0
  %944 = vmatprep.subr.mxu0 0.0
  %945 = vmatpush1.msra.mxu0 0.0
  %946 = vmatprep.subr.mxu0 0.0
  %947 = vmatpush1.msra.mxu0 0.0
  %948 = vmatprep.subr.mxu0 0.0
  %949 = vmatpush1.msra.mxu0 0.0
  %950 = vmatprep.subr.mxu0 0.0
  %951 = vmatpush1.msra.mxu0 0.0
  %952 = vmatprep.subr.mxu0 0.0
  %953 = vmatpush1.msra.mxu0 0.0
  %954 = vmatprep.subr.mxu0 0.0
  %955 = vmatpush1.msra.mxu0 0.0
  %956 = vmatprep.subr.mxu0 0.0
  %957 = vmatpush1.msra.mxu0 0.0
  %958 = vmatprep.subr.mxu0 0.0
  %959 = vmatpush1.msra.mxu0 0.0
  %960 = vmatprep.subr.mxu0 0.0
  %961 = vmatpush1.msra.mxu0 0.0
  %962 = vmatprep.subr.mxu0 0.0
  %963 = vmatpush1.msra.mxu0 0.0
  %964 = vmatprep.subr.mxu0 0.0
  %965 = vmatpush1.msra.mxu0 0.0
  %966 = vmatprep.subr.mxu0 0.0
  %967 = vmatpush1.msra.mxu0 0.0
  %968 = vmatprep.subr.mxu0 0.0
  %969 = vmatpush1.msra.mxu0 0.0
  %970 = vmatprep.mubr.f32.mxu0 0.0
  %971 = vmatmul.mubr.f32.gmra.mrb[0].mxu0 %v904
  %v972 = vpop.f32.mrb[0].mxu0
  %v973 = vadd.f32 0.0, %v972
  %v974 = vpop.f32.mrb[0].mxu0
  %975 = vdwg.mxu0
  %v977 = vsel %vm733, %v900, 0
  %979 = vmatprep.subr.mxu0 0.0
  %980 = vmatpush1.msra.mxu0 %v901
  %981 = vmatprep.subr.mxu0 0.0
  %982 = vmatpush1.msra.mxu0 %v902
  %983 = vmatprep.subr.mxu0 0.0
  %984 = vmatpush1.msra.mxu0 0.0
  %985 = vmatprep.subr.mxu0 0.0
  %986 = vmatpush1.msra.mxu0 0.0
  %987 = vmatprep.subr.mxu0 0.0
  %988 = vmatpush1.msra.mxu0 0.0
  %989 = vmatprep.subr.mxu0 0.0
  %990 = vmatpush1.msra.mxu0 0.0
  %991 = vmatprep.subr.mxu0 0.0
  %992 = vmatpush1.msra.mxu0 0.0
  %993 = vmatprep.subr.mxu0 0.0
  %994 = vmatpush1.msra.mxu0 0.0
  %995 = vmatprep.subr.mxu0 0.0
  %996 = vmatpush1.msra.mxu0 0.0
  %997 = vmatprep.subr.mxu0 0.0
  %998 = vmatpush1.msra.mxu0 0.0
  %999 = vmatprep.subr.mxu0 0.0
  %1000 = vmatpush1.msra.mxu0 0.0
  %1001 = vmatprep.subr.mxu0 0.0
  %1002 = vmatpush1.msra.mxu0 0.0
  %1003 = vmatprep.subr.mxu0 0.0
  %1004 = vmatpush1.msra.mxu0 0.0
  %1005 = vmatprep.subr.mxu0 0.0
  %1006 = vmatpush1.msra.mxu0 0.0
  %1007 = vmatprep.subr.mxu0 0.0
  %1008 = vmatpush1.msra.mxu0 0.0
  %1009 = vmatprep.subr.mxu0 0.0
  %1010 = vmatpush1.msra.mxu0 0.0
  %1011 = vmatprep.subr.mxu0 0.0
  %1012 = vmatpush1.msra.mxu0 0.0
  %1013 = vmatprep.subr.mxu0 0.0
  %1014 = vmatpush1.msra.mxu0 0.0
  %1015 = vmatprep.subr.mxu0 0.0
  %1016 = vmatpush1.msra.mxu0 0.0
  %1017 = vmatprep.subr.mxu0 0.0
  %1018 = vmatpush1.msra.mxu0 0.0
  %1019 = vmatprep.subr.mxu0 0.0
  %1020 = vmatpush1.msra.mxu0 0.0
  %1021 = vmatprep.subr.mxu0 0.0
  %1022 = vmatpush1.msra.mxu0 0.0
  %1023 = vmatprep.subr.mxu0 0.0
  %1024 = vmatpush1.msra.mxu0 0.0
  %1025 = vmatprep.subr.mxu0 0.0
  %1026 = vmatpush1.msra.mxu0 0.0
  %1027 = vmatprep.subr.mxu0 0.0
  %1028 = vmatpush1.msra.mxu0 0.0
  %1029 = vmatprep.subr.mxu0 0.0
  %1030 = vmatpush1.msra.mxu0 0.0
  %1031 = vmatprep.subr.mxu0 0.0
  %1032 = vmatpush1.msra.mxu0 0.0
  %1033 = vmatprep.subr.mxu0 0.0
  %1034 = vmatpush1.msra.mxu0 0.0
  %1035 = vmatprep.subr.mxu0 0.0
  %1036 = vmatpush1.msra.mxu0 0.0
  %1037 = vmatprep.subr.mxu0 0.0
  %1038 = vmatpush1.msra.mxu0 0.0
  %1039 = vmatprep.subr.mxu0 0.0
  %1040 = vmatpush1.msra.mxu0 0.0
  %1041 = vmatprep.subr.mxu0 0.0
  %1042 = vmatpush1.msra.mxu0 0.0
  %1043 = vmatprep.mubr.f32.mxu0 0.0
  %1044 = vmatmul.mubr.f32.gmra.mrb[0].mxu0 %v977
  %v1045 = vpop.f32.mrb[0].mxu0
  %v1046 = vadd.f32 0.0, %v1045
  %v1047 = vpop.f32.mrb[0].mxu0
  %1048 = vdwg.mxu0
  %v1049 = vld [vmem:[#allocation2] sm:$0xff]
  %v1050 = vld [vmem:[#allocation2 + $0x8] sm:$0xff]
  %v1051 = vlaneseq
  %v1052 = vshrl.u32 %v1051, 7
  %v1053 = vsub.s32 0, %v1052
  %v1054 = vrot.slane %v973, %v1053
  %v1055 = vmul.f32 %v1049, %v1054
  %v1056 = vmul.f32 %v1050, %v1054
  %v1057 = vadd.f32 %v1055, 0.0
  %v1058 = vadd.f32 %v1056, 0.0
  %v1059 = vlaneseq
  %v1060 = vshrl.u32 %v1059, 7
  %v1061 = vsub.s32 0, %v1060
  %v1062 = vrot.slane %v1046, %v1061
  %v1063 = vadd.f32 %v1057, %v1062
  %v1064 = vadd.f32 %v1058, %v1062
  %vm1065 = vcmp.ge.f32.partialorder %v1063, 1.0
  %vm1066 = vcmp.ge.f32.partialorder %v1064, 1.0
  %v1067 = vsel %vm1065, 0.0, %v1063
  %v1068 = vsel %vm1066, 0.0, %v1064
  %v1069 = vsel %vm1065, 1, 0
  %v1070 = vsel %vm1066, 1, 0
  %v1071 = vcvt.s32.f32 %v1069
  %v1072 = vcvt.s32.f32 %v1070
  %1073 = vst [vmem:[#allocation2] sm:$0xff] %v1071
  %1074 = vst [vmem:[#allocation2 + $0x8] sm:$0xff] %v1072
  %v1075 = vld [vmem:[#allocation2 + $0x10] sm:$0xff]
  %v1076 = vld [vmem:[#allocation2 + $0x18] sm:$0xff]
  %v1077 = vmul.f32 %v1075, %v1054
  %v1078 = vmul.f32 %v1076, %v1054
  %v1079 = vadd.f32 %v1067, %v1077
  %v1080 = vadd.f32 %v1068, %v1078
  %v1081 = vadd.f32 %v1079, %v1062
  %v1082 = vadd.f32 %v1080, %v1062
  %vm1083 = vcmp.ge.f32.partialorder %v1081, 1.0
  %vm1084 = vcmp.ge.f32.partialorder %v1082, 1.0
  %v1085 = vsel %vm1083, 0.0, %v1081
  %v1086 = vsel %vm1084, 0.0, %v1082
  %v1087 = vsel %vm1083, 1, 0
  %v1088 = vsel %vm1084, 1, 0
  %v1089 = vcvt.s32.f32 %v1087
  %v1090 = vcvt.s32.f32 %v1088
  %1091 = vst [vmem:[#allocation2 + $0x10] sm:$0xff] %v1089
  %1092 = vst [vmem:[#allocation2 + $0x18] sm:$0xff] %v1090
  %v1093 = vld [vmem:[#allocation2 + $0x20] sm:$0xff]
  %v1094 = vld [vmem:[#allocation2 + $0x28] sm:$0xff]
  %v1095 = vmul.f32 %v1093, %v1054
  %v1096 = vmul.f32 %v1094, %v1054
  %v1097 = vadd.f32 %v1085, %v1095
  %v1098 = vadd.f32 %v1086, %v1096
  %v1099 = vadd.f32 %v1097, %v1062
  %v1100 = vadd.f32 %v1098, %v1062
  %vm1101 = vcmp.ge.f32.partialorder %v1099, 1.0
  %vm1102 = vcmp.ge.f32.partialorder %v1100, 1.0
  %v1103 = vsel %vm1101, 0.0, %v1099
  %v1104 = vsel %vm1102, 0.0, %v1100
  %v1105 = vsel %vm1101, 1, 0
  %v1106 = vsel %vm1102, 1, 0
  %v1107 = vcvt.s32.f32 %v1105
  %v1108 = vcvt.s32.f32 %v1106
  %1109 = vst [vmem:[#allocation2 + $0x20] sm:$0xff] %v1107
  %1110 = vst [vmem:[#allocation2 + $0x28] sm:$0xff] %v1108
  %v1111 = vld [vmem:[#allocation2 + $0x30] sm:$0xff]
  %v1112 = vld [vmem:[#allocation2 + $0x38] sm:$0xff]
  %v1113 = vmul.f32 %v1111, %v1054
  %v1114 = vmul.f32 %v1112, %v1054
  %v1115 = vadd.f32 %v1103, %v1113
  %v1116 = vadd.f32 %v1104, %v1114
  %v1117 = vadd.f32 %v1115, %v1062
  %v1118 = vadd.f32 %v1116, %v1062
  %vm1119 = vcmp.ge.f32.partialorder %v1117, 1.0
  %vm1120 = vcmp.ge.f32.partialorder %v1118, 1.0
  %v1121 = vsel %vm1119, 1, 0
  %v1122 = vsel %vm1120, 1, 0
  %v1123 = vcvt.s32.f32 %v1121
  %v1124 = vcvt.s32.f32 %v1122
  %1125 = vst [vmem:[#allocation2 + $0x30] sm:$0xff] %v1123
  %1126 = vst [vmem:[#allocation2 + $0x38] sm:$0xff] %v1124
  %v1127 = vld [vmem:[#allocation2] sm:$0xff]
  %v1128 = vld [vmem:[#allocation2 + $0x8] sm:$0xff]
  %v1129 = vld [vmem:[#allocation2 + $0x10] sm:$0xff]
  %v1130 = vld [vmem:[#allocation2 + $0x18] sm:$0xff]
  %v1131 = vld [vmem:[#allocation2 + $0x20] sm:$0xff]
  %v1132 = vld [vmem:[#allocation2 + $0x28] sm:$0xff]
  %v1133 = vld [vmem:[#allocation2 + $0x30] sm:$0xff]
  %v1134 = vld [vmem:[#allocation2 + $0x38] sm:$0xff]
  %v1135 = vpack.c.bf16 %v1128, %v1127
  %v1136 = vpack.c.bf16 %v1130, %v1129
  %v1137 = vpack.c.bf16 %v1132, %v1131
  %v1138 = vpack.c.bf16 %v1134, %v1133
  %v1139 = vld [vmem:[%s8] sm:$0xf]
  %v1140 = vld [vmem:[%s8 + $0x4] sm:$0xf]
  %v1141 = vld [vmem:[%s8 + $0x8] sm:$0xf]
  %v1142 = vld [vmem:[%s8 + $0xc] sm:$0xf]
  %v1147 = vunpack.c.l.b16 %v1139
  %v1148 = vunpack.c.l.b16 %v1140
  %v1149 = vunpack.c.l.b16 %v1141
  %v1150 = vunpack.c.l.b16 %v1142
  %v1151 = vpack.c.b16 %v1148, %v1147
  %v1152 = vpack.c.b16 %v1150, %v1149
  %v1154 = vsel %vm76, %v1151, 0
  %v1157 = vsel %vm76, %v1152, 0
  %1159 = vmatprep.subr.bf16.mxu0 0
  %1160 = vmatpush1.bf16.msra.mxu0 %v1135
  %1161 = vmatprep.subr.bf16.mxu0 0
  %1162 = vmatpush1.bf16.msra.mxu0 %v1136
  %1163 = vmatprep.subr.bf16.mxu0 0
  %1164 = vmatpush1.bf16.msra.mxu0 %v1137
  %1165 = vmatprep.subr.bf16.mxu0 0
  %1166 = vmatpush1.bf16.msra.mxu0 %v1138
  %1167 = vmatprep.subr.bf16.mxu0 0
  %1168 = vmatpush1.bf16.msra.mxu0 0
  %1169 = vmatprep.subr.bf16.mxu0 0
  %1170 = vmatpush1.bf16.msra.mxu0 0
  %1171 = vmatprep.subr.bf16.mxu0 0
  %1172 = vmatpush1.bf16.msra.mxu0 0
  %1173 = vmatprep.subr.bf16.mxu0 0
  %1174 = vmatpush1.bf16.msra.mxu0 0
  %1175 = vmatprep.subr.bf16.mxu0 0
  %1176 = vmatpush1.bf16.msra.mxu0 0
  %1177 = vmatprep.subr.bf16.mxu0 0
  %1178 = vmatpush1.bf16.msra.mxu0 0
  %1179 = vmatprep.subr.bf16.mxu0 0
  %1180 = vmatpush1.bf16.msra.mxu0 0
  %1181 = vmatprep.subr.bf16.mxu0 0
  %1182 = vmatpush1.bf16.msra.mxu0 0
  %1183 = vmatprep.subr.bf16.mxu0 0
  %1184 = vmatpush1.bf16.msra.mxu0 0
  %1185 = vmatprep.subr.bf16.mxu0 0
  %1186 = vmatpush1.bf16.msra.mxu0 0
  %1187 = vmatprep.subr.bf16.mxu0 0
  %1188 = vmatpush1.bf16.msra.mxu0 0
  %1189 = vmatprep.subr.bf16.mxu0 0
  %1190 = vmatpush1.bf16.msra.mxu0 0
  %1191 = vmatprep.mubr.bf16.mxu0 0
  %1192 = vmatmul.mubr.bf16.gmra.mrb[0].mxu0 %v1154
  %v1193 = vpop.f32.mrb[0].mxu0
  %v1194 = vadd.f32 0.0, %v1193
  %v1195 = vpop.f32.mrb[0].mxu0
  %v1196 = vpop.f32.mrb[0].mxu0
  %v1197 = vadd.f32 0.0, %v1196
  %v1198 = vpop.f32.mrb[0].mxu0
  %1199 = vmatprep.mubr.bf16.mxu0 0
  %1200 = vmatmul.mubr.bf16.gmra.mrb[0].mxu0 %v1157
  %v1201 = vpop.f32.mrb[0].mxu0
  %v1202 = vadd.f32 0.0, %v1201
  %v1203 = vpop.f32.mrb[0].mxu0
  %v1204 = vpop.f32.mrb[0].mxu0
  %v1205 = vadd.f32 0.0, %v1204
  %v1206 = vpop.f32.mrb[0].mxu0
  %1207 = vdwg.mxu0
  %v1208 = vpack.c.bf16 %v1197, %v1194
  %v1209 = vpack.c.bf16 %v1205, %v1202
  %v1210 = vld [vmem:[%s9] sm:$0xf]
  %v1211 = vld [vmem:[%s9 + $0x4] sm:$0xf]
  %v1212 = vld [vmem:[%s9 + $0x8] sm:$0xf]
  %v1213 = vld [vmem:[%s9 + $0xc] sm:$0xf]
  %v1214 = vld [vmem:[%s9 + $0x10] sm:$0xf]
  %v1215 = vld [vmem:[%s9 + $0x14] sm:$0xf]
  %v1216 = vld [vmem:[%s9 + $0x18] sm:$0xf]
  %v1217 = vld [vmem:[%s9 + $0x1c] sm:$0xf]
  %v1218 = vld [vmem:[%s9 + $0x20] sm:$0xf]
  %v1219 = vld [vmem:[%s9 + $0x24] sm:$0xf]
  %v1220 = vld [vmem:[%s9 + $0x28] sm:$0xf]
  %v1221 = vld [vmem:[%s9 + $0x2c] sm:$0xf]
  %v1222 = vld [vmem:[%s9 + $0x30] sm:$0xf]
  %v1223 = vld [vmem:[%s9 + $0x34] sm:$0xf]
  %v1224 = vld [vmem:[%s9 + $0x38] sm:$0xf]
  %v1225 = vld [vmem:[%s9 + $0x3c] sm:$0xf]
  %v1242 = vunpack.c.l.b16 %v1210
  %v1243 = vunpack.c.l.b16 %v1211
  %v1244 = vunpack.c.l.b16 %v1212
  %v1245 = vunpack.c.l.b16 %v1213
  %v1246 = vunpack.c.l.b16 %v1214
  %v1247 = vunpack.c.l.b16 %v1215
  %v1248 = vunpack.c.l.b16 %v1216
  %v1249 = vunpack.c.l.b16 %v1217
  %v1250 = vunpack.c.l.b16 %v1218
  %v1251 = vunpack.c.l.b16 %v1219
  %v1252 = vunpack.c.l.b16 %v1220
  %v1253 = vunpack.c.l.b16 %v1221
  %v1254 = vunpack.c.l.b16 %v1222
  %v1255 = vunpack.c.l.b16 %v1223
  %v1256 = vunpack.c.l.b16 %v1224
  %v1257 = vunpack.c.l.b16 %v1225
  %v1258 = vpack.c.b16 %v1243, %v1242
  %v1259 = vpack.c.b16 %v1245, %v1244
  %v1260 = vpack.c.b16 %v1247, %v1246
  %v1261 = vpack.c.b16 %v1249, %v1248
  %v1262 = vpack.c.b16 %v1251, %v1250
  %v1263 = vpack.c.b16 %v1253, %v1252
  %v1264 = vpack.c.b16 %v1255, %v1254
  %v1265 = vpack.c.b16 %v1257, %v1256
  %1274 = vmatprep.subr.bf16.mxu0 0
  %1275 = vmatpush1.bf16.msra.mxu0 %v1258
  %1276 = vmatprep.subr.bf16.mxu0 0
  %1277 = vmatpush1.bf16.msra.mxu0 %v1259
  %1278 = vmatprep.subr.bf16.mxu0 0
  %1279 = vmatpush1.bf16.msra.mxu0 %v1260
  %1280 = vmatprep.subr.bf16.mxu0 0
  %1281 = vmatpush1.bf16.msra.mxu0 %v1261
  %1282 = vmatprep.subr.bf16.mxu0 0
  %1283 = vmatpush1.bf16.msra.mxu0 %v1262
  %1284 = vmatprep.subr.bf16.mxu0 0
  %1285 = vmatpush1.bf16.msra.mxu0 %v1263
  %1286 = vmatprep.subr.bf16.mxu0 0
  %1287 = vmatpush1.bf16.msra.mxu0 %v1264
  %1288 = vmatprep.subr.bf16.mxu0 0
  %1289 = vmatpush1.bf16.msra.mxu0 %v1265
  %1290 = vmatprep.subr.bf16.mxu0 0
  %1291 = vmatpush1.bf16.msra.mxu0 0
  %1292 = vmatprep.subr.bf16.mxu0 0
  %1293 = vmatpush1.bf16.msra.mxu0 0
  %1294 = vmatprep.subr.bf16.mxu0 0
  %1295 = vmatpush1.bf16.msra.mxu0 0
  %1296 = vmatprep.subr.bf16.mxu0 0
  %1297 = vmatpush1.bf16.msra.mxu0 0
  %1298 = vmatprep.subr.bf16.mxu0 0
  %1299 = vmatpush1.bf16.msra.mxu0 0
  %1300 = vmatprep.subr.bf16.mxu0 0
  %1301 = vmatpush1.bf16.msra.mxu0 0
  %1302 = vmatprep.subr.bf16.mxu0 0
  %1303 = vmatpush1.bf16.msra.mxu0 0
  %1304 = vmatprep.subr.bf16.mxu0 0
  %1305 = vmatpush1.bf16.msra.mxu0 0
  %1306 = vmatprep.mubr.bf16.mxu0 0
  %1307 = vmatmul.mubr.bf16.gmra.mrb[0].mxu0 %v1208
  %v1308 = vpop.f32.mrb[0].mxu0
  %v1309 = vadd.f32 0.0, %v1308
  %v1310 = vpop.f32.mrb[0].mxu0
  %v1311 = vpop.f32.mrb[0].mxu0
  %v1312 = vadd.f32 0.0, %v1311
  %v1313 = vpop.f32.mrb[0].mxu0
  %1314 = vmatprep.mubr.bf16.mxu0 0
  %1315 = vmatmul.mubr.bf16.gmra.mrb[0].mxu0 %v1209
  %v1316 = vpop.f32.mrb[0].mxu0
  %v1317 = vadd.f32 0.0, %v1316
  %v1318 = vpop.f32.mrb[0].mxu0
  %v1319 = vpop.f32.mrb[0].mxu0
  %v1320 = vadd.f32 0.0, %v1319
  %v1321 = vpop.f32.mrb[0].mxu0
  %1322 = vdwg.mxu0
  %vm1323 = vcmp.ge.f32.partialorder %v1309, 0.5
  %vm1324 = vcmp.ge.f32.partialorder %v1312, 0.5
  %vm1325 = vcmp.ge.f32.partialorder %v1317, 0.5
  %vm1326 = vcmp.ge.f32.partialorder %v1320, 0.5
  %v1327 = vsel %vm1323, 1, 0
  %v1328 = vsel %vm1324, 1, 0
  %v1329 = vsel %vm1325, 1, 0
  %v1330 = vsel %vm1326, 1, 0
  %v1331 = vcvt.s32.f32 %v1327
  %v1332 = vcvt.s32.f32 %v1328
  %v1333 = vcvt.s32.f32 %v1329
  %v1334 = vcvt.s32.f32 %v1330
  %1335 = vst.msk [vmem:[%s10] sm:$0xff] %vm76, %v1331
  %1336 = vst.msk [vmem:[%s10 + $0x8] sm:$0xff] %vm76, %v1332
  %1337 = vst.msk [vmem:[%s10 + $0x10] sm:$0xff] %vm76, %v1333
  %1338 = vst.msk [vmem:[%s10 + $0x18] sm:$0xff] %vm76, %v1334
  // Predicated region
  $region42: #{spiking_conv_encoder.5} parent=0 // pred_check
    _
  $region43: #{spiking_conv_encoder.5} parent=0 // pred_check_branch
    %1340 = sbr.rel (0) target = $region45
  $region44: #{spiking_conv_encoder.5} parent=0 // pred_region
    _
  $region45: #{spiking_conv_encoder.5} parent=0 // pred_fallthru
    _
  // Predicated region
  $region46: #{spiking_conv_encoder.5} parent=0 // pred_check
    _
  $region47: #{spiking_conv_encoder.5} parent=0 // pred_check_branch
    %1342 = sbr.rel (0) target = $region49
  $region48: #{spiking_conv_encoder.5} parent=0 // pred_region
    _
  $region49: #{spiking_conv_encoder.5} parent=0 // pred_fallthru
    _

// kernel: spiking_conv_encoder.7
$region0: #{spiking_conv_encoder.7}
  #allocation0 [shape = 'u32[]', space=smem, size = 0x4, offset = 0x4, fixed_abs, tag = 'smem constant byte address 0x4 - core index']
  #allocation1 [shape = 'u32[144,128]{1,0:T(1,128)}', space=vmem, size = 0x12000, scoped, tag = 'internal scratch']
  %s0 = inlined_call_operand.vmem [shape: f32[16,64], index: 0, kind: input, shape index: {}]
  %s1 = inlined_call_operand.vmem [shape: bf16[8,16], index: 1, kind: input, shape index: {}]
  %s2 = inlined_call_operand.vmem [shape: bf16[64,8], index: 2, kind: input, shape index: {}]
  %s3 = inlined_call_operand.vmem [shape: f32[1,8], index: 3, kind: input, shape index: {}]
  %s4 = inlined_call_operand.hbm [shape: f32[2,8], index: 4, kind: output, shape index: {}]
  %s5 = sld [smem:[#allocation0]]
  $region26: #{spiking_conv_encoder.7} parent=0
    _
  %s7 = ssub.s32 1, %s5
  %s8 = scalar_select 0, %s7, %s5
  $region1: #{spiking_conv_encoder.7} parent=0
    #allocation2 [shape = 'u8[1024]{0}', space=vmem, size = 0x400, scoped, tag = 'output window, operand 0, single buffered']
    #allocation3 [shape = 's32[1]{0}', space=sflag, size = 0x4, scoped, tag = 'scoped memory for spiking_conv_encoder.7']
    %9 = vsyncpa [#allocation3], 0
    // Predicated region
    $region2: #{spiking_conv_encoder.7} parent=1 // pred_check
      _
    $region3: #{spiking_conv_encoder.7} parent=1 // pred_check_branch
      %11 = sbr.rel (0) target = $region5
    $region4: #{spiking_conv_encoder.7} parent=1 // pred_region
      _
    $region5: #{spiking_conv_encoder.7} parent=1 // pred_fallthru
      _
    // Predicated region
    $region6: #{spiking_conv_encoder.7} parent=1 // pred_check
      _
    $region7: #{spiking_conv_encoder.7} parent=1 // pred_check_branch
      %13 = sbr.rel (0) target = $region9
    $region8: #{spiking_conv_encoder.7} parent=1 // pred_region
      _
    $region9: #{spiking_conv_encoder.7} parent=1 // pred_fallthru
      _
    // Predicated region
    $region10: #{spiking_conv_encoder.7} parent=1 // pred_check
      _
    $region11: #{spiking_conv_encoder.7} parent=1 // pred_check_branch
      %15 = sbr.rel (0) target = $region13
    $region12: #{spiking_conv_encoder.7} parent=1 // pred_region
      _
    $region13: #{spiking_conv_encoder.7} parent=1 // pred_fallthru
      _
    // Predicated region
    $region14: #{spiking_conv_encoder.7} parent=1 // pred_check
      _
    $region15: #{spiking_conv_encoder.7} parent=1 // pred_check_branch
      %17 = sbr.rel (0) target = $region17
    $region16: #{spiking_conv_encoder.7} parent=1 // pred_region
      _
    $region17: #{spiking_conv_encoder.7} parent=1 // pred_fallthru
      _
    %v19 = vld [vmem:[%s0] sm:$0xff]
    %v20 = vld [vmem:[%s0 + $0x8] sm:$0xff]
    %v21 = vpack.c.bf16 %v20, %v19
    %v22 = vld [vmem:[%s1] sm:$0xf]
    %vm23 = vcmask 130048
    %v25 = vsel %vm23, %v22, 0
    %27 = vmatprep.subr.bf16.mxu0 0
    %28 = vmatpush1.bf16.msra.mxu0 %v21
    %29 = vmatprep.subr.bf16.mxu0 0
    %30 = vmatpush1.bf16.msra.mxu0 0
    %31 = vmatprep.subr.bf16.mxu0 0
    %32 = vmatpush1.bf16.msra.mxu0 0
    %33 = vmatprep.subr.bf16.mxu0 0
    %34 = vmatpush1.bf16.msra.mxu0 0
    %35 = vmatprep.subr.bf16.mxu0 0
    %36 = vmatpush1.bf16.msra.mxu0 0
    %37 = vmatprep.subr.bf16.mxu0 0
    %38 = vmatpush1.bf16.msra.mxu0 0
    %39 = vmatprep.subr.bf16.mxu0 0
    %40 = vmatpush1.bf16.msra.mxu0 0
    %41 = vmatprep.subr.bf16.mxu0 0
    %42 = vmatpush1.bf16.msra.mxu0 0
    %43 = vmatprep.subr.bf16.mxu0 0
    %44 = vmatpush1.bf16.msra.mxu0 0
    %45 = vmatprep.subr.bf16.mxu0 0
    %46 = vmatpush1.bf16.msra.mxu0 0
    %47 = vmatprep.subr.bf16.mxu0 0
    %48 = vmatpush1.bf16.msra.mxu0 0
    %49 = vmatprep.subr.bf16.mxu0 0
    %50 = vmatpush1.bf16.msra.mxu0 0
    %51 = vmatprep.subr.bf16.mxu0 0
    %52 = vmatpush1.bf16.msra.mxu0 0
    %53 = vmatprep.subr.bf16.mxu0 0
    %54 = vmatpush1.bf16.msra.mxu0 0
    %55 = vmatprep.subr.bf16.mxu0 0
    %56 = vmatpush1.bf16.msra.mxu0 0
    %57 = vmatprep.subr.bf16.mxu0 0
    %58 = vmatpush1.bf16.msra.mxu0 0
    %59 = vmatprep.mubr.bf16.mxu0 0
    %60 = vmatmul.mubr.bf16.gmra.mrb[0].mxu0 %v25
    %v61 = vpop.f32.mrb[0].mxu0
    %v62 = vadd.f32 0.0, %v61
    %v63 = vpop.f32.mrb[0].mxu0
    %v64 = vpop.f32.mrb[0].mxu0
    %v65 = vpop.f32.mrb[0].mxu0
    %66 = vdwg.mxu0
    %v67 = vpack.c.bf16 %v62, %v62
    %v68 = vld [vmem:[%s2] sm:$0xf]
    %v69 = vld [vmem:[%s2 + $0x4] sm:$0xf]
    %v70 = vld [vmem:[%s2 + $0x8] sm:$0xf]
    %v71 = vld [vmem:[%s2 + $0xc] sm:$0xf]
    %v72 = vld [vmem:[%s2 + $0x10] sm:$0xf]
    %v73 = vld [vmem:[%s2 + $0x14] sm:$0xf]
    %v74 = vld [vmem:[%s2 + $0x18] sm:$0xf]
    %v75 = vld [vmem:[%s2 + $0x1c] sm:$0xf]
    %v84 = vunpack.c.l.b16 %v68
    %v85 = vunpack.c.l.b16 %v69
    %v86 = vunpack.c.l.b16 %v70
    %v87 = vunpack.c.l.b16 %v71
    %v88 = vunpack.c.l.b16 %v72
    %v89 = vunpack.c.l.b16 %v73
    %v90 = vunpack.c.l.b16 %v74
    %v91 = vunpack.c.l.b16 %v75
    %v92 = vpack.c.b16 %v85, %v84
    %v93 = vpack.c.b16 %v87, %v86
    %v94 = vpack.c.b16 %v89, %v88
    %v95 = vpack.c.b16 %v91, %v90
    %vm100 = vcmask 523264
    %v102 = vsel %vm100, %v67, 0
    %104 = vmatprep.subr.bf16.mxu0 0
    %105 = vmatpush1.bf16.msra.mxu0 %v92
    %106 = vmatprep.subr.bf16.mxu0 0
    %107 = vmatpush1.bf16.msra.mxu0 %v93
    %108 = vmatprep.subr.bf16.mxu0 0
    %109 = vmatpush1.bf16.msra.mxu0 %v94
    %110 = vmatprep.subr.bf16.mxu0 0
    %111 = vmatpush1.bf16.msra.mxu0 %v95
    %112 = vmatprep.subr.bf16.mxu0 0
    %113 = vmatpush1.bf16.msra.mxu0 0
    %114 = vmatprep.subr.bf16.mxu0 0
    %115 = vmatpush1.bf16.msra.mxu0 0
    %116 = vmatprep.subr.bf16.mxu0 0
    %117 = vmatpush1.bf16.msra.mxu0 0
    %118 = vmatprep.subr.bf16.mxu0 0
    %119 = vmatpush1.bf16.msra.mxu0 0
    %120 = vmatprep.subr.bf16.mxu0 0
    %121 = vmatpush1.bf16.msra.mxu0 0
    %122 = vmatprep.subr.bf16.mxu0 0
    %123 = vmatpush1.bf16.msra.mxu0 0
    %124 = vmatprep.subr.bf16.mxu0 0
    %125 = vmatpush1.bf16.msra.mxu0 0
    %126 = vmatprep.subr.bf16.mxu0 0
    %127 = vmatpush1.bf16.msra.mxu0 0
    %128 = vmatprep.subr.bf16.mxu0 0
    %129 = vmatpush1.bf16.msra.mxu0 0
    %130 = vmatprep.subr.bf16.mxu0 0
    %131 = vmatpush1.bf16.msra.mxu0 0
    %132 = vmatprep.subr.bf16.mxu0 0
    %133 = vmatpush1.bf16.msra.mxu0 0
    %134 = vmatprep.subr.bf16.mxu0 0
    %135 = vmatpush1.bf16.msra.mxu0 0
    %136 = vmatprep.mubr.bf16.mxu0 0
    %137 = vmatmul.mubr.bf16.gmra.mrb[0].mxu0 %v102
    %v138 = vpop.f32.mrb[0].mxu0
    %v139 = vadd.f32 0.0, %v138
    %v140 = vpop.f32.mrb[0].mxu0
    %v141 = vpop.f32.mrb[0].mxu0
    %v142 = vpop.f32.mrb[0].mxu0
    %143 = vdwg.mxu0
    %v144 = vmul.f32 %v139, 0.25
    %v145 = vld [vmem:[%s3] sm:$0x1]
    %v147 = vlaneseq
    %v148 = vshrl.u32 %v147, 7
    %v149 = vsub.s32 0, %v148
    %v150 = vrot.slane %v145, %v149
    %v152 = vadd.f32 %v144, %v150
    %v153 = vadd.f32 %v152, 0.0
    %vm154 = vcmp.ge.f32.partialorder %v153, 1.0
    %v155 = vsel %vm154, 1, 0
    %v156 = vcvt.s32.f32 %v155
    %v157 = vadd.f32 %v156, 0.0
    %v158 = vsel %vm154, 0.0, %v153
    %v160 = vrot.slane %v152, 2
    %v162 = vadd.f32 %v158, %v160
    %vm163 = vcmp.ge.f32.partialorder %v162, 1.0
    %v164 = vsel %vm163, 1, 0
    %v165 = vcvt.s32.f32 %v164
    %v166 = vadd.f32 %v157, %v165
    %v167 = vsel %vm163, 0.0, %v162
    %v168 = vrot.slane %v152, 4
    %v170 = vadd.f32 %v167, %v168
    %vm171 = vcmp.ge.f32.partialorder %v170, 1.0
    %v172 = vsel %vm171, 1, 0
    %v173 = vcvt.s32.f32 %v172
    %v174 = vadd.f32 %v166, %v173
    %v175 = vsel %vm171, 0.0, %v170
    %v176 = vrot.slane %v152, 6
    %v178 = vadd.f32 %v175, %v176
    %vm179 = vcmp.ge.f32.partialorder %v178, 1.0
    %v180 = vsel %vm179, 1, 0
    %v181 = vcvt.s32.f32 %v180
    %v182 = vadd.f32 %v174, %v181
    %v183 = vmul.f32 %v182, 0.25
    %vm184 = vcmask 58368
    %185 = vst.msk [vmem:[#allocation2] sm:$0x3] %vm184, %v183
    // Predicated region
    $region18: #{spiking_conv_encoder.7} parent=1 // pred_check
      _
    $region19: #{spiking_conv_encoder.7} parent=1 // pred_check_branch
      %187 = sbr.rel (0) target = $region21
    $region20: #{spiking_conv_encoder.7} parent=1 // pred_region
      %s189 = ssub.s32 32, 32
      %190 = vsyncadd [#allocation3], %s189
      %s192 = sshll.u32 [#allocation2], 4
      %s193 = int_to_ptr.vmem [resolvable:$true] %s192
      %195 = dma.vmem_to_hbm [thread:$0]  %s193, 32, %s4, [#allocation3]
    $region21: #{spiking_conv_encoder.7} parent=1 // pred_fallthru
      _
    // Predicated region
    $region22: #{spiking_conv_encoder.7} parent=1 // pred_check
      _
    $region23: #{spiking_conv_encoder.7} parent=1 // pred_check_branch
      %197 = sbr.rel (0) target = $region25
    $region24: #{spiking_conv_encoder.7} parent=1 // pred_region
      %198 = dma.done [#allocation3], 32
    $region25: #{spiking_conv_encoder.7} parent=1 // pred_fallthru
      _
    %199 = vsyncpa [#allocation3], 1

// kernel: spiking_conv_encoder.6
$region0: #{spiking_conv_encoder.6}
  #allocation0 [shape = 'u32[]', space=smem, size = 0x4, offset = 0x4, fixed_abs, tag = 'smem constant byte address 0x4 - core index']
  #allocation1 [shape = 'u32[144,128]{1,0:T(1,128)}', space=vmem, size = 0x12000, scoped, tag = 'internal scratch']
  #allocation2 [shape = 'f32[32,128]{1,0:T(8,128)}', space=vmem, size = 0x4000, scoped, tag = 'scratch operand']
  %s0 = inlined_call_operand.vmem [shape: f32[32,64], index: 0, kind: input, shape index: {}]
  %s1 = inlined_call_operand.vmem [shape: bf16[3,64,128], index: 1, kind: input, shape index: {}]
  %s2 = inlined_call_operand.vmem [shape: bf16[32,32], index: 2, kind: input, shape index: {}]
  %s3 = inlined_call_operand.vmem [shape: bf16[32,32], index: 3, kind: input, shape index: {}]
  %s4 = inlined_call_operand.vmem [shape: f32[1,32], index: 4, kind: input, shape index: {}]
  %s5 = inlined_call_operand.vmem [shape: f32[1,32], index: 5, kind: input, shape index: {}]
  %s6 = inlined_call_operand.vmem [shape: f32[128,32], index: 6, kind: input, shape index: {}]
  %s7 = inlined_call_operand.vmem [shape: f32[32,128], index: 7, kind: input, shape index: {}]
  %s8 = inlined_call_operand.vmem [shape: bf16[16,32], index: 8, kind: input, shape index: {}]
  %s9 = inlined_call_operand.vmem [shape: bf16[128,64], index: 9, kind: input, shape index: {}]
  %s10 = inlined_call_operand.vmem [shape: f32[16,64], index: 10, kind: output, shape index: {}]
  %s11 = sld [smem:[#allocation0]]
  $region50: #{spiking_conv_encoder.6} parent=0
    _
  %s13 = ssub.s32 1, %s11
  %s14 = scalar_select 0, %s13, %s11
  // Predicated region
  $region2: #{spiking_conv_encoder.6} parent=0 // pred_check
    _
  $region3: #{spiking_conv_encoder.6} parent=0 // pred_check_branch
    %16 = sbr.rel (0) target = $region5
  $region4: #{spiking_conv_encoder.6} parent=0 // pred_region
    _
  $region5: #{spiking_conv_encoder.6} parent=0 // pred_fallthru
    _
  // Predicated region
  $region6: #{spiking_conv_encoder.6} parent=0 // pred_check
    _
  $region7: #{spiking_conv_encoder.6} parent=0 // pred_check_branch
    %18 = sbr.rel (0) target = $region9
  $region8: #{spiking_conv_encoder.6} parent=0 // pred_region
    _
  $region9: #{spiking_conv_encoder.6} parent=0 // pred_fallthru
    _
  // Predicated region
  $region10: #{spiking_conv_encoder.6} parent=0 // pred_check
    _
  $region11: #{spiking_conv_encoder.6} parent=0 // pred_check_branch
    %20 = sbr.rel (0) target = $region13
  $region12: #{spiking_conv_encoder.6} parent=0 // pred_region
    _
  $region13: #{spiking_conv_encoder.6} parent=0 // pred_fallthru
    _
  // Predicated region
  $region14: #{spiking_conv_encoder.6} parent=0 // pred_check
    _
  $region15: #{spiking_conv_encoder.6} parent=0 // pred_check_branch
    %22 = sbr.rel (0) target = $region17
  $region16: #{spiking_conv_encoder.6} parent=0 // pred_region
    _
  $region17: #{spiking_conv_encoder.6} parent=0 // pred_fallthru
    _
  // Predicated region
  $region18: #{spiking_conv_encoder.6} parent=0 // pred_check
    _
  $region19: #{spiking_conv_encoder.6} parent=0 // pred_check_branch
    %24 = sbr.rel (0) target = $region21
  $region20: #{spiking_conv_encoder.6} parent=0 // pred_region
    _
  $region21: #{spiking_conv_encoder.6} parent=0 // pred_fallthru
    _
  // Predicated region
  $region22: #{spiking_conv_encoder.6} parent=0 // pred_check
    _
  $region23: #{spiking_conv_encoder.6} parent=0 // pred_check_branch
    %26 = sbr.rel (0) target = $region25
  $region24: #{spiking_conv_encoder.6} parent=0 // pred_region
    _
  $region25: #{spiking_conv_encoder.6} parent=0 // pred_fallthru
    _
  // Predicated region
  $region26: #{spiking_conv_encoder.6} parent=0 // pred_check
    _
  $region27: #{spiking_conv_encoder.6} parent=0 // pred_check_branch
    %28 = sbr.rel (0) target = $region29
  $region28: #{spiking_conv_encoder.6} parent=0 // pred_region
    _
  $region29: #{spiking_conv_encoder.6} parent=0 // pred_fallthru
    _
  // Predicated region
  $region30: #{spiking_conv_encoder.6} parent=0 // pred_check
    _
  $region31: #{spiking_conv_encoder.6} parent=0 // pred_check_branch
    %30 = sbr.rel (0) target = $region33
  $region32: #{spiking_conv_encoder.6} parent=0 // pred_region
    _
  $region33: #{spiking_conv_encoder.6} parent=0 // pred_fallthru
    _
  // Predicated region
  $region34: #{spiking_conv_encoder.6} parent=0 // pred_check
    _
  $region35: #{spiking_conv_encoder.6} parent=0 // pred_check_branch
    %32 = sbr.rel (0) target = $region37
  $region36: #{spiking_conv_encoder.6} parent=0 // pred_region
    _
  $region37: #{spiking_conv_encoder.6} parent=0 // pred_fallthru
    _
  // Predicated region
  $region38: #{spiking_conv_encoder.6} parent=0 // pred_check
    _
  $region39: #{spiking_conv_encoder.6} parent=0 // pred_check_branch
    %34 = sbr.rel (0) target = $region41
  $region40: #{spiking_conv_encoder.6} parent=0 // pred_region
    _
  $region41: #{spiking_conv_encoder.6} parent=0 // pred_fallthru
    _
  %v36 = vld [vmem:[%s0] sm:$0xff]
  %v37 = vld [vmem:[%s0 + $0x8] sm:$0xff]
  %v38 = vld [vmem:[%s0 + $0x10] sm:$0xff]
  %v39 = vld [vmem:[%s0 + $0x18] sm:$0xff]
  %v40 = vpack.c.bf16 %v37, %v36
  %v41 = vpack.c.bf16 %v39, %v38
  %v42 = vld [vmem:[%s2] sm:$0xf]
  %v43 = vld [vmem:[%s2 + $0x4] sm:$0xf]
  %v44 = vld [vmem:[%s2 + $0x8] sm:$0xf]
  %v45 = vld [vmem:[%s2 + $0xc] sm:$0xf]
  %v50 = vunpack.c.l.b16 %v42
  %v51 = vunpack.c.l.b16 %v43
  %v52 = vunpack.c.l.b16 %v44
  %v53 = vunpack.c.l.b16 %v45
  %v54 = vpack.c.b16 %v51, %v50
  %v55 = vpack.c.b16 %v53, %v52
  %vm56 = vcmask 261120
  %v58 = vsel %vm56, %v54, 0
  %v61 = vsel %vm56, %v55, 0
  %63 = vmatprep.subr.bf16.mxu0 0
  %64 = vmatpush1.bf16.msra.mxu0 %v40
  %65 = vmatprep.subr.bf16.mxu0 0
  %66 = vmatpush1.bf16.msra.mxu0 %v41
  %67 = vmatprep.subr.bf16.mxu0 0
  %68 = vmatpush1.bf16.msra.mxu0 0
  %69 = vmatprep.subr.bf16.mxu0 0
  %70 = vmatpush1.bf16.msra.mxu0 0
  %71 = vmatprep.subr.bf16.mxu0 0
  %72 = vmatpush1.bf16.msra.mxu0 0
  %73 = vmatprep.subr.bf16.mxu0 0
  %74 = vmatpush1.bf16.msra.mxu0 0
  %75 = vmatprep.subr.bf16.mxu0 0
  %76 = vmatpush1.bf16.msra.mxu0 0
  %77 = vmatprep.subr.bf16.mxu0 0
  %78 = vmatpush1.bf16.msra.mxu0 0
  %79 = vmatprep.subr.bf16.mxu0 0
  %80 = vmatpush1.bf16.msra.mxu0 0
  %81 = vmatprep.subr.bf16.mxu0 0
  %82 = vmatpush1.bf16.msra.mxu0 0
  %83 = vmatprep.subr.bf16.mxu0 0
  %84 = vmatpush1.bf16.msra.mxu0 0
  %85 = vmatprep.subr.bf16.mxu0 0
  %86 = vmatpush1.bf16.msra.mxu0 0
  %87 = vmatprep.subr.bf16.mxu0 0
  %88 = vmatpush1.bf16.msra.mxu0 0
  %89 = vmatprep.subr.bf16.mxu0 0
  %90 = vmatpush1.bf16.msra.mxu0 0
  %91 = vmatprep.subr.bf16.mxu0 0
  %92 = vmatpush1.bf16.msra.mxu0 0
  %93 = vmatprep.subr.bf16.mxu0 0
  %94 = vmatpush1.bf16.msra.mxu0 0
  %95 = vmatprep.mubr.bf16.mxu0 0
  %96 = vmatmul.mubr.bf16.gmra.mrb[0].mxu0 %v58
  %v97 = vpop.f32.mrb[0].mxu0
  %v98 = vadd.f32 0.0, %v97
  %v99 = vpop.f32.mrb[0].mxu0
  %v100 = vpop.f32.mrb[0].mxu0
  %v101 = vadd.f32 0.0, %v100
  %v102 = vpop.f32.mrb[0].mxu0
  %103 = vmatprep.mubr.bf16.mxu0 0
  %104 = vmatmul.mubr.bf16.gmra.mrb[0].mxu0 %v61
  %v105 = vpop.f32.mrb[0].mxu0
  %v106 = vadd.f32 0.0, %v105
  %v107 = vpop.f32.mrb[0].mxu0
  %v108 = vpop.f32.mrb[0].mxu0
  %v109 = vadd.f32 0.0, %v108
  %v110 = vpop.f32.mrb[0].mxu0
  %111 = vdwg.mxu0
  %v112 = vpack.c.bf16 %v101, %v98
  %v113 = vpack.c.bf16 %v109, %v106
  %v114 = vld [vmem:[%s3] sm:$0xf]
  %v115 = vld [vmem:[%s3 + $0x4] sm:$0xf]
  %v116 = vld [vmem:[%s3 + $0x8] sm:$0xf]
  %v117 = vld [vmem:[%s3 + $0xc] sm:$0xf]
  %v122 = vunpack.c.l.b16 %v114
  %v123 = vunpack.c.l.b16 %v115
  %v124 = vunpack.c.l.b16 %v116
  %v125 = vunpack.c.l.b16 %v117
  %v126 = vpack.c.b16 %v123, %v122
  %v127 = vpack.c.b16 %v125, %v124
  %v129 = vsel %vm56, %v126, 0
  %v132 = vsel %vm56, %v127, 0
  %134 = vmatprep.subr.bf16.mxu0 0
  %135 = vmatpush1.bf16.msra.mxu0 %v40
  %136 = vmatprep.subr.bf16.mxu0 0
  %137 = vmatpush1.bf16.msra.mxu0 %v41
  %138 = vmatprep.subr.bf16.mxu0 0
  %139 = vmatpush1.bf16.msra.mxu0 0
  %140 = vmatprep.subr.bf16.mxu0 0
  %141 = vmatpush1.bf16.msra.mxu0 0
  %142 = vmatprep.subr.bf16.mxu0 0
  %143 = vmatpush1.bf16.msra.mxu0 0
  %144 = vmatprep.subr.bf16.mxu0 0
  %145 = vmatpush1.bf16.msra.mxu0 0
  %146 = vmatprep.subr.bf16.mxu0 0
  %147 = vmatpush1.bf16.msra.mxu0 0
  %148 = vmatprep.subr.bf16.mxu0 0
  %149 = vmatpush1.bf16.msra.mxu0 0
  %150 = vmatprep.subr.bf16.mxu0 0
  %151 = vmatpush1.bf16.msra.mxu0 0
  %152 = vmatprep.subr.bf16.mxu0 0
  %153 = vmatpush1.bf16.msra.mxu0 0
  %154 = vmatprep.subr.bf16.mxu0 0
  %155 = vmatpush1.bf16.msra.mxu0 0
  %156 = vmatprep.subr.bf16.mxu0 0
  %157 = vmatpush1.bf16.msra.mxu0 0
  %158 = vmatprep.subr.bf16.mxu0 0
  %159 = vmatpush1.bf16.msra.mxu0 0
  %160 = vmatprep.subr.bf16.mxu0 0
  %161 = vmatpush1.bf16.msra.mxu0 0
  %162 = vmatprep.subr.bf16.mxu0 0
  %163 = vmatpush1.bf16.msra.mxu0 0
  %164 = vmatprep.subr.bf16.mxu0 0
  %165 = vmatpush1.bf16.msra.mxu0 0
  %166 = vmatprep.mubr.bf16.mxu0 0
  %167 = vmatmul.mubr.bf16.gmra.mrb[0].mxu0 %v129
  %v168 = vpop.f32.mrb[0].mxu0
  %v169 = vadd.f32 0.0, %v168
  %v170 = vpop.f32.mrb[0].mxu0
  %v171 = vpop.f32.mrb[0].mxu0
  %v172 = vadd.f32 0.0, %v171
  %v173 = vpop.f32.mrb[0].mxu0
  %174 = vmatprep.mubr.bf16.mxu0 0
  %175 = vmatmul.mubr.bf16.gmra.mrb[0].mxu0 %v132
  %v176 = vpop.f32.mrb[0].mxu0
  %v177 = vadd.f32 0.0, %v176
  %v178 = vpop.f32.mrb[0].mxu0
  %v179 = vpop.f32.mrb[0].mxu0
  %v180 = vadd.f32 0.0, %v179
  %v181 = vpop.f32.mrb[0].mxu0
  %182 = vdwg.mxu0
  %v183 = vpack.c.bf16 %v172, %v169
  %v184 = vpack.c.bf16 %v180, %v177
  %s185 = scalar_lea.vmem %s1, 32
  %v186 = vld [vmem:[%s185] sm:$0xf]
  %v187 = vld [vmem:[%s185 + $0x4] sm:$0xf]
  %v188 = vld [vmem:[%s185 + $0x8] sm:$0xf]
  %v189 = vld [vmem:[%s185 + $0xc] sm:$0xf]
  %v190 = vld [vmem:[%s185 + $0x10] sm:$0xf]
  %v191 = vld [vmem:[%s185 + $0x14] sm:$0xf]
  %v192 = vld [vmem:[%s185 + $0x18] sm:$0xf]
  %v193 = vld [vmem:[%s185 + $0x1c] sm:$0xf]
  %v194 = vld [vmem:[%s1] sm:$0xf]
  %v195 = vld [vmem:[%s1 + $0x4] sm:$0xf]
  %v196 = vld [vmem:[%s1 + $0x8] sm:$0xf]
  %v197 = vld [vmem:[%s1 + $0xc] sm:$0xf]
  %v198 = vld [vmem:[%s1 + $0x10] sm:$0xf]
  %v199 = vld [vmem:[%s1 + $0x14] sm:$0xf]
  %v200 = vld [vmem:[%s1 + $0x18] sm:$0xf]
  %v201 = vld [vmem:[%s1 + $0x1c] sm:$0xf]
  %v210 = vunpack.c.l.b16 %v194
  %v211 = vunpack.c.l.b16 %v195
  %v212 = vunpack.c.l.b16 %v196
  %v213 = vunpack.c.l.b16 %v197
  %v214 = vunpack.c.l.b16 %v198
  %v215 = vunpack.c.l.b16 %v199
  %v216 = vunpack.c.l.b16 %v200
  %v217 = vunpack.c.l.b16 %v201
  %v218 = vpack.c.b16 %v211, %v210
  %v219 = vpack.c.b16 %v213, %v212
  %v220 = vpack.c.b16 %v215, %v214
  %v221 = vpack.c.b16 %v217, %v216
  %vm226 = vcmask 523264
  %v228 = vsel %vm226, %v112, 0
  %v231 = vsel %vm226, %v113, 0
  %233 = vmatprep.subr.bf16.mxu0 0
  %234 = vmatpush1.bf16.msra.mxu0 %v218
  %235 = vmatprep.subr.bf16.mxu0 0
  %236 = vmatpush1.bf16.msra.mxu0 %v219
  %237 = vmatprep.subr.bf16.mxu0 0
  %238 = vmatpush1.bf16.msra.mxu0 %v220
  %239 = vmatprep.subr.bf16.mxu0 0
  %240 = vmatpush1.bf16.msra.mxu0 %v221
  %241 = vmatprep.subr.bf16.mxu0 0
  %242 = vmatpush1.bf16.msra.mxu0 0
  %243 = vmatprep.subr.bf16.mxu0 0
  %244 = vmatpush1.bf16.msra.mxu0 0
  %245 = vmatprep.subr.bf16.mxu0 0
  %246 = vmatpush1.bf16.msra.mxu0 0
  %247 = vmatprep.subr.bf16.mxu0 0
  %248 = vmatpush1.bf16.msra.mxu0 0
  %249 = vmatprep.subr.bf16.mxu0 0
  %250 = vmatpush1.bf16.msra.mxu0 0
  %251 = vmatprep.subr.bf16.mxu0 0
  %252 = vmatpush1.bf16.msra.mxu0 0
  %253 = vmatprep.subr.bf16.mxu0 0
  %254 = vmatpush1.bf16.msra.mxu0 0
  %255 = vmatprep.subr.bf16.mxu0 0
  %256 = vmatpush1.bf16.msra.mxu0 0
  %257 = vmatprep.subr.bf16.mxu0 0
  %258 = vmatpush1.bf16.msra.mxu0 0
  %259 = vmatprep.subr.bf16.mxu0 0
  %260 = vmatpush1.bf16.msra.mxu0 0
  %261 = vmatprep.subr.bf16.mxu0 0
  %262 = vmatpush1.bf16.msra.mxu0 0
  %263 = vmatprep.subr.bf16.mxu0 0
  %264 = vmatpush1.bf16.msra.mxu0 0
  %265 = vmatprep.mubr.bf16.mxu0 0
  %266 = vmatmul.mubr.bf16.gmra.mrb[0].mxu0 %v228
  %v267 = vpop.f32.mrb[0].mxu0
  %v268 = vadd.f32 0.0, %v267
  %v269 = vpop.f32.mrb[0].mxu0
  %v270 = vpop.f32.mrb[0].mxu0
  %v271 = vadd.f32 0.0, %v270
  %v272 = vpop.f32.mrb[0].mxu0
  %273 = vmatprep.mubr.bf16.mxu0 0
  %274 = vmatmul.mubr.bf16.gmra.mrb[0].mxu0 %v231
  %v275 = vpop.f32.mrb[0].mxu0
  %v276 = vadd.f32 0.0, %v275
  %v277 = vpop.f32.mrb[0].mxu0
  %v278 = vpop.f32.mrb[0].mxu0
  %v279 = vadd.f32 0.0, %v278
  %v280 = vpop.f32.mrb[0].mxu0
  %281 = vdwg.mxu0
  %v290 = vunpack.c.l.b16 %v186
  %v291 = vunpack.c.l.b16 %v187
  %v292 = vunpack.c.l.b16 %v188
  %v293 = vunpack.c.l.b16 %v189
  %v294 = vunpack.c.l.b16 %v190
  %v295 = vunpack.c.l.b16 %v191
  %v296 = vunpack.c.l.b16 %v192
  %v297 = vunpack.c.l.b16 %v193
  %v298 = vpack.c.b16 %v291, %v290
  %v299 = vpack.c.b16 %v293, %v292
  %v300 = vpack.c.b16 %v295, %v294
  %v301 = vpack.c.b16 %v297, %v296
  %v307 = vsel %vm226, %v40, 0
  %v310 = vsel %vm226, %v41, 0
  %312 = vmatprep.subr.bf16.mxu0 0
  %313 = vmatpush1.bf16.msra.mxu0 %v298
  %314 = vmatprep.subr.bf16.mxu0 0
  %315 = vmatpush1.bf16.msra.mxu0 %v299
  %316 = vmatprep.subr.bf16.mxu0 0
  %317 = vmatpush1.bf16.msra.mxu0 %v300
  %318 = vmatprep.subr.bf16.mxu0 0
  %319 = vmatpush1.bf16.msra.mxu0 %v301
  %320 = vmatprep.subr.bf16.mxu0 0
  %321 = vmatpush1.bf16.msra.mxu0 0
  %322 = vmatprep.subr.bf16.mxu0 0
  %323 = vmatpush1.bf16.msra.mxu0 0
  %324 = vmatprep.subr.bf16.mxu0 0
  %325 = vmatpush1.bf16.msra.mxu0 0
  %326 = vmatprep.subr.bf16.mxu0 0
  %327 = vmatpush1.bf16.msra.mxu0 0
  %328 = vmatprep.subr.bf16.mxu0 0
  %329 = vmatpush1.bf16.msra.mxu0 0
  %330 = vmatprep.subr.bf16.mxu0 0
  %331 = vmatpush1.bf16.msra.mxu0 0
  %332 = vmatprep.subr.bf16.mxu0 0
  %333 = vmatpush1.bf16.msra.mxu0 0
  %334 = vmatprep.subr.bf16.mxu0 0
  %335 = vmatpush1.bf16.msra.mxu0 0
  %336 = vmatprep.subr.bf16.mxu0 0
  %337 = vmatpush1.bf16.msra.mxu0 0
  %338 = vmatprep.subr.bf16.mxu0 0
  %339 = vmatpush1.bf16.msra.mxu0 0
  %340 = vmatprep.subr.bf16.mxu0 0
  %341 = vmatpush1.bf16.msra.mxu0 0
  %342 = vmatprep.subr.bf16.mxu0 0
  %343 = vmatpush1.bf16.msra.mxu0 0
  %344 = vmatprep.mubr.bf16.mxu0 0
  %345 = vmatmul.mubr.bf16.gmra.mrb[0].mxu0 %v307
  %v346 = vpop.f32.mrb[0].mxu0
  %v347 = vadd.f32 %v268, %v346
  %v348 = vpop.f32.mrb[0].mxu0
  %v349 = vpop.f32.mrb[0].mxu0
  %v350 = vadd.f32 %v271, %v349
  %v351 = vpop.f32.mrb[0].mxu0
  %352 = vmatprep.mubr.bf16.mxu0 0
  %353 = vmatmul.mubr.bf16.gmra.mrb[0].mxu0 %v310
  %v354 = vpop.f32.mrb[0].mxu0
  %v355 = vadd.f32 %v276, %v354
  %v356 = vpop.f32.mrb[0].mxu0
  %v357 = vpop.f32.mrb[0].mxu0
  %v358 = vadd.f32 %v279, %v357
  %v359 = vpop.f32.mrb[0].mxu0
  %360 = vdwg.mxu0
  %s361 = scalar_lea.vmem %s1, 64
  %v362 = vld [vmem:[%s361] sm:$0xf]
  %v363 = vld [vmem:[%s361 + $0x4] sm:$0xf]
  %v364 = vld [vmem:[%s361 + $0x8] sm:$0xf]
  %v365 = vld [vmem:[%s361 + $0xc] sm:$0xf]
  %v366 = vld [vmem:[%s361 + $0x10] sm:$0xf]
  %v367 = vld [vmem:[%s361 + $0x14] sm:$0xf]
  %v368 = vld [vmem:[%s361 + $0x18] sm:$0xf]
  %v369 = vld [vmem:[%s361 + $0x1c] sm:$0xf]
  %v378 = vunpack.c.l.b16 %v362
  %v379 = vunpack.c.l.b16 %v363
  %v380 = vunpack.c.l.b16 %v364
  %v381 = vunpack.c.l.b16 %v365
  %v382 = vunpack.c.l.b16 %v366
  %v383 = vunpack.c.l.b16 %v367
  %v384 = vunpack.c.l.b16 %v368
  %v385 = vunpack.c.l.b16 %v369
  %v386 = vpack.c.b16 %v379, %v378
  %v387 = vpack.c.b16 %v381, %v380
  %v388 = vpack.c.b16 %v383, %v382
  %v389 = vpack.c.b16 %v385, %v384
  %v395 = vsel %vm226, %v183, 0
  %v398 = vsel %vm226, %v184, 0
  %400 = vmatprep.subr.bf16.mxu0 0
  %401 = vmatpush1.bf16.msra.mxu0 %v386
  %402 = vmatprep.subr.bf16.mxu0 0
  %403 = vmatpush1.bf16.msra.mxu0 %v387
  %404 = vmatprep.subr.bf16.mxu0 0
  %405 = vmatpush1.bf16.msra.mxu0 %v388
  %406 = vmatprep.subr.bf16.mxu0 0
  %407 = vmatpush1.bf16.msra.mxu0 %v389
  %408 = vmatprep.subr.bf16.mxu0 0
  %409 = vmatpush1.bf16.msra.mxu0 0
  %410 = vmatprep.subr.bf16.mxu0 0
  %411 = vmatpush1.bf16.msra.mxu0 0
  %412 = vmatprep.subr.bf16.mxu0 0
  %413 = vmatpush1.bf16.msra.mxu0 0
  %414 = vmatprep.subr.bf16.mxu0 0
  %415 = vmatpush1.bf16.msra.mxu0 0
  %416 = vmatprep.subr.bf16.mxu0 0
  %417 = vmatpush1.bf16.msra.mxu0 0
  %418 = vmatprep.subr.bf16.mxu0 0
  %419 = vmatpush1.bf16.msra.mxu0 0
  %420 = vmatprep.subr.bf16.mxu0 0
  %421 = vmatpush1.bf16.msra.mxu0 0
  %422 = vmatprep.subr.bf16.mxu0 0
  %423 = vmatpush1.bf16.msra.mxu0 0
  %424 = vmatprep.subr.bf16.mxu0 0
  %425 = vmatpush1.bf16.msra.mxu0 0
  %426 = vmatprep.subr.bf16.mxu0 0
  %427 = vmatpush1.bf16.msra.mxu0 0
  %428 = vmatprep.subr.bf16.mxu0 0
  %429 = vmatpush1.bf16.msra.mxu0 0
  %430 = vmatprep.subr.bf16.mxu0 0
  %431 = vmatpush1.bf16.msra.mxu0 0
  %432 = vmatprep.mubr.bf16.mxu0 0
  %433 = vmatmul.mubr.bf16.gmra.mrb[0].mxu0 %v395
  %v434 = vpop.f32.mrb[0].mxu0
  %v435 = vadd.f32 0.0, %v434
  %v436 = vpop.f32.mrb[0].mxu0
  %v437 = vpop.f32.mrb[0].mxu0
  %v438 = vadd.f32 0.0, %v437
  %v439 = vpop.f32.mrb[0].mxu0
  %440 = vmatprep.mubr.bf16.mxu0 0
  %441 = vmatmul.mubr.bf16.gmra.mrb[0].mxu0 %v398
  %v442 = vpop.f32.mrb[0].mxu0
  %v443 = vadd.f32 0.0, %v442
  %v444 = vpop.f32.mrb[0].mxu0
  %v445 = vpop.f32.mrb[0].mxu0
  %v446 = vadd.f32 0.0, %v445
  %v447 = vpop.f32.mrb[0].mxu0
  %448 = vdwg.mxu0
  %v449 = vadd.f32 %v347, %v435
  %v450 = vadd.f32 %v350, %v438
  %v451 = vadd.f32 %v355, %v443
  %v452 = vadd.f32 %v358, %v446
  %453 = vst [vmem:[#allocation2] sm:$0xff] %v449
  %454 = vst [vmem:[#allocation2 + $0x8] sm:$0xff] %v450
  %455 = vst [vmem:[#allocation2 + $0x10] sm:$0xff] %v451
  %456 = vst [vmem:[#allocation2 + $0x18] sm:$0xff] %v452
  %v457 = vld [vmem:[%s6] sm:$0xff]
  %v458 = vld [vmem:[%s6 + $0x8] sm:$0xff]
  %v459 = vld [vmem:[%s6 + $0x10] sm:$0xff]
  %v460 = vld [vmem:[%s6 + $0x18] sm:$0xff]
  %v461 = vld [vmem:[%s6 + $0x20] sm:$0xff]
  %v462 = vld [vmem:[%s6 + $0x28] sm:$0xff]
  %v463 = vld [vmem:[%s6 + $0x30] sm:$0xff]
  %v464 = vld [vmem:[%s6 + $0x38] sm:$0xff]
  %v465 = vld [vmem:[%s6 + $0x40] sm:$0xff]
  %v466 = vld [vmem:[%s6 + $0x48] sm:$0xff]
  %v467 = vld [vmem:[%s6 + $0x50] sm:$0xff]
  %v468 = vld [vmem:[%s6 + $0x58] sm:$0xff]
  %v469 = vld [vmem:[%s6 + $0x60] sm:$0xff]
  %v470 = vld [vmem:[%s6 + $0x68] sm:$0xff]
  %v471 = vld [vmem:[%s6 + $0x70] sm:$0xff]
  %v472 = vld [vmem:[%s6 + $0x78] sm:$0xff]
  %473 = vmatprep.subr.mxu0 0.0
  %474 = vmatpush1.msra.mxu0 %v457
  %475 = vmatprep.subr.mxu0 0.0
  %476 = vmatpush1.msra.mxu0 %v458
  %477 = vmatprep.subr.mxu0 0.0
  %478 = vmatpush1.msra.mxu0 %v459
  %479 = vmatprep.subr.mxu0 0.0
  %480 = vmatpush1.msra.mxu0 %v460
  %481 = vmatprep.subr.mxu0 0.0
  %482 = vmatpush1.msra.mxu0 %v461
  %483 = vmatprep.subr.mxu0 0.0
  %484 = vmatpush1.msra.mxu0 %v462
  %485 = vmatprep.subr.mxu0 0.0
  %486 = vmatpush1.msra.mxu0 %v463
  %487 = vmatprep.subr.mxu0 0.0
  %488 = vmatpush1.msra.mxu0 %v464
  %489 = vmatprep.subr.mxu0 0.0
  %490 = vmatpush1.msra.mxu0 %v465
  %491 = vmatprep.subr.mxu0 0.0
  %492 = vmatpush1.msra.mxu0 %v466
  %493 = vmatprep.subr.mxu0 0.0
  %494 = vmatpush1.msra.mxu0 %v467
  %495 = vmatprep.subr.mxu0 0.0
  %496 = vmatpush1.msra.mxu0 %v468
  %497 = vmatprep.subr.mxu0 0.0
  %498 = vmatpush1.msra.mxu0 %v469
  %499 = vmatprep.subr.mxu0 0.0
  %500 = vmatpush1.msra.mxu0 %v470
  %501 = vmatprep.subr.mxu0 0.0
  %502 = vmatpush1.msra.mxu0 %v471
  %503 = vmatprep.subr.mxu0 0.0
  %504 = vmatpush1.msra.mxu0 %v472
  %505 = vmatprep.subr.mxu0 0.0
  %506 = vmatpush1.msra.mxu0 0.0
  %507 = vmatprep.subr.mxu0 0.0
  %508 = vmatpush1.msra.mxu0 0.0
  %509 = vmatprep.subr.mxu0 0.0
  %510 = vmatpush1.msra.mxu0 0.0
  %511 = vmatprep.subr.mxu0 0.0
  %512 = vmatpush1.msra.mxu0 0.0
  %513 = vmatprep.subr.mxu0 0.0
  %514 = vmatpush1.msra.mxu0 0.0
  %515 = vmatprep.subr.mxu0 0.0
  %516 = vmatpush1.msra.mxu0 0.0
  %517 = vmatprep.subr.mxu0 0.0
  %518 = vmatpush1.msra.mxu0 0.0
  %519 = vmatprep.subr.mxu0 0.0
  %520 = vmatpush1.msra.mxu0 0.0
  %521 = vmatprep.subr.mxu0 0.0
  %522 = vmatpush1.msra.mxu0 0.0
  %523 = vmatprep.subr.mxu0 0.0
  %524 = vmatpush1.msra.mxu0 0.0
  %525 = vmatprep.subr.mxu0 0.0
  %526 = vmatpush1.msra.mxu0 0.0
  %527 = vmatprep.subr.mxu0 0.0
  %528 = vmatpush1.msra.mxu0 0.0
  %529 = vmatprep.subr.mxu0 0.0
  %530 = vmatpush1.msra.mxu0 0.0
  %531 = vmatprep.subr.mxu0 0.0
  %532 = vmatpush1.msra.mxu0 0.0
  %533 = vmatprep.subr.mxu0 0.0
  %534 = vmatpush1.msra.mxu0 0.0
  %535 = vmatprep.subr.mxu0 0.0
  %536 = vmatpush1.msra.mxu0 0.0
  %537 = vmatprep.mubr.f32.mxu0 0.0
  %538 = vmatmul.mubr.f32.gmra.mrb[0].mxu0 %v449
  %v539 = vpop.f32.mrb[0].mxu0
  %v540 = vadd.f32 0.0, %v539
  %v541 = vpop.f32.mrb[0].mxu0
  %542 = vmatprep.mubr.f32.mxu0 0.0
  %543 = vmatmul.mubr.f32.gmra.mrb[0].mxu0 %v450
  %v544 = vpop.f32.mrb[0].mxu0
  %v545 = vadd.f32 0.0, %v544
  %v546 = vpop.f32.mrb[0].mxu0
  %547 = vmatprep.mubr.f32.mxu0 0.0
  %548 = vmatmul.mubr.f32.gmra.mrb[0].mxu0 %v451
  %v549 = vpop.f32.mrb[0].mxu0
  %v550 = vadd.f32 0.0, %v549
  %v551 = vpop.f32.mrb[0].mxu0
  %552 = vmatprep.mubr.f32.mxu0 0.0
  %553 = vmatmul.mubr.f32.gmra.mrb[0].mxu0 %v452
  %v554 = vpop.f32.mrb[0].mxu0
  %v555 = vadd.f32 0.0, %v554
  %v556 = vpop.f32.mrb[0].mxu0
  %557 = vdwg.mxu0
  %v558 = vsel %vm56, %v540, 0.0
  %v559 = vsel %vm56, %v545, 0.0
  %v560 = vadd.f32 %v558, %v559
  %v561 = vsel %vm56, %v550, 0.0
  %v562 = vadd.f32 %v560, %v561
  %v563 = vsel %vm56, %v555, 0.0
  %v564 = vadd.f32 %v562, %v563
  %v565 = vrot.slane %v564, 4
  %v566 = vadd.f32 %v564, %v565
  %v567 = vrot.slane %v566, 2
  %v568 = vadd.f32 %v566, %v567
  %v569 = vrot.slane %v568, 1
  %v570 = vadd.f32 %v568, %v569
  %v571 = vmul.f32 %v449, %v449
  %v572 = vmul.f32 %v450, %v450
  %v573 = vmul.f32 %v451, %v451
  %v574 = vmul.f32 %v452, %v452
  %575 = vmatprep.subr.mxu0 0.0
  %576 = vmatpush1.msra.mxu0 %v457
  %577 = vmatprep.subr.mxu0 0.0
  %578 = vmatpush1.msra.mxu0 %v458
  %579 = vmatprep.subr.mxu0 0.0
  %580 = vmatpush1.msra.mxu0 %v459
  %581 = vmatprep.subr.mxu0 0.0
  %582 = vmatpush1.msra.mxu0 %v460
  %583 = vmatprep.subr.mxu0 0.0
  %584 = vmatpush1.msra.mxu0 %v461
  %585 = vmatprep.subr.mxu0 0.0
  %586 = vmatpush1.msra.mxu0 %v462
  %587 = vmatprep.subr.mxu0 0.0
  %588 = vmatpush1.msra.mxu0 %v463
  %589 = vmatprep.subr.mxu0 0.0
  %590 = vmatpush1.msra.mxu0 %v464
  %591 = vmatprep.subr.mxu0 0.0
  %592 = vmatpush1.msra.mxu0 %v465
  %593 = vmatprep.subr.mxu0 0.0
  %594 = vmatpush1.msra.mxu0 %v466
  %595 = vmatprep.subr.mxu0 0.0
  %596 = vmatpush1.msra.mxu0 %v467
  %597 = vmatprep.subr.mxu0 0.0
  %598 = vmatpush1.msra.mxu0 %v468
  %599 = vmatprep.subr.mxu0 0.0
  %600 = vmatpush1.msra.mxu0 %v469
  %601 = vmatprep.subr.mxu0 0.0
  %602 = vmatpush1.msra.mxu0 %v470
  %603 = vmatprep.subr.mxu0 0.0
  %604 = vmatpush1.msra.mxu0 %v471
  %605 = vmatprep.subr.mxu0 0.0
  %606 = vmatpush1.msra.mxu0 %v472
  %607 = vmatprep.subr.mxu0 0.0
  %608 = vmatpush1.msra.mxu0 0.0
  %609 = vmatprep.subr.mxu0 0.0
  %610 = vmatpush1.msra.mxu0 0.0
  %611 = vmatprep.subr.mxu0 0.0
  %612 = vmatpush1.msra.mxu0 0.0
  %613 = vmatprep.subr.mxu0 0.0
  %614 = vmatpush1.msra.mxu0 0.0
  %615 = vmatprep.subr.mxu0 0.0
  %616 = vmatpush1.msra.mxu0 0.0
  %617 = vmatprep.subr.mxu0 0.0
  %618 = vmatpush1.msra.mxu0 0.0
  %619 = vmatprep.subr.mxu0 0.0
  %620 = vmatpush1.msra.mxu0 0.0
  %621 = vmatprep.subr.mxu0 0.0
  %622 = vmatpush1.msra.mxu0 0.0
  %623 = vmatprep.subr.mxu0 0.0
  %624 = vmatpush1.msra.mxu0 0.0
  %625 = vmatprep.subr.mxu0 0.0
  %626 = vmatpush1.msra.mxu0 0.0
  %627 = vmatprep.subr.mxu0 0.0
  %628 = vmatpush1.msra.mxu0 0.0
  %629 = vmatprep.subr.mxu0 0.0
  %630 = vmatpush1.msra.mxu0 0.0
  %631 = vmatprep.subr.mxu0 0.0
  %632 = vmatpush1.msra.mxu0 0.0
  %633 = vmatprep.subr.mxu0 0.0
  %634 = vmatpush1.msra.mxu0 0.0
  %635 = vmatprep.subr.mxu0 0.0
  %636 = vmatpush1.msra.mxu0 0.0
  %637 = vmatprep.subr.mxu0 0.0
  %638 = vmatpush1.msra.mxu0 0.0
  %639 = vmatprep.mubr.f32.mxu0 0.0
  %640 = vmatmul.mubr.f32.gmra.mrb[0].mxu0 %v571
  %v641 = vpop.f32.mrb[0].mxu0
  %v642 = vadd.f32 0.0, %v641
  %v643 = vpop.f32.mrb[0].mxu0
  %644 = vmatprep.mubr.f32.mxu0 0.0
  %645 = vmatmul.mubr.f32.gmra.mrb[0].mxu0 %v572
  %v646 = vpop.f32.mrb[0].mxu0
  %v647 = vadd.f32 0.0, %v646
  %v648 = vpop.f32.mrb[0].mxu0
  %649 = vmatprep.mubr.f32.mxu0 0.0
  %650 = vmatmul.mubr.f32.gmra.mrb[0].mxu0 %v573
  %v651 = vpop.f32.mrb[0].mxu0
  %v652 = vadd.f32 0.0, %v651
  %v653 = vpop.f32.mrb[0].mxu0
  %654 = vmatprep.mubr.f32.mxu0 0.0
  %655 = vmatmul.mubr.f32.gmra.mrb[0].mxu0 %v574
  %v656 = vpop.f32.mrb[0].mxu0
  %v657 = vadd.f32 0.0, %v656
  %v658 = vpop.f32.mrb[0].mxu0
  %659 = vdwg.mxu0
  %v660 = vsel %vm56, %v642, 0.0
  %v661 = vsel %vm56, %v647, 0.0
  %v662 = vadd.f32 %v660, %v661
  %v663 = vsel %vm56, %v652, 0.0
  %v664 = vadd.f32 %v662, %v663
  %v665 = vsel %vm56, %v657, 0.0
  %v666 = vadd.f32 %v664, %v665
  %v667 = vrot.slane %v666, 4
  %v668 = vadd.f32 %v666, %v667
  %v669 = vrot.slane %v668, 2
  %v670 = vadd.f32 %v668, %v669
  %v671 = vrot.slane %v670, 1
  %v672 = vadd.f32 %v670, %v671
  %v673 = vmul.f32 %v570, 0.0078125
  %v674 = vmul.f32 %v672, 0.0078125
  %v675 = vmul.f32 %v673, %v673
  %v676 = vsub.f32 %v674, %v675
  %v677 = vmax.f32 %v676, 0.0
  %v678 = vld [vmem:[%s4] sm:$0x1]
  %v679 = vadd.f32 %v677, 1e-05
  %v680 = vrsqrt.pop %v679
  %v681 = vmul.f32 %v678, %v680
  %v682 = vld [vmem:[%s5] sm:$0x1]
  %v683 = vmul.f32 %v673, %v681
  %v684 = vsub.f32 %v682, %v683
  %v685 = vld [vmem:[%s7] sm:$0xff]
  %v686 = vld [vmem:[%s7 + $0x8] sm:$0xff]
  %v687 = vld [vmem:[%s7 + $0x10] sm:$0xff]
  %v688 = vld [vmem:[%s7 + $0x18] sm:$0xff]
  %v690 = vsel %vm56, %v681, 0
  %692 = vmatprep.subr.mxu0 0.0
  %693 = vmatpush1.msra.mxu0 %v685
  %694 = vmatprep.subr.mxu0 0.0
  %695 = vmatpush1.msra.mxu0 %v686
  %696 = vmatprep.subr.mxu0 0.0
  %697 = vmatpush1.msra.mxu0 %v687
  %698 = vmatprep.subr.mxu0 0.0
  %699 = vmatpush1.msra.mxu0 %v688
  %700 = vmatprep.subr.mxu0 0.0
  %701 = vmatpush1.msra.mxu0 0.0
  %702 = vmatprep.subr.mxu0 0.0
  %703 = vmatpush1.msra.mxu0 0.0
  %704 = vmatprep.subr.mxu0 0.0
  %705 = vmatpush1.msra.mxu0 0.0
  %706 = vmatprep.subr.mxu0 0.0
  %707 = vmatpush1.msra.mxu0 0.0
  %708 = vmatprep.subr.mxu0 0.0
  %709 = vmatpush1.msra.mxu0 0.0
  %710 = vmatprep.subr.mxu0 0.0
  %711 = vmatpush1.msra.mxu0 0.0
  %712 = vmatprep.subr.mxu0 0.0
  %713 = vmatpush1.msra.mxu0 0.0
  %714 = vmatprep.subr.mxu0 0.0
  %715 = vmatpush1.msra.mxu0 0.0
  %716 = vmatprep.subr.mxu0 0.0
  %717 = vmatpush1.msra.mxu0 0.0
  %718 = vmatprep.subr.mxu0 0.0
  %719 = vmatpush1.msra.mxu0 0.0
  %720 = vmatprep.subr.mxu0 0.0
  %721 = vmatpush1.msra.mxu0 0.0
  %722 = vmatprep.subr.mxu0 0.0
  %723 = vmatpush1.msra.mxu0 0.0
  %724 = vmatprep.subr.mxu0 0.0
  %725 = vmatpush1.msra.mxu0 0.0
  %726 = vmatprep.subr.mxu0 0.0
  %727 = vmatpush1.msra.mxu0 0.0
  %728 = vmatprep.subr.mxu0 0.0
  %729 = vmatpush1.msra.mxu0 0.0
  %730 = vmatprep.subr.mxu0 0.0
  %731 = vmatpush1.msra.mxu0 0.0
  %732 = vmatprep.subr.mxu0 0.0
  %733 = vmatpush1.msra.mxu0 0.0
  %734 = vmatprep.subr.mxu0 0.0
  %735 = vmatpush1.msra.mxu0 0.0
  %736 = vmatprep.subr.mxu0 0.0
  %737 = vmatpush1.msra.mxu0 0.0
  %738 = vmatprep.subr.mxu0 0.0
  %739 = vmatpush1.msra.mxu0 0.0
  %740 = vmatprep.subr.mxu0 0.0
  %741 = vmatpush1.msra.mxu0 0.0
  %742 = vmatprep.subr.mxu0 0.0
  %743 = vmatpush1.msra.mxu0 0.0
  %744 = vmatprep.subr.mxu0 0.0
  %745 = vmatpush1.msra.mxu0 0.0
  %746 = vmatprep.subr.mxu0 0.0
  %747 = vmatpush1.msra.mxu0 0.0
  %748 = vmatprep.subr.mxu0 0.0
  %749 = vmatpush1.msra.mxu0 0.0
  %750 = vmatprep.subr.mxu0 0.0
  %751 = vmatpush1.msra.mxu0 0.0
  %752 = vmatprep.subr.mxu0 0.0
  %753 = vmatpush1.msra.mxu0 0.0
  %754 = vmatprep.subr.mxu0 0.0
  %755 = vmatpush1.msra.mxu0 0.0
  %756 = vmatprep.mubr.f32.mxu0 0.0
  %757 = vmatmul.mubr.f32.gmra.mrb[0].mxu0 %v690
  %v758 = vpop.f32.mrb[0].mxu0
  %v759 = vadd.f32 0.0, %v758
  %v760 = vpop.f32.mrb[0].mxu0
  %761 = vdwg.mxu0
  %v763 = vsel %vm56, %v684, 0
  %765 = vmatprep.subr.mxu0 0.0
  %766 = vmatpush1.msra.mxu0 %v685
  %767 = vmatprep.subr.mxu0 0.0
  %768 = vmatpush1.msra.mxu0 %v686
  %769 = vmatprep.subr.mxu0 0.0
  %770 = vmatpush1.msra.mxu0 %v687
  %771 = vmatprep.subr.mxu0 0.0
  %772 = vmatpush1.msra.mxu0 %v688
  %773 = vmatprep.subr.mxu0 0.0
  %774 = vmatpush1.msra.mxu0 0.0
  %775 = vmatprep.subr.mxu0 0.0
  %776 = vmatpush1.msra.mxu0 0.0
  %777 = vmatprep.subr.mxu0 0.0
  %778 = vmatpush1.msra.mxu0 0.0
  %779 = vmatprep.subr.mxu0 0.0
  %780 = vmatpush1.msra.mxu0 0.0
  %781 = vmatprep.subr.mxu0 0.0
  %782 = vmatpush1.msra.mxu0 0.0
  %783 = vmatprep.subr.mxu0 0.0
  %784 = vmatpush1.msra.mxu0 0.0
  %785 = vmatprep.subr.mxu0 0.0
  %786 = vmatpush1.msra.mxu0 0.0
  %787 = vmatprep.subr.mxu0 0.0
  %788 = vmatpush1.msra.mxu0 0.0
  %789 = vmatprep.subr.mxu0 0.0
  %790 = vmatpush1.msra.mxu0 0.0
  %791 = vmatprep.subr.mxu0 0.0
  %792 = vmatpush1.msra.mxu0 0.0
  %793 = vmatprep.subr.mxu0 0.0
  %794 = vmatpush1.msra.mxu0 0.0
  %795 = vmatprep.subr.mxu0 0.0
  %796 = vmatpush1.msra.mxu0 0.0
  %797 = vmatprep.subr.mxu0 0.0
  %798 = vmatpush1.msra.mxu0 0.0
  %799 = vmatprep.subr.mxu0 0.0
  %800 = vmatpush1.msra.mxu0 0.0
  %801 = vmatprep.subr.mxu0 0.0
  %802 = vmatpush1.msra.mxu0 0.0
  %803 = vmatprep.subr.mxu0 0.0
  %804 = vmatpush1.msra.mxu0 0.0
  %805 = vmatprep.subr.mxu0 0.0
  %806 = vmatpush1.msra.mxu0 0.0
  %807 = vmatprep.subr.mxu0 0.0
  %808 = vmatpush1.msra.mxu0 0.0
  %809 = vmatprep.subr.mxu0 0.0
  %810 = vmatpush1.msra.mxu0 0.0
  %811 = vmatprep.subr.mxu0 0.0
  %812 = vmatpush1.msra.mxu0 0.0
  %813 = vmatprep.subr.mxu0 0.0
  %814 = vmatpush1.msra.mxu0 0.0
  %815 = vmatprep.subr.mxu0 0.0
  %816 = vmatpush1.msra.mxu0 0.0
  %817 = vmatprep.subr.mxu0 0.0
  %818 = vmatpush1.msra.mxu0 0.0
  %819 = vmatprep.subr.mxu0 0.0
  %820 = vmatpush1.msra.mxu0 0.0
  %821 = vmatprep.subr.mxu0 0.0
  %822 = vmatpush1.msra.mxu0 0.0
  %823 = vmatprep.subr.mxu0 0.0
  %824 = vmatpush1.msra.mxu0 0.0
  %825 = vmatprep.subr.mxu0 0.0
  %826 = vmatpush1.msra.mxu0 0.0
  %827 = vmatprep.subr.mxu0 0.0
  %828 = vmatpush1.msra.mxu0 0.0
  %829 = vmatprep.mubr.f32.mxu0 0.0
  %830 = vmatmul.mubr.f32.gmra.mrb[0].mxu0 %v763
  %v831 = vpop.f32.mrb[0].mxu0
  %v832 = vadd.f32 0.0, %v831
  %v833 = vpop.f32.mrb[0].mxu0
  %834 = vdwg.mxu0
  %v835 = vld [vmem:[#allocation2] sm:$0xff]
  %v836 = vlaneseq
  %v837 = vshrl.u32 %v836, 7
  %v838 = vsub.s32 0, %v837
  %v839 = vrot.slane %v759, %v838
  %v840 = vmul.f32 %v835, %v839
  %v841 = vadd.f32 %v840, 0.0
  %v842 = vlaneseq
  %v843 = vshrl.u32 %v842, 7
  %v844 = vsub.s32 0, %v843
  %v845 = vrot.slane %v832, %v844
  %v846 = vadd.f32 %v841, %v845
  %vm847 = vcmp.ge.f32.partialorder %v846, 1.0
  %v848 = vsel %vm847, 0.0, %v846
  %v849 = vsel %vm847, 1, 0
  %v850 = vcvt.s32.f32 %v849
  %851 = vst [vmem:[#allocation2] sm:$0xff] %v850
  %v852 = vld [vmem:[#allocation2 + $0x8] sm:$0xff]
  %v853 = vmul.f32 %v852, %v839
  %v854 = vadd.f32 %v848, %v853
  %v855 = vadd.f32 %v854, %v845
  %vm856 = vcmp.ge.f32.partialorder %v855, 1.0
  %v857 = vsel %vm856, 0.0, %v855
  %v858 = vsel %vm856, 1, 0
  %v859 = vcvt.s32.f32 %v858
  %860 = vst [vmem:[#allocation2 + $0x8] sm:$0xff] %v859
  %v861 = vld [vmem:[#allocation2 + $0x10] sm:$0xff]
  %v862 = vmul.f32 %v861, %v839
  %v863 = vadd.f32 %v857, %v862
  %v864 = vadd.f32 %v863, %v845
  %vm865 = vcmp.ge.f32.partialorder %v864, 1.0
  %v866 = vsel %vm865, 0.0, %v864
  %v867 = vsel %vm865, 1, 0
  %v868 = vcvt.s32.f32 %v867
  %869 = vst [vmem:[#allocation2 + $0x10] sm:$0xff] %v868
  %v870 = vld [vmem:[#allocation2 + $0x18] sm:$0xff]
  %v871 = vmul.f32 %v870, %v839
  %v872 = vadd.f32 %v866, %v871
  %v873 = vadd.f32 %v872, %v845
  %vm874 = vcmp.ge.f32.partialorder %v873, 1.0
  %v875 = vsel %vm874, 1, 0
  %v876 = vcvt.s32.f32 %v875
  %877 = vst [vmem:[#allocation2 + $0x18] sm:$0xff] %v876
  %v878 = vld [vmem:[#allocation2] sm:$0xff]
  %v879 = vld [vmem:[#allocation2 + $0x8] sm:$0xff]
  %v880 = vld [vmem:[#allocation2 + $0x10] sm:$0xff]
  %v881 = vld [vmem:[#allocation2 + $0x18] sm:$0xff]
  %v882 = vpack.c.bf16 %v879, %v878
  %v883 = vpack.c.bf16 %v881, %v880
  %v884 = vld [vmem:[%s8] sm:$0xf]
  %v885 = vld [vmem:[%s8 + $0x4] sm:$0xf]
  %v888 = vunpack.c.l.b16 %v884
  %v889 = vunpack.c.l.b16 %v885
  %v890 = vpack.c.b16 %v889, %v888
  %v892 = vsel %vm56, %v890, 0
  %894 = vmatprep.subr.bf16.mxu0 0
  %895 = vmatpush1.bf16.msra.mxu0 %v882
  %896 = vmatprep.subr.bf16.mxu0 0
  %897 = vmatpush1.bf16.msra.mxu0 %v883
  %898 = vmatprep.subr.bf16.mxu0 0
  %899 = vmatpush1.bf16.msra.mxu0 0
  %900 = vmatprep.subr.bf16.mxu0 0
  %901 = vmatpush1.bf16.msra.mxu0 0
  %902 = vmatprep.subr.bf16.mxu0 0
  %903 = vmatpush1.bf16.msra.mxu0 0
  %904 = vmatprep.subr.bf16.mxu0 0
  %905 = vmatpush1.bf16.msra.mxu0 0
  %906 = vmatprep.subr.bf16.mxu0 0
  %907 = vmatpush1.bf16.msra.mxu0 0
  %908 = vmatprep.subr.bf16.mxu0 0
  %909 = vmatpush1.bf16.msra.mxu0 0
  %910 = vmatprep.subr.bf16.mxu0 0
  %911 = vmatpush1.bf16.msra.mxu0 0
  %912 = vmatprep.subr.bf16.mxu0 0
  %913 = vmatpush1.bf16.msra.mxu0 0
  %914 = vmatprep.subr.bf16.mxu0 0
  %915 = vmatpush1.bf16.msra.mxu0 0
  %916 = vmatprep.subr.bf16.mxu0 0
  %917 = vmatpush1.bf16.msra.mxu0 0
  %918 = vmatprep.subr.bf16.mxu0 0
  %919 = vmatpush1.bf16.msra.mxu0 0
  %920 = vmatprep.subr.bf16.mxu0 0
  %921 = vmatpush1.bf16.msra.mxu0 0
  %922 = vmatprep.subr.bf16.mxu0 0
  %923 = vmatpush1.bf16.msra.mxu0 0
  %924 = vmatprep.subr.bf16.mxu0 0
  %925 = vmatpush1.bf16.msra.mxu0 0
  %926 = vmatprep.mubr.bf16.mxu0 0
  %927 = vmatmul.mubr.bf16.gmra.mrb[0].mxu0 %v892
  %v928 = vpop.f32.mrb[0].mxu0
  %v929 = vadd.f32 0.0, %v928
  %v930 = vpop.f32.mrb[0].mxu0
  %v931 = vpop.f32.mrb[0].mxu0
  %v932 = vadd.f32 0.0, %v931
  %v933 = vpop.f32.mrb[0].mxu0
  %934 = vdwg.mxu0
  %v935 = vpack.c.bf16 %v932, %v929
  %v936 = vld [vmem:[%s9] sm:$0xf]
  %v937 = vld [vmem:[%s9 + $0x4] sm:$0xf]
  %v938 = vld [vmem:[%s9 + $0x8] sm:$0xf]
  %v939 = vld [vmem:[%s9 + $0xc] sm:$0xf]
  %v940 = vld [vmem:[%s9 + $0x10] sm:$0xf]
  %v941 = vld [vmem:[%s9 + $0x14] sm:$0xf]
  %v942 = vld [vmem:[%s9 + $0x18] sm:$0xf]
  %v943 = vld [vmem:[%s9 + $0x1c] sm:$0xf]
  %v944 = vld [vmem:[%s9 + $0x20] sm:$0xf]
  %v945 = vld [vmem:[%s9 + $0x24] sm:$0xf]
  %v946 = vld [vmem:[%s9 + $0x28] sm:$0xf]
  %v947 = vld [vmem:[%s9 + $0x2c] sm:$0xf]
  %v948 = vld [vmem:[%s9 + $0x30] sm:$0xf]
  %v949 = vld [vmem:[%s9 + $0x34] sm:$0xf]
  %v950 = vld [vmem:[%s9 + $0x38] sm:$0xf]
  %v951 = vld [vmem:[%s9 + $0x3c] sm:$0xf]
  %v968 = vunpack.c.l.b16 %v936
  %v969 = vunpack.c.l.b16 %v937
  %v970 = vunpack.c.l.b16 %v938
  %v971 = vunpack.c.l.b16 %v939
  %v972 = vunpack.c.l.b16 %v940
  %v973 = vunpack.c.l.b16 %v941
  %v974 = vunpack.c.l.b16 %v942
  %v975 = vunpack.c.l.b16 %v943
  %v976 = vunpack.c.l.b16 %v944
  %v977 = vunpack.c.l.b16 %v945
  %v978 = vunpack.c.l.b16 %v946
  %v979 = vunpack.c.l.b16 %v947
  %v980 = vunpack.c.l.b16 %v948
  %v981 = vunpack.c.l.b16 %v949
  %v982 = vunpack.c.l.b16 %v950
  %v983 = vunpack.c.l.b16 %v951
  %v984 = vpack.c.b16 %v969, %v968
  %v985 = vpack.c.b16 %v971, %v970
  %v986 = vpack.c.b16 %v973, %v972
  %v987 = vpack.c.b16 %v975, %v974
  %v988 = vpack.c.b16 %v977, %v976
  %v989 = vpack.c.b16 %v979, %v978
  %v990 = vpack.c.b16 %v981, %v980
  %v991 = vpack.c.b16 %v983, %v982
  %1000 = vmatprep.subr.bf16.mxu0 0
  %1001 = vmatpush1.bf16.msra.mxu0 %v984
  %1002 = vmatprep.subr.bf16.mxu0 0
  %1003 = vmatpush1.bf16.msra.mxu0 %v985
  %1004 = vmatprep.subr.bf16.mxu0 0
  %1005 = vmatpush1.bf16.msra.mxu0 %v986
  %1006 = vmatprep.subr.bf16.mxu0 0
  %1007 = vmatpush1.bf16.msra.mxu0 %v987
  %1008 = vmatprep.subr.bf16.mxu0 0
  %1009 = vmatpush1.bf16.msra.mxu0 %v988
  %1010 = vmatprep.subr.bf16.mxu0 0
  %1011 = vmatpush1.bf16.msra.mxu0 %v989
  %1012 = vmatprep.subr.bf16.mxu0 0
  %1013 = vmatpush1.bf16.msra.mxu0 %v990
  %1014 = vmatprep.subr.bf16.mxu0 0
  %1015 = vmatpush1.bf16.msra.mxu0 %v991
  %1016 = vmatprep.subr.bf16.mxu0 0
  %1017 = vmatpush1.bf16.msra.mxu0 0
  %1018 = vmatprep.subr.bf16.mxu0 0
  %1019 = vmatpush1.bf16.msra.mxu0 0
  %1020 = vmatprep.subr.bf16.mxu0 0
  %1021 = vmatpush1.bf16.msra.mxu0 0
  %1022 = vmatprep.subr.bf16.mxu0 0
  %1023 = vmatpush1.bf16.msra.mxu0 0
  %1024 = vmatprep.subr.bf16.mxu0 0
  %1025 = vmatpush1.bf16.msra.mxu0 0
  %1026 = vmatprep.subr.bf16.mxu0 0
  %1027 = vmatpush1.bf16.msra.mxu0 0
  %1028 = vmatprep.subr.bf16.mxu0 0
  %1029 = vmatpush1.bf16.msra.mxu0 0
  %1030 = vmatprep.subr.bf16.mxu0 0
  %1031 = vmatpush1.bf16.msra.mxu0 0
  %1032 = vmatprep.mubr.bf16.mxu0 0
  %1033 = vmatmul.mubr.bf16.gmra.mrb[0].mxu0 %v935
  %v1034 = vpop.f32.mrb[0].mxu0
  %v1035 = vadd.f32 0.0, %v1034
  %v1036 = vpop.f32.mrb[0].mxu0
  %v1037 = vpop.f32.mrb[0].mxu0
  %v1038 = vadd.f32 0.0, %v1037
  %v1039 = vpop.f32.mrb[0].mxu0
  %1040 = vdwg.mxu0
  %vm1041 = vcmp.ge.f32.partialorder %v1035, 0.5
  %vm1042 = vcmp.ge.f32.partialorder %v1038, 0.5
  %v1043 = vsel %vm1041, 1, 0
  %v1044 = vsel %vm1042, 1, 0
  %v1045 = vcvt.s32.f32 %v1043
  %v1046 = vcvt.s32.f32 %v1044
  %1047 = vst.msk [vmem:[%s10] sm:$0xff] %vm226, %v1045
  %1048 = vst.msk [vmem:[%s10 + $0x8] sm:$0xff] %vm226, %v1046
  // Predicated region
  $region42: #{spiking_conv_encoder.6} parent=0 // pred_check
    _
  $region43: #{spiking_conv_encoder.6} parent=0 // pred_check_branch
    %1050 = sbr.rel (0) target = $region45
  $region44: #{spiking_conv_encoder.6} parent=0 // pred_region
    _
  $region45: #{spiking_conv_encoder.6} parent=0 // pred_fallthru
    _
  // Predicated region
  $region46: #{spiking_conv_encoder.6} parent=0 // pred_check
    _
  $region47: #{spiking_conv_encoder.6} parent=0 // pred_check_branch
    %1052 = sbr.rel (0) target = $region49
  $region48: #{spiking_conv_encoder.6} parent=0 // pred_region
    _
  $region49: #{spiking_conv_encoder.6} parent=0 // pred_fallthru
    _

</llo_original>
